<compile_context>
chip_gen: v5e
topology: v5e:2x2
jax: 0.10.0
libtpu: 0.0.40
codegen_flags: <defaults>
</compile_context>

<pallas_src>
import functools

import jax
import jax.numpy as jnp
from jax.experimental import pallas as pl
from jax.experimental.pallas import tpu as pltpu

EPS = 1e-5                      # PyTorch BatchNorm2d default eps
LANE = 128                      # TPU lane width
_VMEM_LIMIT = 32 * 1024 * 1024  # safe on v5e / v6e / v7x


# ----------------------------- small helpers -----------------------------

def _round_up(x, m):
    return (x + m - 1) // m * m


def _win(off, size, stride):
    """Index object selecting positions off, off+stride, ..., off+stride*(size-1)."""
    if stride == 1:
        return slice(off, off + size)
    return pl.ds(off, size, stride=stride)


def _pick_batch_block(n, per_item_bytes, budget=_VMEM_LIMIT // 6):
    """Largest batch block in {8,4,2} dividing n, keeping >=2 grid steps & VMEM budget."""
    for cand in (8, 4, 2):
        if n % cand == 0 and n // cand >= 2 and cand * per_item_bytes <= budget:
            return cand
    return 1


# ----------------------------- in-kernel building blocks -----------------------------

def _bn_relu_ring(x_ref, s_ref, b_ref, t_scr):
    """t_scr <- relu(x*scale + shift), with the 1-pixel halo ring forced to zero.

    x_ref is a spatially padded NHWC block; the ring must contribute exactly 0 to
    the conv, so it is masked after the (fused) BN affine + ReLU.
    """
    _, hp, wp, c = x_ref.shape
    x = x_ref[...].astype(jnp.float32)
    scale = s_ref[...].reshape(1, 1, 1, c)
    shift = b_ref[...].reshape(1, 1, 1, c)
    t = jnp.maximum(x * scale + shift, 0.0)
    hi = jax.lax.broadcasted_iota(jnp.int32, (1, hp, wp, 1), 1)
    wi = jax.lax.broadcasted_iota(jnp.int32, (1, hp, wp, 1), 2)
    ring = ((hi >= 1) & (hi <= hp - 2) & (wi >= 1) & (wi <= wp - 2)).astype(jnp.float32)
    t_scr[...] = t * ring


def _accumulate_taps(t_scr, w_ref, acc_scr, hout, wout, stride):
    """acc_scr <- sum over the 9 taps of A_tap @ W_tap (bf16 MXU, f32 accumulation).

    Returns the centre-tap A matrix (reused for the 1x1 downsample shortcut).
    """
    nb = t_scr.shape[0]
    cin = t_scr.shape[-1]
    m = nb * hout * wout
    acc_scr[...] = jnp.zeros_like(acc_scr)
    a_center = None
    for dy in range(3):
        for dx in range(3):
            a = t_scr[:, _win(dy, hout, stride), _win(dx, wout, stride), :]
            a = a.reshape(m, cin).astype(jnp.bfloat16)
            if dy == 1 and dx == 1:
                a_center = a
            acc_scr[...] += jnp.dot(a, w_ref[dy, dx],
                                    preferred_element_type=jnp.float32)
    return a_center


# ----------------------------- Pallas kernels -----------------------------

def _preact_conv3x3_kernel(*refs, stride, has_down):
    """out = conv3x3(relu(bn(x))), plus optional 1x1 downsample shortcut.

    Also emits per-block partial sums / sums-of-squares of the conv output so the
    bn2 statistics never need to re-read the intermediate from HBM.

    refs (has_down=True):
      x_ref   (NB, Hin+2, Win+2, Cin) f32   spatially padded input
      w_ref   (3, 3, Cin, Coutp)      bf16
      wd_ref  (Cin, Coutp)            bf16  1x1 downsample weights
      s_ref, b_ref (1, Cin)           f32   folded BN scale / shift
      u_ref   (NB, Ho+2, Wo+2, Coutp) f32   conv output, written with a zero ring
      sc_ref  (NB, Ho, Wo, Coutp)     f32   downsample shortcut
      bsum_ref, bsq_ref (1, 1, Coutp) f32   partial bn2 statistics
      t_scr, acc_scr                        VMEM scratch
    """
    if has_down:
        (x_ref, w_ref, wd_ref, s_ref, b_ref,
         u_ref, sc_ref, bsum_ref, bsq_ref, t_scr, acc_scr) = refs
    else:
        (x_ref, w_ref, s_ref, b_ref,
         u_ref, bsum_ref, bsq_ref, t_scr, acc_scr) = refs
        wd_ref = sc_ref = None

    nb = x_ref.shape[0]
    hout, wout = u_ref.shape[1] - 2, u_ref.shape[2] - 2
    cout = u_ref.shape[-1]

    _bn_relu_ring(x_ref, s_ref, b_ref, t_scr)
    a_center = _accumulate_taps(t_scr, w_ref, acc_scr, hout, wout, stride)

    acc = acc_scr[...]                                   # (nb*Ho*Wo, Coutp) f32
    # Fused bn2 partial statistics (tiny lane vectors; final reduce stays in XLA).
    bsum_ref[...] = jnp.sum(acc, axis=0, keepdims=True).reshape(1, 1, cout)
    bsq_ref[...] = jnp.sum(acc * acc, axis=0, keepdims=True).reshape(1, 1, cout)

    res = acc.reshape(nb, hout, wout, cout)
    # Write the padded layout directly (zero halo ring) so conv2 needs no pad pass.
    u_ref[...] = jnp.zeros_like(u_ref)
    u_ref[:, 1:hout + 1, 1:wout + 1, :] = res.astype(u_ref.dtype)

    if has_down:
        sc = jnp.dot(a_center, wd_ref[...], preferred_element_type=jnp.float32)
        sc_ref[...] = sc.reshape(nb, hout, wout, cout).astype(sc_ref.dtype)


def _preact_conv3x3_res_kernel(u_ref, w_ref, r_ref, s_ref, b_ref, o_ref,
                               t_scr, acc_scr, *, scale_constant):
    """o = conv3x3(relu(bn(u))) * scale_constant + r   (stride 1, halo ring in u)."""
    nb, hp, wp, cp = u_ref.shape
    hout, wout = hp - 2, wp - 2

    _bn_relu_ring(u_ref, s_ref, b_ref, t_scr)
    _accumulate_taps(t_scr, w_ref, acc_scr, hout, wout, 1)

    out = acc_scr[...].reshape(nb, hout, wout, cp) * scale_constant
    o_ref[...] = (out + r_ref[...].astype(jnp.float32)).astype(o_ref.dtype)


# ----------------------------- pallas_call wrappers -----------------------------

def _conv1_call(x_pad, w1, wd, scale1, shift1, *, stride, hout, wout, nb):
    n, hp, wp, cin = x_pad.shape
    cout = w1.shape[-1]
    has_down = wd is not None
    gn = n // nb

    kernel = functools.partial(_preact_conv3x3_kernel, stride=stride, has_down=has_down)

    out_shape = [jax.ShapeDtypeStruct((n, hout + 2, wout + 2, cout), jnp.float32)]
    out_specs = [pl.BlockSpec((nb, hout + 2, wout + 2, cout), lambda i: (i, 0, 0, 0))]
    if has_down:
        out_shape.append(jax.ShapeDtypeStruct((n, hout, wout, cout), jnp.float32))
        out_specs.append(pl.BlockSpec((nb, hout, wout, cout), lambda i: (i, 0, 0, 0)))
    # bn2 partial statistics: one (1, Coutp) row per grid step.
    out_shape += [jax.ShapeDtypeStruct((gn, 1, cout), jnp.float32)] * 2
    out_specs += [pl.BlockSpec((1, 1, cout), lambda i: (i, 0, 0))] * 2

    in_arrays = [x_pad, w1] + ([wd] if has_down else []) + [scale1, shift1]
    in_specs = [pl.BlockSpec((nb, hp, wp, cin), lambda i: (i, 0, 0, 0)),
                pl.BlockSpec(w1.shape, lambda i: (0, 0, 0, 0))]
    if has_down:
        in_specs.append(pl.BlockSpec(wd.shape, lambda i: (0, 0)))
    in_specs += [pl.BlockSpec(scale1.shape, lambda i: (0, 0)),
                 pl.BlockSpec(shift1.shape, lambda i: (0, 0))]

    outs = pl.pallas_call(
        kernel,
        out_shape=tuple(out_shape),
        grid=(gn,),
        in_specs=in_specs,
        out_specs=tuple(out_specs),
        scratch_shapes=[pltpu.VMEM((nb, hp, wp, cin), jnp.float32),
                        pltpu.VMEM((nb * hout * wout, cout), jnp.float32)],
        compiler_params=pltpu.CompilerParams(
            dimension_semantics=("parallel",),
            vmem_limit_bytes=_VMEM_LIMIT),
    )(*in_arrays)

    if has_down:
        u_pad, shortcut, bsum, bsq = outs
    else:
        u_pad, bsum, bsq = outs
        shortcut = None
    return u_pad, shortcut, bsum, bsq


def _conv2_call(u_pad, w2, residual, scale2, shift2, *, scale_constant, nb):
    n, hp, wp, cp = u_pad.shape
    hout, wout = hp - 2, wp - 2
    gn = n // nb

    kernel = functools.partial(_preact_conv3x3_res_kernel, scale_constant=scale_constant)

    return pl.pallas_call(
        kernel,
        out_shape=jax.ShapeDtypeStruct((n, hout, wout, cp), jnp.float32),
        grid=(gn,),
        in_specs=[pl.BlockSpec((nb, hp, wp, cp), lambda i: (i, 0, 0, 0)),
                  pl.BlockSpec(w2.shape, lambda i: (0, 0, 0, 0)),
                  pl.BlockSpec((nb, hout, wout, cp), lambda i: (i, 0, 0, 0)),
                  pl.BlockSpec(scale2.shape, lambda i: (0, 0)),
                  pl.BlockSpec(shift2.shape, lambda i: (0, 0))],
        out_specs=pl.BlockSpec((nb, hout, wout, cp), lambda i: (i, 0, 0, 0)),
        scratch_shapes=[pltpu.VMEM((nb, hp, wp, cp), jnp.float32),
                        pltpu.VMEM((nb * hout * wout, cp), jnp.float32)],
        compiler_params=pltpu.CompilerParams(
            dimension_semantics=("parallel",),
            vmem_limit_bytes=_VMEM_LIMIT),
    )(u_pad, w2, residual, scale2, shift2)


# ----------------------------- parameter / weight prep -----------------------------

def _prep_conv_w(w, cin_pad, cout_pad):
    """torch (Cout, Cin, kH, kW) -> (kH, kW, cin_pad, cout_pad), zero padded, bf16."""
    cout, cin = w.shape[0], w.shape[1]
    w = jnp.transpose(w, (2, 3, 1, 0))
    w = jnp.pad(w, ((0, 0), (0, 0), (0, cin_pad - cin), (0, cout_pad - cout)))
    return w.astype(jnp.bfloat16)


def _bn_fold(x, gamma, beta):
    """bn1 fold: per-channel mean/var over the input (tiny XLA reduction)."""
    mean = jnp.mean(x, axis=(0, 1, 2))
    var = jnp.var(x, axis=(0, 1, 2))          # robust two-pass variance (XLA)
    inv = jax.lax.rsqrt(var + EPS)
    scale = gamma.reshape(-1) * inv
    shift = beta.reshape(-1) - mean * scale
    return scale.reshape(1, -1), shift.reshape(1, -1)


def _bn_fold_from_stats(ssum, ssq, count, gamma, beta, cp):
    """bn2 fold from fused partial sums produced by the conv1 kernel."""
    mean = ssum / count
    var = jnp.maximum(ssq / count - mean * mean, 0.0)
    g = jnp.pad(gamma.reshape(-1), (0, cp - gamma.shape[0]))
    b = jnp.pad(beta.reshape(-1), (0, cp - beta.shape[0]))
    inv = jax.lax.rsqrt(var + EPS)
    scale = g * inv
    shift = b - mean * scale
    return scale.reshape(1, -1), shift.reshape(1, -1)


# ----------------------------- PreActBlock forward -----------------------------

def preact_block_forward(x_nchw, params, stride, scale_constant=1.0, active_flag=True):
    if not active_flag:
        return x_nchw

    x = jnp.transpose(x_nchw, (0, 2, 3, 1)).astype(jnp.float32)   # NCHW -> NHWC
    n, h, w, cin = x.shape
    planes = params["w1"].shape[0]
    cp = _round_up(planes, LANE)                                  # lane-dense Cout
    ho = (h - 1) // stride + 1
    wo = (w - 1) // stride + 1

    # VMEM-aware batch-block size (keeps >=2 grid steps for pipelining).  Covers
    # double-buffered blocks of both kernels plus their scratch.
    per_item = 4 * (3 * (h + 2) * (w + 2) * max(cin, LANE)
                    + 5 * (ho + 2) * (wo + 2) * cp
                    + 7 * ho * wo * cp)
    nb = _pick_batch_block(n, per_item)
    assert n % nb == 0

    # bn1 statistics (tiny per-channel XLA reduction); affine folded to scale/shift.
    scale1, shift1 = _bn_fold(x, params["g1"], params["b1"])

    # Spatial halo for the 3x3 conv; the BN of the ring is masked inside the kernel.
    x_pad = jnp.pad(x, ((0, 0), (1, 1), (1, 1), (0, 0)))

    w1 = _prep_conv_w(params["w1"], cin, cp)
    has_down = "wd" in params
    wd = _prep_conv_w(params["wd"], cin, cp).reshape(cin, cp) if has_down else None

    # conv1 (+ fused bn1/relu + optional 1x1 downsample shortcut + bn2 partial stats).
    u_pad, shortcut, bsum, bsq = _conv1_call(
        x_pad, w1, wd, scale1, shift1, stride=stride, hout=ho, wout=wo, nb=nb)
    if not has_down:
        # Identity shortcut (stride==1, cin==planes): pad channels to the lane width.
        shortcut = jnp.pad(x, ((0, 0), (0, 0), (0, 0), (0, cp - cin)))

    # bn2 fold from the fused partial sums (no HBM re-read of the intermediate).
    count = float(n * ho * wo)
    scale2, shift2 = _bn_fold_from_stats(bsum.sum(axis=(0, 1)), bsq.sum(axis=(0, 1)),
                                         count, params["g2"], params["b2"], cp)

    w2 = _prep_conv_w(params["w2"], cp, cp)

    # conv2 (+ fused bn2/relu + * scale_constant + shortcut), tiled over batch.
    out = _conv2_call(u_pad, w2, shortcut, scale2, shift2,
                      scale_constant=scale_constant, nb=nb)

    out = out[:, :, :, :planes]
    return jnp.transpose(out, (0, 3, 1, 2))                       # NHWC -> NCHW
    # TODO(synk): keep the whole network in NHWC between blocks to drop the two
    # wrapper transposes entirely.


# ----------------------------- deterministic parameter init -----------------------------

def init_params(key, in_planes, planes, stride):
    ks = jax.random.split(key, 7)
    params = {
        "g1": 1.0 + 0.1 * jax.random.normal(ks[0], (in_planes,), jnp.float32),
        "b1": 0.1 * jax.random.normal(ks[1], (in_planes,), jnp.float32),
        "w1": 0.1 * jax.random.normal(ks[2], (planes, in_planes, 3, 3), jnp.float32),
        "g2": 1.0 + 0.1 * jax.random.normal(ks[3], (planes,), jnp.float32),
        "b2": 0.1 * jax.random.normal(ks[4], (planes,), jnp.float32),
        "w2": 0.1 * jax.random.normal(ks[5], (planes, planes, 3, 3), jnp.float32),
    }
    if stride != 1 or in_planes != planes:
        params["wd"] = 0.1 * jax.random.normal(ks[6], (planes, in_planes, 1, 1),
                                               jnp.float32)
    return params


# ----------------------------- pure-JAX reference -----------------------------

def _ref_forward(x, params, stride, scale_constant=1.0):
    def bn(v, g, b):
        mean = v.mean(axis=(0, 2, 3), keepdims=True)
        var = v.var(axis=(0, 2, 3), keepdims=True)
        return ((v - mean) / jnp.sqrt(var + EPS) * g.reshape(1, -1, 1, 1)
                + b.reshape(1, -1, 1, 1))

    def conv(v, wgt, s, p):
        return jax.lax.conv_general_dilated(
            v, wgt, (s, s), [(p, p), (p, p)],
            dimension_numbers=("NCHW", "OIHW", "NCHW"))

    out = jax.nn.relu(bn(x, params["g1"], params["b1"]))
    shortcut = conv(out, params["wd"], stride, 0) if "wd" in params else x
    out = conv(out, params["w1"], stride, 1)
    out = conv(jax.nn.relu(bn(out, params["g2"], params["b2"])), params["w2"], 1, 1)
    return out * scale_constant + shortcut


if __name__ == "__main__":
    key = jax.random.PRNGKey(0)
    k_x, k_p = jax.random.split(key)

    in_planes, planes, stride = 4, 8, 2
    x = jax.random.normal(k_x, (2, in_planes, 16, 16), jnp.float32)  # NCHW like PyTorch
    params = init_params(k_p, in_planes, planes, stride)

    fwd = jax.jit(functools.partial(preact_block_forward, stride=stride))
    out = jax.block_until_ready(fwd(x, params))

    ref = _ref_forward(x, params, stride)
    assert out.shape == ref.shape == (2, planes, 8, 8), (out.shape, ref.shape)
    if not bool(jnp.allclose(out, ref, rtol=2e-2, atol=2e-2)):
        err = float(jnp.max(jnp.abs(out - ref)))
        raise AssertionError(f"Pallas PreActBlock does not match JAX reference: {err}")

    print("KERNEL_OK")
</pallas_src>

<mosaic_0001>
module attributes {stable_mosaic.version = 11 : i64} {
  func.func @_preact_conv3x3_kernel(%arg0: i32, %arg1: memref<1x18x18x4xf32, #tpu.memory_space<vmem>>, %arg2: memref<3x3x4x128xbf16, #tpu.memory_space<vmem>>, %arg3: memref<4x128xbf16, #tpu.memory_space<vmem>>, %arg4: memref<1x4xf32, #tpu.memory_space<vmem>>, %arg5: memref<1x4xf32, #tpu.memory_space<vmem>>, %arg6: memref<1x10x10x128xf32, #tpu.memory_space<vmem>>, %arg7: memref<1x8x8x128xf32, #tpu.memory_space<vmem>>, %arg8: memref<1x1x128xf32, #tpu.memory_space<vmem>>, %arg9: memref<1x1x128xf32, #tpu.memory_space<vmem>>, %arg10: memref<1x18x18x4xf32, #tpu.memory_space<vmem>>, %arg11: memref<64x128xf32, #tpu.memory_space<vmem>>) attributes {dimension_semantics = [#tpu.dimension_semantics<parallel>], iteration_bounds = array<i64: 2>, scalar_prefetch = 0 : i64, scratch_operands = 2 : i64, tpu.core_type = #tpu.core_type<tc>, window_params = [{transform_indices = @transform_0, window_bounds = array<i64: 1, 18, 18, 4>}, {pipeline_mode = #tpu.pipeline_mode<synchronous>, transform_indices = @transform_1, window_bounds = array<i64: 3, 3, 4, 128>}, {pipeline_mode = #tpu.pipeline_mode<synchronous>, transform_indices = @transform_2, window_bounds = array<i64: 4, 128>}, {pipeline_mode = #tpu.pipeline_mode<synchronous>, transform_indices = @transform_3, window_bounds = array<i64: 1, 4>}, {pipeline_mode = #tpu.pipeline_mode<synchronous>, transform_indices = @transform_4, window_bounds = array<i64: 1, 4>}, {transform_indices = @transform_5, window_bounds = array<i64: 1, 10, 10, 128>}, {transform_indices = @transform_6, window_bounds = array<i64: 1, 8, 8, 128>}, {transform_indices = @transform_7, window_bounds = array<i64: 1, 1, 128>}, {transform_indices = @transform_8, window_bounds = array<i64: 1, 1, 128>}]} {
    %c0 = arith.constant 0 : index
    %c0_0 = arith.constant 0 : index
    %c0_1 = arith.constant 0 : index
    %c0_2 = arith.constant 0 : index
    %0 = vector.load %arg1[%c0, %c0_0, %c0_1, %c0_2] : memref<1x18x18x4xf32, #tpu.memory_space<vmem>>, vector<1x18x18x4xf32>
    %c0_3 = arith.constant 0 : index
    %c0_4 = arith.constant 0 : index
    %1 = vector.load %arg4[%c0_3, %c0_4] : memref<1x4xf32, #tpu.memory_space<vmem>>, vector<1x4xf32>
    %2 = vector.shape_cast %1 : vector<1x4xf32> to vector<1x1x1x4xf32>
    %c0_5 = arith.constant 0 : index
    %c0_6 = arith.constant 0 : index
    %3 = vector.load %arg5[%c0_5, %c0_6] : memref<1x4xf32, #tpu.memory_space<vmem>>, vector<1x4xf32>
    %4 = vector.shape_cast %3 : vector<1x4xf32> to vector<1x1x1x4xf32>
    %5 = vector.broadcast %2 : vector<1x1x1x4xf32> to vector<1x18x18x4xf32>
    %6 = arith.mulf %0, %5 : vector<1x18x18x4xf32>
    %7 = vector.broadcast %4 : vector<1x1x1x4xf32> to vector<1x18x18x4xf32>
    %8 = arith.addf %6, %7 : vector<1x18x18x4xf32>
    %cst = arith.constant 0.000000e+00 : f32
    %9 = vector.broadcast %cst : f32 to vector<1x18x18x4xf32>
    %10 = arith.maximumf %8, %9 : vector<1x18x18x4xf32>
    %11 = tpu.iota {dimensions = array<i32: 1>} : vector<1x18x18x1xi32>
    %12 = tpu.iota {dimensions = array<i32: 2>} : vector<1x18x18x1xi32>
    %c1_i32 = arith.constant 1 : i32
    %13 = vector.broadcast %c1_i32 : i32 to vector<1x18x18x1xi32>
    %14 = arith.cmpi sge, %11, %13 : vector<1x18x18x1xi32>
    %c16_i32 = arith.constant 16 : i32
    %15 = vector.broadcast %c16_i32 : i32 to vector<1x18x18x1xi32>
    %16 = arith.cmpi sle, %11, %15 : vector<1x18x18x1xi32>
    %17 = arith.andi %14, %16 : vector<1x18x18x1xi1>
    %c1_i32_7 = arith.constant 1 : i32
    %18 = vector.broadcast %c1_i32_7 : i32 to vector<1x18x18x1xi32>
    %19 = arith.cmpi sge, %12, %18 : vector<1x18x18x1xi32>
    %20 = arith.andi %17, %19 : vector<1x18x18x1xi1>
    %c16_i32_8 = arith.constant 16 : i32
    %21 = vector.broadcast %c16_i32_8 : i32 to vector<1x18x18x1xi32>
    %22 = arith.cmpi sle, %12, %21 : vector<1x18x18x1xi32>
    %23 = arith.andi %20, %22 : vector<1x18x18x1xi1>
    %24 = arith.extui %23 : vector<1x18x18x1xi1> to vector<1x18x18x1xi32>
    %25 = arith.sitofp %24 : vector<1x18x18x1xi32> to vector<1x18x18x1xf32>
    %26 = vector.broadcast %25 : vector<1x18x18x1xf32> to vector<1x18x18x4xf32>
    %27 = arith.mulf %10, %26 : vector<1x18x18x4xf32>
    %c0_9 = arith.constant 0 : index
    %c0_10 = arith.constant 0 : index
    %c0_11 = arith.constant 0 : index
    %c0_12 = arith.constant 0 : index
    %28 = vector.load %arg10[%c0_9, %c0_10, %c0_11, %c0_12] : memref<1x18x18x4xf32, #tpu.memory_space<vmem>>, vector<1x18x18x4xf32>
    tpu.vector_store %arg10[%c0_9, %c0_10, %c0_11, %c0_12], %27 {strides = array<i32>} : memref<1x18x18x4xf32, #tpu.memory_space<vmem>>, vector<1x18x18x4xf32>,
    %cst_13 = arith.constant 0.000000e+00 : f32
    %29 = vector.broadcast %cst_13 : f32 to vector<64x128xf32>
    %c0_14 = arith.constant 0 : index
    %c0_15 = arith.constant 0 : index
    %30 = vector.load %arg11[%c0_14, %c0_15] : memref<64x128xf32, #tpu.memory_space<vmem>>, vector<64x128xf32>
    tpu.vector_store %arg11[%c0_14, %c0_15], %29 {strides = array<i32>} : memref<64x128xf32, #tpu.memory_space<vmem>>, vector<64x128xf32>,
    %c0_16 = arith.constant 0 : index
    %c0_17 = arith.constant 0 : index
    %c0_18 = arith.constant 0 : index
    %c0_19 = arith.constant 0 : index
    %31 = tpu.strided_load %arg10[%c0_16, %c0_17, %c0_18, %c0_19] {strides = array<i32: 1, 2, 2, 1>} : memref<1x18x18x4xf32, #tpu.memory_space<vmem>>, vector<1x8x8x4xf32>
    %32 = vector.shape_cast %31 : vector<1x8x8x4xf32> to vector<64x4xf32>
    %33 = arith.truncf %32 : vector<64x4xf32> to vector<64x4xbf16>
    %c0_20 = arith.constant 0 : index
    %c0_21 = arith.constant 0 : index
    %34 = vector.load %arg11[%c0_20, %c0_21] : memref<64x128xf32, #tpu.memory_space<vmem>>, vector<64x128xf32>
    %c0_22 = arith.constant 0 : index
    %c0_23 = arith.constant 0 : index
    %c0_24 = arith.constant 0 : index
    %c0_25 = arith.constant 0 : index
    %35 = vector.load %arg2[%c0_22, %c0_23, %c0_24, %c0_25] : memref<3x3x4x128xbf16, #tpu.memory_space<vmem>>, vector<1x1x4x128xbf16>
    %36 = vector.shape_cast %35 : vector<1x1x4x128xbf16> to vector<4x128xbf16>
    %cst_26 = arith.constant dense<0.000000e+00> : vector<64x128xf32>
    %37 = tpu.matmul %33, %36, %cst_26 {dimension_numbers = #tpu.dot_dimension_numbers<[1], [0], [0], [1], [0, 0, 1, 1], [], []>} : vector<64x4xbf16>, vector<4x128xbf16>, vector<64x128xf32> -> vector<64x128xf32>
    %38 = arith.addf %34, %37 : vector<64x128xf32>
    %c0_27 = arith.constant 0 : index
    %c0_28 = arith.constant 0 : index
    %39 = vector.load %arg11[%c0_27, %c0_28] : memref<64x128xf32, #tpu.memory_space<vmem>>, vector<64x128xf32>
    tpu.vector_store %arg11[%c0_27, %c0_28], %38 {strides = array<i32>} : memref<64x128xf32, #tpu.memory_space<vmem>>, vector<64x128xf32>,
    %c0_29 = arith.constant 0 : index
    %c0_30 = arith.constant 0 : index
    %c1 = arith.constant 1 : index
    %c0_31 = arith.constant 0 : index
    %40 = tpu.strided_load %arg10[%c0_29, %c0_30, %c1, %c0_31] {strides = array<i32: 1, 2, 2, 1>} : memref<1x18x18x4xf32, #tpu.memory_space<vmem>>, vector<1x8x8x4xf32>
    %41 = vector.shape_cast %40 : vector<1x8x8x4xf32> to vector<64x4xf32>
    %42 = arith.truncf %41 : vector<64x4xf32> to vector<64x4xbf16>
    %c0_32 = arith.constant 0 : index
    %c0_33 = arith.constant 0 : index
    %43 = vector.load %arg11[%c0_32, %c0_33] : memref<64x128xf32, #tpu.memory_space<vmem>>, vector<64x128xf32>
    %c0_34 = arith.constant 0 : index
    %c1_35 = arith.constant 1 : index
    %c0_36 = arith.constant 0 : index
    %c0_37 = arith.constant 0 : index
    %44 = vector.load %arg2[%c0_34, %c1_35, %c0_36, %c0_37] : memref<3x3x4x128xbf16, #tpu.memory_space<vmem>>, vector<1x1x4x128xbf16>
    %45 = vector.shape_cast %44 : vector<1x1x4x128xbf16> to vector<4x128xbf16>
    %cst_38 = arith.constant dense<0.000000e+00> : vector<64x128xf32>
    %46 = tpu.matmul %42, %45, %cst_38 {dimension_numbers = #tpu.dot_dimension_numbers<[1], [0], [0], [1], [0, 0, 1, 1], [], []>} : vector<64x4xbf16>, vector<4x128xbf16>, vector<64x128xf32> -> vector<64x128xf32>
    %47 = arith.addf %43, %46 : vector<64x128xf32>
    %c0_39 = arith.constant 0 : index
    %c0_40 = arith.constant 0 : index
    %48 = vector.load %arg11[%c0_39, %c0_40] : memref<64x128xf32, #tpu.memory_space<vmem>>, vector<64x128xf32>
    tpu.vector_store %arg11[%c0_39, %c0_40], %47 {strides = array<i32>} : memref<64x128xf32, #tpu.memory_space<vmem>>, vector<64x128xf32>,
    %c0_41 = arith.constant 0 : index
    %c0_42 = arith.constant 0 : index
    %c2 = arith.constant 2 : index
    %c0_43 = arith.constant 0 : index
    %49 = tpu.strided_load %arg10[%c0_41, %c0_42, %c2, %c0_43] {strides = array<i32: 1, 2, 2, 1>} : memref<1x18x18x4xf32, #tpu.memory_space<vmem>>, vector<1x8x8x4xf32>
    %50 = vector.shape_cast %49 : vector<1x8x8x4xf32> to vector<64x4xf32>
    %51 = arith.truncf %50 : vector<64x4xf32> to vector<64x4xbf16>
    %c0_44 = arith.constant 0 : index
    %c0_45 = arith.constant 0 : index
    %52 = vector.load %arg11[%c0_44, %c0_45] : memref<64x128xf32, #tpu.memory_space<vmem>>, vector<64x128xf32>
    %c0_46 = arith.constant 0 : index
    %c2_47 = arith.constant 2 : index
    %c0_48 = arith.constant 0 : index
    %c0_49 = arith.constant 0 : index
    %53 = vector.load %arg2[%c0_46, %c2_47, %c0_48, %c0_49] : memref<3x3x4x128xbf16, #tpu.memory_space<vmem>>, vector<1x1x4x128xbf16>
    %54 = vector.shape_cast %53 : vector<1x1x4x128xbf16> to vector<4x128xbf16>
    %cst_50 = arith.constant dense<0.000000e+00> : vector<64x128xf32>
    %55 = tpu.matmul %51, %54, %cst_50 {dimension_numbers = #tpu.dot_dimension_numbers<[1], [0], [0], [1], [0, 0, 1, 1], [], []>} : vector<64x4xbf16>, vector<4x128xbf16>, vector<64x128xf32> -> vector<64x128xf32>
    %56 = arith.addf %52, %55 : vector<64x128xf32>
    %c0_51 = arith.constant 0 : index
    %c0_52 = arith.constant 0 : index
    %57 = vector.load %arg11[%c0_51, %c0_52] : memref<64x128xf32, #tpu.memory_space<vmem>>, vector<64x128xf32>
    tpu.vector_store %arg11[%c0_51, %c0_52], %56 {strides = array<i32>} : memref<64x128xf32, #tpu.memory_space<vmem>>, vector<64x128xf32>,
    %c0_53 = arith.constant 0 : index
    %c1_54 = arith.constant 1 : index
    %c0_55 = arith.constant 0 : index
    %c0_56 = arith.constant 0 : index
    %58 = tpu.strided_load %arg10[%c0_53, %c1_54, %c0_55, %c0_56] {strides = array<i32: 1, 2, 2, 1>} : memref<1x18x18x4xf32, #tpu.memory_space<vmem>>, vector<1x8x8x4xf32>
    %59 = vector.shape_cast %58 : vector<1x8x8x4xf32> to vector<64x4xf32>
    %60 = arith.truncf %59 : vector<64x4xf32> to vector<64x4xbf16>
    %c0_57 = arith.constant 0 : index
    %c0_58 = arith.constant 0 : index
    %61 = vector.load %arg11[%c0_57, %c0_58] : memref<64x128xf32, #tpu.memory_space<vmem>>, vector<64x128xf32>
    %c1_59 = arith.constant 1 : index
    %c0_60 = arith.constant 0 : index
    %c0_61 = arith.constant 0 : index
    %c0_62 = arith.constant 0 : index
    %62 = vector.load %arg2[%c1_59, %c0_60, %c0_61, %c0_62] : memref<3x3x4x128xbf16, #tpu.memory_space<vmem>>, vector<1x1x4x128xbf16>
    %63 = vector.shape_cast %62 : vector<1x1x4x128xbf16> to vector<4x128xbf16>
    %cst_63 = arith.constant dense<0.000000e+00> : vector<64x128xf32>
    %64 = tpu.matmul %60, %63, %cst_63 {dimension_numbers = #tpu.dot_dimension_numbers<[1], [0], [0], [1], [0, 0, 1, 1], [], []>} : vector<64x4xbf16>, vector<4x128xbf16>, vector<64x128xf32> -> vector<64x128xf32>
    %65 = arith.addf %61, %64 : vector<64x128xf32>
    %c0_64 = arith.constant 0 : index
    %c0_65 = arith.constant 0 : index
    %66 = vector.load %arg11[%c0_64, %c0_65] : memref<64x128xf32, #tpu.memory_space<vmem>>, vector<64x128xf32>
    tpu.vector_store %arg11[%c0_64, %c0_65], %65 {strides = array<i32>} : memref<64x128xf32, #tpu.memory_space<vmem>>, vector<64x128xf32>,
    %c0_66 = arith.constant 0 : index
    %c1_67 = arith.constant 1 : index
    %c1_68 = arith.constant 1 : index
    %c0_69 = arith.constant 0 : index
    %67 = tpu.strided_load %arg10[%c0_66, %c1_67, %c1_68, %c0_69] {strides = array<i32: 1, 2, 2, 1>} : memref<1x18x18x4xf32, #tpu.memory_space<vmem>>, vector<1x8x8x4xf32>
    %68 = vector.shape_cast %67 : vector<1x8x8x4xf32> to vector<64x4xf32>
    %69 = arith.truncf %68 : vector<64x4xf32> to vector<64x4xbf16>
    %c0_70 = arith.constant 0 : index
    %c0_71 = arith.constant 0 : index
    %70 = vector.load %arg11[%c0_70, %c0_71] : memref<64x128xf32, #tpu.memory_space<vmem>>, vector<64x128xf32>
    %c1_72 = arith.constant 1 : index
    %c1_73 = arith.constant 1 : index
    %c0_74 = arith.constant 0 : index
    %c0_75 = arith.constant 0 : index
    %71 = vector.load %arg2[%c1_72, %c1_73, %c0_74, %c0_75] : memref<3x3x4x128xbf16, #tpu.memory_space<vmem>>, vector<1x1x4x128xbf16>
    %72 = vector.shape_cast %71 : vector<1x1x4x128xbf16> to vector<4x128xbf16>
    %cst_76 = arith.constant dense<0.000000e+00> : vector<64x128xf32>
    %73 = tpu.matmul %69, %72, %cst_76 {dimension_numbers = #tpu.dot_dimension_numbers<[1], [0], [0], [1], [0, 0, 1, 1], [], []>} : vector<64x4xbf16>, vector<4x128xbf16>, vector<64x128xf32> -> vector<64x128xf32>
    %74 = arith.addf %70, %73 : vector<64x128xf32>
    %c0_77 = arith.constant 0 : index
    %c0_78 = arith.constant 0 : index
    %75 = vector.load %arg11[%c0_77, %c0_78] : memref<64x128xf32, #tpu.memory_space<vmem>>, vector<64x128xf32>
    tpu.vector_store %arg11[%c0_77, %c0_78], %74 {strides = array<i32>} : memref<64x128xf32, #tpu.memory_space<vmem>>, vector<64x128xf32>,
    %c0_79 = arith.constant 0 : index
    %c1_80 = arith.constant 1 : index
    %c2_81 = arith.constant 2 : index
    %c0_82 = arith.constant 0 : index
    %76 = tpu.strided_load %arg10[%c0_79, %c1_80, %c2_81, %c0_82] {strides = array<i32: 1, 2, 2, 1>} : memref<1x18x18x4xf32, #tpu.memory_space<vmem>>, vector<1x8x8x4xf32>
    %77 = vector.shape_cast %76 : vector<1x8x8x4xf32> to vector<64x4xf32>
    %78 = arith.truncf %77 : vector<64x4xf32> to vector<64x4xbf16>
    %c0_83 = arith.constant 0 : index
    %c0_84 = arith.constant 0 : index
    %79 = vector.load %arg11[%c0_83, %c0_84] : memref<64x128xf32, #tpu.memory_space<vmem>>, vector<64x128xf32>
    %c1_85 = arith.constant 1 : index
    %c2_86 = arith.constant 2 : index
    %c0_87 = arith.constant 0 : index
    %c0_88 = arith.constant 0 : index
    %80 = vector.load %arg2[%c1_85, %c2_86, %c0_87, %c0_88] : memref<3x3x4x128xbf16, #tpu.memory_space<vmem>>, vector<1x1x4x128xbf16>
    %81 = vector.shape_cast %80 : vector<1x1x4x128xbf16> to vector<4x128xbf16>
    %cst_89 = arith.constant dense<0.000000e+00> : vector<64x128xf32>
    %82 = tpu.matmul %78, %81, %cst_89 {dimension_numbers = #tpu.dot_dimension_numbers<[1], [0], [0], [1], [0, 0, 1, 1], [], []>} : vector<64x4xbf16>, vector<4x128xbf16>, vector<64x128xf32> -> vector<64x128xf32>
    %83 = arith.addf %79, %82 : vector<64x128xf32>
    %c0_90 = arith.constant 0 : index
    %c0_91 = arith.constant 0 : index
    %84 = vector.load %arg11[%c0_90, %c0_91] : memref<64x128xf32, #tpu.memory_space<vmem>>, vector<64x128xf32>
    tpu.vector_store %arg11[%c0_90, %c0_91], %83 {strides = array<i32>} : memref<64x128xf32, #tpu.memory_space<vmem>>, vector<64x128xf32>,
    %c0_92 = arith.constant 0 : index
    %c2_93 = arith.constant 2 : index
    %c0_94 = arith.constant 0 : index
    %c0_95 = arith.constant 0 : index
    %85 = tpu.strided_load %arg10[%c0_92, %c2_93, %c0_94, %c0_95] {strides = array<i32: 1, 2, 2, 1>} : memref<1x18x18x4xf32, #tpu.memory_space<vmem>>, vector<1x8x8x4xf32>
    %86 = vector.shape_cast %85 : vector<1x8x8x4xf32> to vector<64x4xf32>
    %87 = arith.truncf %86 : vector<64x4xf32> to vector<64x4xbf16>
    %c0_96 = arith.constant 0 : index
    %c0_97 = arith.constant 0 : index
    %88 = vector.load %arg11[%c0_96, %c0_97] : memref<64x128xf32, #tpu.memory_space<vmem>>, vector<64x128xf32>
    %c2_98 = arith.constant 2 : index
    %c0_99 = arith.constant 0 : index
    %c0_100 = arith.constant 0 : index
    %c0_101 = arith.constant 0 : index
    %89 = vector.load %arg2[%c2_98, %c0_99, %c0_100, %c0_101] : memref<3x3x4x128xbf16, #tpu.memory_space<vmem>>, vector<1x1x4x128xbf16>
    %90 = vector.shape_cast %89 : vector<1x1x4x128xbf16> to vector<4x128xbf16>
    %cst_102 = arith.constant dense<0.000000e+00> : vector<64x128xf32>
    %91 = tpu.matmul %87, %90, %cst_102 {dimension_numbers = #tpu.dot_dimension_numbers<[1], [0], [0], [1], [0, 0, 1, 1], [], []>} : vector<64x4xbf16>, vector<4x128xbf16>, vector<64x128xf32> -> vector<64x128xf32>
    %92 = arith.addf %88, %91 : vector<64x128xf32>
    %c0_103 = arith.constant 0 : index
    %c0_104 = arith.constant 0 : index
    %93 = vector.load %arg11[%c0_103, %c0_104] : memref<64x128xf32, #tpu.memory_space<vmem>>, vector<64x128xf32>
    tpu.vector_store %arg11[%c0_103, %c0_104], %92 {strides = array<i32>} : memref<64x128xf32, #tpu.memory_space<vmem>>, vector<64x128xf32>,
    %c0_105 = arith.constant 0 : index
    %c2_106 = arith.constant 2 : index
    %c1_107 = arith.constant 1 : index
    %c0_108 = arith.constant 0 : index
    %94 = tpu.strided_load %arg10[%c0_105, %c2_106, %c1_107, %c0_108] {strides = array<i32: 1, 2, 2, 1>} : memref<1x18x18x4xf32, #tpu.memory_space<vmem>>, vector<1x8x8x4xf32>
    %95 = vector.shape_cast %94 : vector<1x8x8x4xf32> to vector<64x4xf32>
    %96 = arith.truncf %95 : vector<64x4xf32> to vector<64x4xbf16>
    %c0_109 = arith.constant 0 : index
    %c0_110 = arith.constant 0 : index
    %97 = vector.load %arg11[%c0_109, %c0_110] : memref<64x128xf32, #tpu.memory_space<vmem>>, vector<64x128xf32>
    %c2_111 = arith.constant 2 : index
    %c1_112 = arith.constant 1 : index
    %c0_113 = arith.constant 0 : index
    %c0_114 = arith.constant 0 : index
    %98 = vector.load %arg2[%c2_111, %c1_112, %c0_113, %c0_114] : memref<3x3x4x128xbf16, #tpu.memory_space<vmem>>, vector<1x1x4x128xbf16>
    %99 = vector.shape_cast %98 : vector<1x1x4x128xbf16> to vector<4x128xbf16>
    %cst_115 = arith.constant dense<0.000000e+00> : vector<64x128xf32>
    %100 = tpu.matmul %96, %99, %cst_115 {dimension_numbers = #tpu.dot_dimension_numbers<[1], [0], [0], [1], [0, 0, 1, 1], [], []>} : vector<64x4xbf16>, vector<4x128xbf16>, vector<64x128xf32> -> vector<64x128xf32>
    %101 = arith.addf %97, %100 : vector<64x128xf32>
    %c0_116 = arith.constant 0 : index
    %c0_117 = arith.constant 0 : index
    %102 = vector.load %arg11[%c0_116, %c0_117] : memref<64x128xf32, #tpu.memory_space<vmem>>, vector<64x128xf32>
    tpu.vector_store %arg11[%c0_116, %c0_117], %101 {strides = array<i32>} : memref<64x128xf32, #tpu.memory_space<vmem>>, vector<64x128xf32>,
    %c0_118 = arith.constant 0 : index
    %c2_119 = arith.constant 2 : index
    %c2_120 = arith.constant 2 : index
    %c0_121 = arith.constant 0 : index
    %103 = tpu.strided_load %arg10[%c0_118, %c2_119, %c2_120, %c0_121] {strides = array<i32: 1, 2, 2, 1>} : memref<1x18x18x4xf32, #tpu.memory_space<vmem>>, vector<1x8x8x4xf32>
    %104 = vector.shape_cast %103 : vector<1x8x8x4xf32> to vector<64x4xf32>
    %105 = arith.truncf %104 : vector<64x4xf32> to vector<64x4xbf16>
    %c0_122 = arith.constant 0 : index
    %c0_123 = arith.constant 0 : index
    %106 = vector.load %arg11[%c0_122, %c0_123] : memref<64x128xf32, #tpu.memory_space<vmem>>, vector<64x128xf32>
    %c2_124 = arith.constant 2 : index
    %c2_125 = arith.constant 2 : index
    %c0_126 = arith.constant 0 : index
    %c0_127 = arith.constant 0 : index
    %107 = vector.load %arg2[%c2_124, %c2_125, %c0_126, %c0_127] : memref<3x3x4x128xbf16, #tpu.memory_space<vmem>>, vector<1x1x4x128xbf16>
    %108 = vector.shape_cast %107 : vector<1x1x4x128xbf16> to vector<4x128xbf16>
    %cst_128 = arith.constant dense<0.000000e+00> : vector<64x128xf32>
    %109 = tpu.matmul %105, %108, %cst_128 {dimension_numbers = #tpu.dot_dimension_numbers<[1], [0], [0], [1], [0, 0, 1, 1], [], []>} : vector<64x4xbf16>, vector<4x128xbf16>, vector<64x128xf32> -> vector<64x128xf32>
    %110 = arith.addf %106, %109 : vector<64x128xf32>
    %c0_129 = arith.constant 0 : index
    %c0_130 = arith.constant 0 : index
    %111 = vector.load %arg11[%c0_129, %c0_130] : memref<64x128xf32, #tpu.memory_space<vmem>>, vector<64x128xf32>
    tpu.vector_store %arg11[%c0_129, %c0_130], %110 {strides = array<i32>} : memref<64x128xf32, #tpu.memory_space<vmem>>, vector<64x128xf32>,
    %c0_131 = arith.constant 0 : index
    %c0_132 = arith.constant 0 : index
    %112 = vector.load %arg11[%c0_131, %c0_132] : memref<64x128xf32, #tpu.memory_space<vmem>>, vector<64x128xf32>
    %cst_133 = arith.constant dense<0.000000e+00> : vector<128xf32>
    %113 = vector.multi_reduction <add>, %112, %cst_133 [0] : vector<64x128xf32> to vector<128xf32>
    %114 = vector.shape_cast %113 : vector<128xf32> to vector<1x128xf32>
    %115 = vector.shape_cast %114 : vector<1x128xf32> to vector<1x1x128xf32>
    %c0_134 = arith.constant 0 : index
    %c0_135 = arith.constant 0 : index
    %c0_136 = arith.constant 0 : index
    %116 = vector.load %arg8[%c0_134, %c0_135, %c0_136] : memref<1x1x128xf32, #tpu.memory_space<vmem>>, vector<1x1x128xf32>
    tpu.vector_store %arg8[%c0_134, %c0_135, %c0_136], %115 {strides = array<i32>} : memref<1x1x128xf32, #tpu.memory_space<vmem>>, vector<1x1x128xf32>,
    %117 = arith.mulf %112, %112 : vector<64x128xf32>
    %cst_137 = arith.constant dense<0.000000e+00> : vector<128xf32>
    %118 = vector.multi_reduction <add>, %117, %cst_137 [0] : vector<64x128xf32> to vector<128xf32>
    %119 = vector.shape_cast %118 : vector<128xf32> to vector<1x128xf32>
    %120 = vector.shape_cast %119 : vector<1x128xf32> to vector<1x1x128xf32>
    %c0_138 = arith.constant 0 : index
    %c0_139 = arith.constant 0 : index
    %c0_140 = arith.constant 0 : index
    %121 = vector.load %arg9[%c0_138, %c0_139, %c0_140] : memref<1x1x128xf32, #tpu.memory_space<vmem>>, vector<1x1x128xf32>
    tpu.vector_store %arg9[%c0_138, %c0_139, %c0_140], %120 {strides = array<i32>} : memref<1x1x128xf32, #tpu.memory_space<vmem>>, vector<1x1x128xf32>,
    %122 = vector.shape_cast %112 : vector<64x128xf32> to vector<1x8x8x128xf32>
    %cst_141 = arith.constant 0.000000e+00 : f32
    %123 = vector.broadcast %cst_141 : f32 to vector<1x10x10x128xf32>
    %c0_142 = arith.constant 0 : index
    %c0_143 = arith.constant 0 : index
    %c0_144 = arith.constant 0 : index
    %c0_145 = arith.constant 0 : index
    %124 = vector.load %arg6[%c0_142, %c0_143, %c0_144, %c0_145] : memref<1x10x10x128xf32, #tpu.memory_space<vmem>>, vector<1x10x10x128xf32>
    tpu.vector_store %arg6[%c0_142, %c0_143, %c0_144, %c0_145], %123 {strides = array<i32>} : memref<1x10x10x128xf32, #tpu.memory_space<vmem>>, vector<1x10x10x128xf32>,
    %c0_146 = arith.constant 0 : index
    %c1_147 = arith.constant 1 : index
    %c1_148 = arith.constant 1 : index
    %c0_149 = arith.constant 0 : index
    %125 = vector.load %arg6[%c0_146, %c1_147, %c1_148, %c0_149] : memref<1x10x10x128xf32, #tpu.memory_space<vmem>>, vector<1x8x8x128xf32>
    tpu.vector_store %arg6[%c0_146, %c1_147, %c1_148, %c0_149], %122 {strides = array<i32>} : memref<1x10x10x128xf32, #tpu.memory_space<vmem>>, vector<1x8x8x128xf32>,
    %c0_150 = arith.constant 0 : index
    %c0_151 = arith.constant 0 : index
    %126 = vector.load %arg3[%c0_150, %c0_151] : memref<4x128xbf16, #tpu.memory_space<vmem>>, vector<4x128xbf16>
    %cst_152 = arith.constant dense<0.000000e+00> : vector<64x128xf32>
    %127 = tpu.matmul %69, %126, %cst_152 {dimension_numbers = #tpu.dot_dimension_numbers<[1], [0], [0], [1], [0, 0, 1, 1], [], []>} : vector<64x4xbf16>, vector<4x128xbf16>, vector<64x128xf32> -> vector<64x128xf32>
    %128 = vector.shape_cast %127 : vector<64x128xf32> to vector<1x8x8x128xf32>
    %c0_153 = arith.constant 0 : index
    %c0_154 = arith.constant 0 : index
    %c0_155 = arith.constant 0 : index
    %c0_156 = arith.constant 0 : index
    %129 = vector.load %arg7[%c0_153, %c0_154, %c0_155, %c0_156] : memref<1x8x8x128xf32, #tpu.memory_space<vmem>>, vector<1x8x8x128xf32>
    tpu.vector_store %arg7[%c0_153, %c0_154, %c0_155, %c0_156], %128 {strides = array<i32>} : memref<1x8x8x128xf32, #tpu.memory_space<vmem>>, vector<1x8x8x128xf32>,
    return
  }
  func.func @transform_0(%arg0: i32) -> (i32, i32, i32, i32) {
    %c0_i32 = arith.constant 0 : i32
    %c0_i32_0 = arith.constant 0 : i32
    %c0_i32_1 = arith.constant 0 : i32
    %c0_i32_2 = arith.constant 0 : i32
    return %arg0, %c0_i32, %c0_i32_0, %c0_i32_1 : i32, i32, i32, i32
  }
  func.func @transform_1(%arg0: i32) -> (i32, i32, i32, i32) {
    %c0_i32 = arith.constant 0 : i32
    %c0_i32_0 = arith.constant 0 : i32
    %c0_i32_1 = arith.constant 0 : i32
    %c0_i32_2 = arith.constant 0 : i32
    %c0_i32_3 = arith.constant 0 : i32
    return %c0_i32, %c0_i32_0, %c0_i32_1, %c0_i32_2 : i32, i32, i32, i32
  }
  func.func @transform_2(%arg0: i32) -> (i32, i32) {
    %c0_i32 = arith.constant 0 : i32
    %c0_i32_0 = arith.constant 0 : i32
    %c0_i32_1 = arith.constant 0 : i32
    return %c0_i32, %c0_i32_0 : i32, i32
  }
  func.func @transform_3(%arg0: i32) -> (i32, i32) {
    %c0_i32 = arith.constant 0 : i32
    %c0_i32_0 = arith.constant 0 : i32
    %c0_i32_1 = arith.constant 0 : i32
    return %c0_i32, %c0_i32_0 : i32, i32
  }
  func.func @transform_4(%arg0: i32) -> (i32, i32) {
    %c0_i32 = arith.constant 0 : i32
    %c0_i32_0 = arith.constant 0 : i32
    %c0_i32_1 = arith.constant 0 : i32
    return %c0_i32, %c0_i32_0 : i32, i32
  }
  func.func @transform_5(%arg0: i32) -> (i32, i32, i32, i32) {
    %c0_i32 = arith.constant 0 : i32
    %c0_i32_0 = arith.constant 0 : i32
    %c0_i32_1 = arith.constant 0 : i32
    %c0_i32_2 = arith.constant 0 : i32
    return %arg0, %c0_i32, %c0_i32_0, %c0_i32_1 : i32, i32, i32, i32
  }
  func.func @transform_6(%arg0: i32) -> (i32, i32, i32, i32) {
    %c0_i32 = arith.constant 0 : i32
    %c0_i32_0 = arith.constant 0 : i32
    %c0_i32_1 = arith.constant 0 : i32
    %c0_i32_2 = arith.constant 0 : i32
    return %arg0, %c0_i32, %c0_i32_0, %c0_i32_1 : i32, i32, i32, i32
  }
  func.func @transform_7(%arg0: i32) -> (i32, i32, i32) {
    %c0_i32 = arith.constant 0 : i32
    %c0_i32_0 = arith.constant 0 : i32
    %c0_i32_1 = arith.constant 0 : i32
    return %arg0, %c0_i32, %c0_i32_0 : i32, i32, i32
  }
  func.func @transform_8(%arg0: i32) -> (i32, i32, i32) {
    %c0_i32 = arith.constant 0 : i32
    %c0_i32_0 = arith.constant 0 : i32
    %c0_i32_1 = arith.constant 0 : i32
    return %arg0, %c0_i32, %c0_i32_0 : i32, i32, i32
  }
}

module attributes {stable_mosaic.version = 11 : i64} {
  func.func @_preact_conv3x3_res_kernel(%arg0: i32, %arg1: memref<1x10x10x128xf32, #tpu.memory_space<vmem>>, %arg2: memref<3x3x128x128xbf16, #tpu.memory_space<vmem>>, %arg3: memref<1x8x8x128xf32, #tpu.memory_space<vmem>>, %arg4: memref<1x128xf32, #tpu.memory_space<vmem>>, %arg5: memref<1x128xf32, #tpu.memory_space<vmem>>, %arg6: memref<1x8x8x128xf32, #tpu.memory_space<vmem>>, %arg7: memref<1x10x10x128xf32, #tpu.memory_space<vmem>>, %arg8: memref<64x128xf32, #tpu.memory_space<vmem>>) attributes {dimension_semantics = [#tpu.dimension_semantics<parallel>], iteration_bounds = array<i64: 2>, scalar_prefetch = 0 : i64, scratch_operands = 2 : i64, tpu.core_type = #tpu.core_type<tc>, window_params = [{transform_indices = @transform_0, window_bounds = array<i64: 1, 10, 10, 128>}, {pipeline_mode = #tpu.pipeline_mode<synchronous>, transform_indices = @transform_1, window_bounds = array<i64: 3, 3, 128, 128>}, {transform_indices = @transform_2, window_bounds = array<i64: 1, 8, 8, 128>}, {pipeline_mode = #tpu.pipeline_mode<synchronous>, transform_indices = @transform_3, window_bounds = array<i64: 1, 128>}, {pipeline_mode = #tpu.pipeline_mode<synchronous>, transform_indices = @transform_4, window_bounds = array<i64: 1, 128>}, {transform_indices = @transform_5, window_bounds = array<i64: 1, 8, 8, 128>}]} {
    %c0 = arith.constant 0 : index
    %c0_0 = arith.constant 0 : index
    %c0_1 = arith.constant 0 : index
    %c0_2 = arith.constant 0 : index
    %0 = vector.load %arg1[%c0, %c0_0, %c0_1, %c0_2] : memref<1x10x10x128xf32, #tpu.memory_space<vmem>>, vector<1x10x10x128xf32>
    %c0_3 = arith.constant 0 : index
    %c0_4 = arith.constant 0 : index
    %1 = vector.load %arg4[%c0_3, %c0_4] : memref<1x128xf32, #tpu.memory_space<vmem>>, vector<1x128xf32>
    %2 = vector.shape_cast %1 : vector<1x128xf32> to vector<1x1x1x128xf32>
    %c0_5 = arith.constant 0 : index
    %c0_6 = arith.constant 0 : index
    %3 = vector.load %arg5[%c0_5, %c0_6] : memref<1x128xf32, #tpu.memory_space<vmem>>, vector<1x128xf32>
    %4 = vector.shape_cast %3 : vector<1x128xf32> to vector<1x1x1x128xf32>
    %5 = vector.broadcast %2 : vector<1x1x1x128xf32> to vector<1x10x10x128xf32>
    %6 = arith.mulf %0, %5 : vector<1x10x10x128xf32>
    %7 = vector.broadcast %4 : vector<1x1x1x128xf32> to vector<1x10x10x128xf32>
    %8 = arith.addf %6, %7 : vector<1x10x10x128xf32>
    %cst = arith.constant 0.000000e+00 : f32
    %9 = vector.broadcast %cst : f32 to vector<1x10x10x128xf32>
    %10 = arith.maximumf %8, %9 : vector<1x10x10x128xf32>
    %11 = tpu.iota {dimensions = array<i32: 1>} : vector<1x10x10x1xi32>
    %12 = tpu.iota {dimensions = array<i32: 2>} : vector<1x10x10x1xi32>
    %c1_i32 = arith.constant 1 : i32
    %13 = vector.broadcast %c1_i32 : i32 to vector<1x10x10x1xi32>
    %14 = arith.cmpi sge, %11, %13 : vector<1x10x10x1xi32>
    %c8_i32 = arith.constant 8 : i32
    %15 = vector.broadcast %c8_i32 : i32 to vector<1x10x10x1xi32>
    %16 = arith.cmpi sle, %11, %15 : vector<1x10x10x1xi32>
    %17 = arith.andi %14, %16 : vector<1x10x10x1xi1>
    %c1_i32_7 = arith.constant 1 : i32
    %18 = vector.broadcast %c1_i32_7 : i32 to vector<1x10x10x1xi32>
    %19 = arith.cmpi sge, %12, %18 : vector<1x10x10x1xi32>
    %20 = arith.andi %17, %19 : vector<1x10x10x1xi1>
    %c8_i32_8 = arith.constant 8 : i32
    %21 = vector.broadcast %c8_i32_8 : i32 to vector<1x10x10x1xi32>
    %22 = arith.cmpi sle, %12, %21 : vector<1x10x10x1xi32>
    %23 = arith.andi %20, %22 : vector<1x10x10x1xi1>
    %24 = arith.extui %23 : vector<1x10x10x1xi1> to vector<1x10x10x1xi32>
    %25 = arith.sitofp %24 : vector<1x10x10x1xi32> to vector<1x10x10x1xf32>
    %26 = vector.broadcast %25 : vector<1x10x10x1xf32> to vector<1x10x10x128xf32>
    %27 = arith.mulf %10, %26 : vector<1x10x10x128xf32>
    %c0_9 = arith.constant 0 : index
    %c0_10 = arith.constant 0 : index
    %c0_11 = arith.constant 0 : index
    %c0_12 = arith.constant 0 : index
    %28 = vector.load %arg7[%c0_9, %c0_10, %c0_11, %c0_12] : memref<1x10x10x128xf32, #tpu.memory_space<vmem>>, vector<1x10x10x128xf32>
    tpu.vector_store %arg7[%c0_9, %c0_10, %c0_11, %c0_12], %27 {strides = array<i32>} : memref<1x10x10x128xf32, #tpu.memory_space<vmem>>, vector<1x10x10x128xf32>,
    %cst_13 = arith.constant 0.000000e+00 : f32
    %29 = vector.broadcast %cst_13 : f32 to vector<64x128xf32>
    %c0_14 = arith.constant 0 : index
    %c0_15 = arith.constant 0 : index
    %30 = vector.load %arg8[%c0_14, %c0_15] : memref<64x128xf32, #tpu.memory_space<vmem>>, vector<64x128xf32>
    tpu.vector_store %arg8[%c0_14, %c0_15], %29 {strides = array<i32>} : memref<64x128xf32, #tpu.memory_space<vmem>>, vector<64x128xf32>,
    %c0_16 = arith.constant 0 : index
    %c0_17 = arith.constant 0 : index
    %c0_18 = arith.constant 0 : index
    %c0_19 = arith.constant 0 : index
    %31 = vector.load %arg7[%c0_16, %c0_17, %c0_18, %c0_19] : memref<1x10x10x128xf32, #tpu.memory_space<vmem>>, vector<1x8x8x128xf32>
    %32 = vector.shape_cast %31 : vector<1x8x8x128xf32> to vector<64x128xf32>
    %33 = arith.truncf %32 : vector<64x128xf32> to vector<64x128xbf16>
    %c0_20 = arith.constant 0 : index
    %c0_21 = arith.constant 0 : index
    %34 = vector.load %arg8[%c0_20, %c0_21] : memref<64x128xf32, #tpu.memory_space<vmem>>, vector<64x128xf32>
    %c0_22 = arith.constant 0 : index
    %c0_23 = arith.constant 0 : index
    %c0_24 = arith.constant 0 : index
    %c0_25 = arith.constant 0 : index
    %35 = vector.load %arg2[%c0_22, %c0_23, %c0_24, %c0_25] : memref<3x3x128x128xbf16, #tpu.memory_space<vmem>>, vector<1x1x128x128xbf16>
    %36 = vector.shape_cast %35 : vector<1x1x128x128xbf16> to vector<128x128xbf16>
    %cst_26 = arith.constant dense<0.000000e+00> : vector<64x128xf32>
    %37 = tpu.matmul %33, %36, %cst_26 {dimension_numbers = #tpu.dot_dimension_numbers<[1], [0], [0], [1], [0, 0, 1, 1], [], []>} : vector<64x128xbf16>, vector<128x128xbf16>, vector<64x128xf32> -> vector<64x128xf32>
    %38 = arith.addf %34, %37 : vector<64x128xf32>
    %c0_27 = arith.constant 0 : index
    %c0_28 = arith.constant 0 : index
    %39 = vector.load %arg8[%c0_27, %c0_28] : memref<64x128xf32, #tpu.memory_space<vmem>>, vector<64x128xf32>
    tpu.vector_store %arg8[%c0_27, %c0_28], %38 {strides = array<i32>} : memref<64x128xf32, #tpu.memory_space<vmem>>, vector<64x128xf32>,
    %c0_29 = arith.constant 0 : index
    %c0_30 = arith.constant 0 : index
    %c1 = arith.constant 1 : index
    %c0_31 = arith.constant 0 : index
    %40 = vector.load %arg7[%c0_29, %c0_30, %c1, %c0_31] : memref<1x10x10x128xf32, #tpu.memory_space<vmem>>, vector<1x8x8x128xf32>
    %41 = vector.shape_cast %40 : vector<1x8x8x128xf32> to vector<64x128xf32>
    %42 = arith.truncf %41 : vector<64x128xf32> to vector<64x128xbf16>
    %c0_32 = arith.constant 0 : index
    %c0_33 = arith.constant 0 : index
    %43 = vector.load %arg8[%c0_32, %c0_33] : memref<64x128xf32, #tpu.memory_space<vmem>>, vector<64x128xf32>
    %c0_34 = arith.constant 0 : index
    %c1_35 = arith.constant 1 : index
    %c0_36 = arith.constant 0 : index
    %c0_37 = arith.constant 0 : index
    %44 = vector.load %arg2[%c0_34, %c1_35, %c0_36, %c0_37] : memref<3x3x128x128xbf16, #tpu.memory_space<vmem>>, vector<1x1x128x128xbf16>
    %45 = vector.shape_cast %44 : vector<1x1x128x128xbf16> to vector<128x128xbf16>
    %cst_38 = arith.constant dense<0.000000e+00> : vector<64x128xf32>
    %46 = tpu.matmul %42, %45, %cst_38 {dimension_numbers = #tpu.dot_dimension_numbers<[1], [0], [0], [1], [0, 0, 1, 1], [], []>} : vector<64x128xbf16>, vector<128x128xbf16>, vector<64x128xf32> -> vector<64x128xf32>
    %47 = arith.addf %43, %46 : vector<64x128xf32>
    %c0_39 = arith.constant 0 : index
    %c0_40 = arith.constant 0 : index
    %48 = vector.load %arg8[%c0_39, %c0_40] : memref<64x128xf32, #tpu.memory_space<vmem>>, vector<64x128xf32>
    tpu.vector_store %arg8[%c0_39, %c0_40], %47 {strides = array<i32>} : memref<64x128xf32, #tpu.memory_space<vmem>>, vector<64x128xf32>,
    %c0_41 = arith.constant 0 : index
    %c0_42 = arith.constant 0 : index
    %c2 = arith.constant 2 : index
    %c0_43 = arith.constant 0 : index
    %49 = vector.load %arg7[%c0_41, %c0_42, %c2, %c0_43] : memref<1x10x10x128xf32, #tpu.memory_space<vmem>>, vector<1x8x8x128xf32>
    %50 = vector.shape_cast %49 : vector<1x8x8x128xf32> to vector<64x128xf32>
    %51 = arith.truncf %50 : vector<64x128xf32> to vector<64x128xbf16>
    %c0_44 = arith.constant 0 : index
    %c0_45 = arith.constant 0 : index
    %52 = vector.load %arg8[%c0_44, %c0_45] : memref<64x128xf32, #tpu.memory_space<vmem>>, vector<64x128xf32>
    %c0_46 = arith.constant 0 : index
    %c2_47 = arith.constant 2 : index
    %c0_48 = arith.constant 0 : index
    %c0_49 = arith.constant 0 : index
    %53 = vector.load %arg2[%c0_46, %c2_47, %c0_48, %c0_49] : memref<3x3x128x128xbf16, #tpu.memory_space<vmem>>, vector<1x1x128x128xbf16>
    %54 = vector.shape_cast %53 : vector<1x1x128x128xbf16> to vector<128x128xbf16>
    %cst_50 = arith.constant dense<0.000000e+00> : vector<64x128xf32>
    %55 = tpu.matmul %51, %54, %cst_50 {dimension_numbers = #tpu.dot_dimension_numbers<[1], [0], [0], [1], [0, 0, 1, 1], [], []>} : vector<64x128xbf16>, vector<128x128xbf16>, vector<64x128xf32> -> vector<64x128xf32>
    %56 = arith.addf %52, %55 : vector<64x128xf32>
    %c0_51 = arith.constant 0 : index
    %c0_52 = arith.constant 0 : index
    %57 = vector.load %arg8[%c0_51, %c0_52] : memref<64x128xf32, #tpu.memory_space<vmem>>, vector<64x128xf32>
    tpu.vector_store %arg8[%c0_51, %c0_52], %56 {strides = array<i32>} : memref<64x128xf32, #tpu.memory_space<vmem>>, vector<64x128xf32>,
    %c0_53 = arith.constant 0 : index
    %c1_54 = arith.constant 1 : index
    %c0_55 = arith.constant 0 : index
    %c0_56 = arith.constant 0 : index
    %58 = vector.load %arg7[%c0_53, %c1_54, %c0_55, %c0_56] : memref<1x10x10x128xf32, #tpu.memory_space<vmem>>, vector<1x8x8x128xf32>
    %59 = vector.shape_cast %58 : vector<1x8x8x128xf32> to vector<64x128xf32>
    %60 = arith.truncf %59 : vector<64x128xf32> to vector<64x128xbf16>
    %c0_57 = arith.constant 0 : index
    %c0_58 = arith.constant 0 : index
    %61 = vector.load %arg8[%c0_57, %c0_58] : memref<64x128xf32, #tpu.memory_space<vmem>>, vector<64x128xf32>
    %c1_59 = arith.constant 1 : index
    %c0_60 = arith.constant 0 : index
    %c0_61 = arith.constant 0 : index
    %c0_62 = arith.constant 0 : index
    %62 = vector.load %arg2[%c1_59, %c0_60, %c0_61, %c0_62] : memref<3x3x128x128xbf16, #tpu.memory_space<vmem>>, vector<1x1x128x128xbf16>
    %63 = vector.shape_cast %62 : vector<1x1x128x128xbf16> to vector<128x128xbf16>
    %cst_63 = arith.constant dense<0.000000e+00> : vector<64x128xf32>
    %64 = tpu.matmul %60, %63, %cst_63 {dimension_numbers = #tpu.dot_dimension_numbers<[1], [0], [0], [1], [0, 0, 1, 1], [], []>} : vector<64x128xbf16>, vector<128x128xbf16>, vector<64x128xf32> -> vector<64x128xf32>
    %65 = arith.addf %61, %64 : vector<64x128xf32>
    %c0_64 = arith.constant 0 : index
    %c0_65 = arith.constant 0 : index
    %66 = vector.load %arg8[%c0_64, %c0_65] : memref<64x128xf32, #tpu.memory_space<vmem>>, vector<64x128xf32>
    tpu.vector_store %arg8[%c0_64, %c0_65], %65 {strides = array<i32>} : memref<64x128xf32, #tpu.memory_space<vmem>>, vector<64x128xf32>,
    %c0_66 = arith.constant 0 : index
    %c1_67 = arith.constant 1 : index
    %c1_68 = arith.constant 1 : index
    %c0_69 = arith.constant 0 : index
    %67 = vector.load %arg7[%c0_66, %c1_67, %c1_68, %c0_69] : memref<1x10x10x128xf32, #tpu.memory_space<vmem>>, vector<1x8x8x128xf32>
    %68 = vector.shape_cast %67 : vector<1x8x8x128xf32> to vector<64x128xf32>
    %69 = arith.truncf %68 : vector<64x128xf32> to vector<64x128xbf16>
    %c0_70 = arith.constant 0 : index
    %c0_71 = arith.constant 0 : index
    %70 = vector.load %arg8[%c0_70, %c0_71] : memref<64x128xf32, #tpu.memory_space<vmem>>, vector<64x128xf32>
    %c1_72 = arith.constant 1 : index
    %c1_73 = arith.constant 1 : index
    %c0_74 = arith.constant 0 : index
    %c0_75 = arith.constant 0 : index
    %71 = vector.load %arg2[%c1_72, %c1_73, %c0_74, %c0_75] : memref<3x3x128x128xbf16, #tpu.memory_space<vmem>>, vector<1x1x128x128xbf16>
    %72 = vector.shape_cast %71 : vector<1x1x128x128xbf16> to vector<128x128xbf16>
    %cst_76 = arith.constant dense<0.000000e+00> : vector<64x128xf32>
    %73 = tpu.matmul %69, %72, %cst_76 {dimension_numbers = #tpu.dot_dimension_numbers<[1], [0], [0], [1], [0, 0, 1, 1], [], []>} : vector<64x128xbf16>, vector<128x128xbf16>, vector<64x128xf32> -> vector<64x128xf32>
    %74 = arith.addf %70, %73 : vector<64x128xf32>
    %c0_77 = arith.constant 0 : index
    %c0_78 = arith.constant 0 : index
    %75 = vector.load %arg8[%c0_77, %c0_78] : memref<64x128xf32, #tpu.memory_space<vmem>>, vector<64x128xf32>
    tpu.vector_store %arg8[%c0_77, %c0_78], %74 {strides = array<i32>} : memref<64x128xf32, #tpu.memory_space<vmem>>, vector<64x128xf32>,
    %c0_79 = arith.constant 0 : index
    %c1_80 = arith.constant 1 : index
    %c2_81 = arith.constant 2 : index
    %c0_82 = arith.constant 0 : index
    %76 = vector.load %arg7[%c0_79, %c1_80, %c2_81, %c0_82] : memref<1x10x10x128xf32, #tpu.memory_space<vmem>>, vector<1x8x8x128xf32>
    %77 = vector.shape_cast %76 : vector<1x8x8x128xf32> to vector<64x128xf32>
    %78 = arith.truncf %77 : vector<64x128xf32> to vector<64x128xbf16>
    %c0_83 = arith.constant 0 : index
    %c0_84 = arith.constant 0 : index
    %79 = vector.load %arg8[%c0_83, %c0_84] : memref<64x128xf32, #tpu.memory_space<vmem>>, vector<64x128xf32>
    %c1_85 = arith.constant 1 : index
    %c2_86 = arith.constant 2 : index
    %c0_87 = arith.constant 0 : index
    %c0_88 = arith.constant 0 : index
    %80 = vector.load %arg2[%c1_85, %c2_86, %c0_87, %c0_88] : memref<3x3x128x128xbf16, #tpu.memory_space<vmem>>, vector<1x1x128x128xbf16>
    %81 = vector.shape_cast %80 : vector<1x1x128x128xbf16> to vector<128x128xbf16>
    %cst_89 = arith.constant dense<0.000000e+00> : vector<64x128xf32>
    %82 = tpu.matmul %78, %81, %cst_89 {dimension_numbers = #tpu.dot_dimension_numbers<[1], [0], [0], [1], [0, 0, 1, 1], [], []>} : vector<64x128xbf16>, vector<128x128xbf16>, vector<64x128xf32> -> vector<64x128xf32>
    %83 = arith.addf %79, %82 : vector<64x128xf32>
    %c0_90 = arith.constant 0 : index
    %c0_91 = arith.constant 0 : index
    %84 = vector.load %arg8[%c0_90, %c0_91] : memref<64x128xf32, #tpu.memory_space<vmem>>, vector<64x128xf32>
    tpu.vector_store %arg8[%c0_90, %c0_91], %83 {strides = array<i32>} : memref<64x128xf32, #tpu.memory_space<vmem>>, vector<64x128xf32>,
    %c0_92 = arith.constant 0 : index
    %c2_93 = arith.constant 2 : index
    %c0_94 = arith.constant 0 : index
    %c0_95 = arith.constant 0 : index
    %85 = vector.load %arg7[%c0_92, %c2_93, %c0_94, %c0_95] : memref<1x10x10x128xf32, #tpu.memory_space<vmem>>, vector<1x8x8x128xf32>
    %86 = vector.shape_cast %85 : vector<1x8x8x128xf32> to vector<64x128xf32>
    %87 = arith.truncf %86 : vector<64x128xf32> to vector<64x128xbf16>
    %c0_96 = arith.constant 0 : index
    %c0_97 = arith.constant 0 : index
    %88 = vector.load %arg8[%c0_96, %c0_97] : memref<64x128xf32, #tpu.memory_space<vmem>>, vector<64x128xf32>
    %c2_98 = arith.constant 2 : index
    %c0_99 = arith.constant 0 : index
    %c0_100 = arith.constant 0 : index
    %c0_101 = arith.constant 0 : index
    %89 = vector.load %arg2[%c2_98, %c0_99, %c0_100, %c0_101] : memref<3x3x128x128xbf16, #tpu.memory_space<vmem>>, vector<1x1x128x128xbf16>
    %90 = vector.shape_cast %89 : vector<1x1x128x128xbf16> to vector<128x128xbf16>
    %cst_102 = arith.constant dense<0.000000e+00> : vector<64x128xf32>
    %91 = tpu.matmul %87, %90, %cst_102 {dimension_numbers = #tpu.dot_dimension_numbers<[1], [0], [0], [1], [0, 0, 1, 1], [], []>} : vector<64x128xbf16>, vector<128x128xbf16>, vector<64x128xf32> -> vector<64x128xf32>
    %92 = arith.addf %88, %91 : vector<64x128xf32>
    %c0_103 = arith.constant 0 : index
    %c0_104 = arith.constant 0 : index
    %93 = vector.load %arg8[%c0_103, %c0_104] : memref<64x128xf32, #tpu.memory_space<vmem>>, vector<64x128xf32>
    tpu.vector_store %arg8[%c0_103, %c0_104], %92 {strides = array<i32>} : memref<64x128xf32, #tpu.memory_space<vmem>>, vector<64x128xf32>,
    %c0_105 = arith.constant 0 : index
    %c2_106 = arith.constant 2 : index
    %c1_107 = arith.constant 1 : index
    %c0_108 = arith.constant 0 : index
    %94 = vector.load %arg7[%c0_105, %c2_106, %c1_107, %c0_108] : memref<1x10x10x128xf32, #tpu.memory_space<vmem>>, vector<1x8x8x128xf32>
    %95 = vector.shape_cast %94 : vector<1x8x8x128xf32> to vector<64x128xf32>
    %96 = arith.truncf %95 : vector<64x128xf32> to vector<64x128xbf16>
    %c0_109 = arith.constant 0 : index
    %c0_110 = arith.constant 0 : index
    %97 = vector.load %arg8[%c0_109, %c0_110] : memref<64x128xf32, #tpu.memory_space<vmem>>, vector<64x128xf32>
    %c2_111 = arith.constant 2 : index
    %c1_112 = arith.constant 1 : index
    %c0_113 = arith.constant 0 : index
    %c0_114 = arith.constant 0 : index
    %98 = vector.load %arg2[%c2_111, %c1_112, %c0_113, %c0_114] : memref<3x3x128x128xbf16, #tpu.memory_space<vmem>>, vector<1x1x128x128xbf16>
    %99 = vector.shape_cast %98 : vector<1x1x128x128xbf16> to vector<128x128xbf16>
    %cst_115 = arith.constant dense<0.000000e+00> : vector<64x128xf32>
    %100 = tpu.matmul %96, %99, %cst_115 {dimension_numbers = #tpu.dot_dimension_numbers<[1], [0], [0], [1], [0, 0, 1, 1], [], []>} : vector<64x128xbf16>, vector<128x128xbf16>, vector<64x128xf32> -> vector<64x128xf32>
    %101 = arith.addf %97, %100 : vector<64x128xf32>
    %c0_116 = arith.constant 0 : index
    %c0_117 = arith.constant 0 : index
    %102 = vector.load %arg8[%c0_116, %c0_117] : memref<64x128xf32, #tpu.memory_space<vmem>>, vector<64x128xf32>
    tpu.vector_store %arg8[%c0_116, %c0_117], %101 {strides = array<i32>} : memref<64x128xf32, #tpu.memory_space<vmem>>, vector<64x128xf32>,
    %c0_118 = arith.constant 0 : index
    %c2_119 = arith.constant 2 : index
    %c2_120 = arith.constant 2 : index
    %c0_121 = arith.constant 0 : index
    %103 = vector.load %arg7[%c0_118, %c2_119, %c2_120, %c0_121] : memref<1x10x10x128xf32, #tpu.memory_space<vmem>>, vector<1x8x8x128xf32>
    %104 = vector.shape_cast %103 : vector<1x8x8x128xf32> to vector<64x128xf32>
    %105 = arith.truncf %104 : vector<64x128xf32> to vector<64x128xbf16>
    %c0_122 = arith.constant 0 : index
    %c0_123 = arith.constant 0 : index
    %106 = vector.load %arg8[%c0_122, %c0_123] : memref<64x128xf32, #tpu.memory_space<vmem>>, vector<64x128xf32>
    %c2_124 = arith.constant 2 : index
    %c2_125 = arith.constant 2 : index
    %c0_126 = arith.constant 0 : index
    %c0_127 = arith.constant 0 : index
    %107 = vector.load %arg2[%c2_124, %c2_125, %c0_126, %c0_127] : memref<3x3x128x128xbf16, #tpu.memory_space<vmem>>, vector<1x1x128x128xbf16>
    %108 = vector.shape_cast %107 : vector<1x1x128x128xbf16> to vector<128x128xbf16>
    %cst_128 = arith.constant dense<0.000000e+00> : vector<64x128xf32>
    %109 = tpu.matmul %105, %108, %cst_128 {dimension_numbers = #tpu.dot_dimension_numbers<[1], [0], [0], [1], [0, 0, 1, 1], [], []>} : vector<64x128xbf16>, vector<128x128xbf16>, vector<64x128xf32> -> vector<64x128xf32>
    %110 = arith.addf %106, %109 : vector<64x128xf32>
    %c0_129 = arith.constant 0 : index
    %c0_130 = arith.constant 0 : index
    %111 = vector.load %arg8[%c0_129, %c0_130] : memref<64x128xf32, #tpu.memory_space<vmem>>, vector<64x128xf32>
    tpu.vector_store %arg8[%c0_129, %c0_130], %110 {strides = array<i32>} : memref<64x128xf32, #tpu.memory_space<vmem>>, vector<64x128xf32>,
    %c0_131 = arith.constant 0 : index
    %c0_132 = arith.constant 0 : index
    %112 = vector.load %arg8[%c0_131, %c0_132] : memref<64x128xf32, #tpu.memory_space<vmem>>, vector<64x128xf32>
    %113 = vector.shape_cast %112 : vector<64x128xf32> to vector<1x8x8x128xf32>
    %cst_133 = arith.constant 1.000000e+00 : f32
    %114 = vector.broadcast %cst_133 : f32 to vector<1x8x8x128xf32>
    %115 = arith.mulf %113, %114 : vector<1x8x8x128xf32>
    %c0_134 = arith.constant 0 : index
    %c0_135 = arith.constant 0 : index
    %c0_136 = arith.constant 0 : index
    %c0_137 = arith.constant 0 : index
    %116 = vector.load %arg3[%c0_134, %c0_135, %c0_136, %c0_137] : memref<1x8x8x128xf32, #tpu.memory_space<vmem>>, vector<1x8x8x128xf32>
    %117 = arith.addf %115, %116 : vector<1x8x8x128xf32>
    %c0_138 = arith.constant 0 : index
    %c0_139 = arith.constant 0 : index
    %c0_140 = arith.constant 0 : index
    %c0_141 = arith.constant 0 : index
    %118 = vector.load %arg6[%c0_138, %c0_139, %c0_140, %c0_141] : memref<1x8x8x128xf32, #tpu.memory_space<vmem>>, vector<1x8x8x128xf32>
    tpu.vector_store %arg6[%c0_138, %c0_139, %c0_140, %c0_141], %117 {strides = array<i32>} : memref<1x8x8x128xf32, #tpu.memory_space<vmem>>, vector<1x8x8x128xf32>,
    return
  }
  func.func @transform_0(%arg0: i32) -> (i32, i32, i32, i32) {
    %c0_i32 = arith.constant 0 : i32
    %c0_i32_0 = arith.constant 0 : i32
    %c0_i32_1 = arith.constant 0 : i32
    %c0_i32_2 = arith.constant 0 : i32
    return %arg0, %c0_i32, %c0_i32_0, %c0_i32_1 : i32, i32, i32, i32
  }
  func.func @transform_1(%arg0: i32) -> (i32, i32, i32, i32) {
    %c0_i32 = arith.constant 0 : i32
    %c0_i32_0 = arith.constant 0 : i32
    %c0_i32_1 = arith.constant 0 : i32
    %c0_i32_2 = arith.constant 0 : i32
    %c0_i32_3 = arith.constant 0 : i32
    return %c0_i32, %c0_i32_0, %c0_i32_1, %c0_i32_2 : i32, i32, i32, i32
  }
  func.func @transform_2(%arg0: i32) -> (i32, i32, i32, i32) {
    %c0_i32 = arith.constant 0 : i32
    %c0_i32_0 = arith.constant 0 : i32
    %c0_i32_1 = arith.constant 0 : i32
    %c0_i32_2 = arith.constant 0 : i32
    return %arg0, %c0_i32, %c0_i32_0, %c0_i32_1 : i32, i32, i32, i32
  }
  func.func @transform_3(%arg0: i32) -> (i32, i32) {
    %c0_i32 = arith.constant 0 : i32
    %c0_i32_0 = arith.constant 0 : i32
    %c0_i32_1 = arith.constant 0 : i32
    return %c0_i32, %c0_i32_0 : i32, i32
  }
  func.func @transform_4(%arg0: i32) -> (i32, i32) {
    %c0_i32 = arith.constant 0 : i32
    %c0_i32_0 = arith.constant 0 : i32
    %c0_i32_1 = arith.constant 0 : i32
    return %c0_i32, %c0_i32_0 : i32, i32
  }
  func.func @transform_5(%arg0: i32) -> (i32, i32, i32, i32) {
    %c0_i32 = arith.constant 0 : i32
    %c0_i32_0 = arith.constant 0 : i32
    %c0_i32_1 = arith.constant 0 : i32
    %c0_i32_2 = arith.constant 0 : i32
    return %arg0, %c0_i32, %c0_i32_0, %c0_i32_1 : i32, i32, i32, i32
  }
}

</mosaic_0001>

<llo_original>
// kernel: preact_block_forward.2
$region0: #{preact_block_forward.2}
  #allocation0 [shape = 'u32[]', space=smem, size = 0x4, offset = 0x4, fixed_abs, tag = 'smem constant byte address 0x4 - core index']
  #allocation1 [shape = 'u32[72,128]{1,0:T(1,128)}', space=vmem, size = 0x9000, scoped, tag = 'internal scratch']
  #allocation2 [shape = 'f32[1,18,18,4]{3,2,1,0:T(8,128)}', space=vmem, size = 0x36000, scoped, tag = 'scratch operand']
  #allocation3 [shape = 'f32[64,128]{1,0:T(8,128)}', space=vmem, size = 0x8000, scoped, tag = 'scratch operand']
  %s0 = inlined_call_operand.vmem [shape: f32[2,18,18,4], index: 0, kind: input, shape index: {}]
  %s1 = inlined_call_operand.vmem [shape: bf16[3,3,4,128], index: 1, kind: input, shape index: {}]
  %s2 = inlined_call_operand.vmem [shape: bf16[4,128], index: 2, kind: input, shape index: {}]
  %s3 = inlined_call_operand.vmem [shape: f32[1,4], index: 3, kind: input, shape index: {}]
  %s4 = inlined_call_operand.vmem [shape: f32[1,4], index: 4, kind: input, shape index: {}]
  %s5 = inlined_call_operand.vmem [shape: f32[2,10,10,128], index: 5, kind: output, shape index: {0}]
  %s6 = inlined_call_operand.vmem [shape: f32[2,8,8,128], index: 6, kind: output, shape index: {1}]
  %s7 = inlined_call_operand.vmem [shape: f32[2,1,128], index: 7, kind: output, shape index: {2}]
  %s8 = inlined_call_operand.vmem [shape: f32[2,1,128], index: 8, kind: output, shape index: {3}]
  %9 = xla_tuple %s5, %s6, %s7, %s8
  %s10 = sld [smem:[#allocation0]]
  $region77: #{preact_block_forward.2} parent=0
    _
  %s12 = ssub.s32 1, %s10
  %s13 = scalar_select 0, %s12, %s10
  loop: start=0, step=1, limit=4
  $region2: #{preact_block_forward.2} parent=0 // loop_pre_header
    _
  $region3: #{preact_block_forward.2} parent=0 // loop_header
    %s15 = sphi 0, %s19
    %p16 = scmp.ge.s32.totalorder %s15, 4
    %s25 = sphi 0, %s27
    %s28 = sphi 0, %s25
    %s29 = sphi 0, %s28
    %s45 = sphi 0, %s29
    %s49 = sphi 0, %s49
    %s51 = sphi 0, %s49
    %s52 = sphi 0, %s51
    %s66 = sphi 0, %s52
    %s70 = sphi 0, %s70
    %s72 = sphi 0, %s70
    %s73 = sphi 0, %s72
    %s87 = sphi 0, %s73
    %s91 = sphi 0, %s91
    %s93 = sphi 0, %s91
    %s94 = sphi 0, %s93
    %s108 = sphi 0, %s94
    %s112 = sphi 0, %s112
    %s114 = sphi 0, %s112
    %s115 = sphi 0, %s114
    %s129 = sphi 0, %s115
    %s135 = sphi 0, %s137
    %s138 = sphi 0, %s135
    %s139 = sphi 0, %s138
    %s155 = sphi 0, %s139
    %s161 = sphi 0, %s163
    %s164 = sphi 0, %s161
    %s165 = sphi 0, %s164
    %s181 = sphi 0, %s165
    %s187 = sphi 0, %s189
    %s190 = sphi 0, %s187
    %s191 = sphi 0, %s190
    %s207 = sphi 0, %s191
    %s213 = sphi 0, %s215
    %s216 = sphi 0, %s213
    %s217 = sphi 0, %s216
    %s233 = sphi 0, %s217
  $region4: #{preact_block_forward.2} parent=0 // loop_header_branch
    %18 = sbr.rel (%p16) target = $region8
  $region5: #{preact_block_forward.2} parent=0 // loop_body
    %s20 = ssub.s32 %s15, 1
    %s21 = ssub.s32 %s15, 2
    %s22 = sadd.s32 %s15, 1
    %s23 = ssub.s32 %s15, %s22
    %p24 = scmp.eq.s32.totalorder %s23, 0
    %s26 = sadd.s32 %s25, 1
    %s27 = scalar_select %p24, %s25, %s26
    %p30 = pneg %p24
    %p31 = scmp.eq.s32.totalorder %s15, 1
    %p32 = por %p30, %p31
    %p33 = scmp.ne.s32.totalorder %s25, %s28
    %p34 = scmp.eq.s32.totalorder %s15, 0
    %p35 = por %p33, %p34
    %p36 = scmp.ne.s32.totalorder %s25, %s28
    %p37 = scmp.eq.s32.totalorder %s20, 1
    %p38 = por %p36, %p37
    %p39 = scmp.ne.s32.totalorder %s28, %s29
    %p40 = scmp.eq.s32.totalorder %s20, 0
    %p41 = por %p39, %p40
    %p42 = scmp.ne.s32.totalorder %s28, %s29
    %p43 = scmp.eq.s32.totalorder %s21, 1
    %p44 = por %p42, %p43
    %p46 = scmp.ne.s32.totalorder %s29, %s45
    %p47 = scmp.eq.s32.totalorder %s21, 0
    %p48 = por %p46, %p47
    %s50 = sadd.s32 %s49, 1
    %p53 = scmp.eq.s32.totalorder %s15, 1
    %p54 = scmp.ne.s32.totalorder %s49, %s51
    %p55 = scmp.eq.s32.totalorder %s15, 0
    %p56 = por %p54, %p55
    %p57 = scmp.ne.s32.totalorder %s49, %s51
    %p58 = scmp.eq.s32.totalorder %s20, 1
    %p59 = por %p57, %p58
    %p60 = scmp.ne.s32.totalorder %s51, %s52
    %p61 = scmp.eq.s32.totalorder %s20, 0
    %p62 = por %p60, %p61
    %p63 = scmp.ne.s32.totalorder %s51, %s52
    %p64 = scmp.eq.s32.totalorder %s21, 1
    %p65 = por %p63, %p64
    %p67 = scmp.ne.s32.totalorder %s52, %s66
    %p68 = scmp.eq.s32.totalorder %s21, 0
    %p69 = por %p67, %p68
    %s71 = sadd.s32 %s70, 1
    %p74 = scmp.eq.s32.totalorder %s15, 1
    %p75 = scmp.ne.s32.totalorder %s70, %s72
    %p76 = scmp.eq.s32.totalorder %s15, 0
    %p77 = por %p75, %p76
    %p78 = scmp.ne.s32.totalorder %s70, %s72
    %p79 = scmp.eq.s32.totalorder %s20, 1
    %p80 = por %p78, %p79
    %p81 = scmp.ne.s32.totalorder %s72, %s73
    %p82 = scmp.eq.s32.totalorder %s20, 0
    %p83 = por %p81, %p82
    %p84 = scmp.ne.s32.totalorder %s72, %s73
    %p85 = scmp.eq.s32.totalorder %s21, 1
    %p86 = por %p84, %p85
    %p88 = scmp.ne.s32.totalorder %s73, %s87
    %p89 = scmp.eq.s32.totalorder %s21, 0
    %p90 = por %p88, %p89
    %s92 = sadd.s32 %s91, 1
    %p95 = scmp.eq.s32.totalorder %s15, 1
    %p96 = scmp.ne.s32.totalorder %s91, %s93
    %p97 = scmp.eq.s32.totalorder %s15, 0
    %p98 = por %p96, %p97
    %p99 = scmp.ne.s32.totalorder %s91, %s93
    %p100 = scmp.eq.s32.totalorder %s20, 1
    %p101 = por %p99, %p100
    %p102 = scmp.ne.s32.totalorder %s93, %s94
    %p103 = scmp.eq.s32.totalorder %s20, 0
    %p104 = por %p102, %p103
    %p105 = scmp.ne.s32.totalorder %s93, %s94
    %p106 = scmp.eq.s32.totalorder %s21, 1
    %p107 = por %p105, %p106
    %p109 = scmp.ne.s32.totalorder %s94, %s108
    %p110 = scmp.eq.s32.totalorder %s21, 0
    %p111 = por %p109, %p110
    %s113 = sadd.s32 %s112, 1
    %p116 = scmp.eq.s32.totalorder %s15, 1
    %p117 = scmp.ne.s32.totalorder %s112, %s114
    %p118 = scmp.eq.s32.totalorder %s15, 0
    %p119 = por %p117, %p118
    %p120 = scmp.ne.s32.totalorder %s112, %s114
    %p121 = scmp.eq.s32.totalorder %s20, 1
    %p122 = por %p120, %p121
    %p123 = scmp.ne.s32.totalorder %s114, %s115
    %p124 = scmp.eq.s32.totalorder %s20, 0
    %p125 = por %p123, %p124
    %p126 = scmp.ne.s32.totalorder %s114, %s115
    %p127 = scmp.eq.s32.totalorder %s21, 1
    %p128 = por %p126, %p127
    %p130 = scmp.ne.s32.totalorder %s115, %s129
    %p131 = scmp.eq.s32.totalorder %s21, 0
    %p132 = por %p130, %p131
    %s133 = ssub.s32 %s15, %s22
    %p134 = scmp.eq.s32.totalorder %s133, 0
    %s136 = sadd.s32 %s135, 1
    %s137 = scalar_select %p134, %s135, %s136
    %p140 = pneg %p134
    %p141 = scmp.eq.s32.totalorder %s15, 1
    %p142 = por %p140, %p141
    %p143 = scmp.ne.s32.totalorder %s135, %s138
    %p144 = scmp.eq.s32.totalorder %s15, 0
    %p145 = por %p143, %p144
    %p146 = scmp.ne.s32.totalorder %s135, %s138
    %p147 = scmp.eq.s32.totalorder %s20, 1
    %p148 = por %p146, %p147
    %p149 = scmp.ne.s32.totalorder %s138, %s139
    %p150 = scmp.eq.s32.totalorder %s20, 0
    %p151 = por %p149, %p150
    %p152 = scmp.ne.s32.totalorder %s138, %s139
    %p153 = scmp.eq.s32.totalorder %s21, 1
    %p154 = por %p152, %p153
    %p156 = scmp.ne.s32.totalorder %s139, %s155
    %p157 = scmp.eq.s32.totalorder %s21, 0
    %p158 = por %p156, %p157
    %s159 = ssub.s32 %s15, %s22
    %p160 = scmp.eq.s32.totalorder %s159, 0
    %s162 = sadd.s32 %s161, 1
    %s163 = scalar_select %p160, %s161, %s162
    %p166 = pneg %p160
    %p167 = scmp.eq.s32.totalorder %s15, 1
    %p168 = por %p166, %p167
    %p169 = scmp.ne.s32.totalorder %s161, %s164
    %p170 = scmp.eq.s32.totalorder %s15, 0
    %p171 = por %p169, %p170
    %p172 = scmp.ne.s32.totalorder %s161, %s164
    %p173 = scmp.eq.s32.totalorder %s20, 1
    %p174 = por %p172, %p173
    %p175 = scmp.ne.s32.totalorder %s164, %s165
    %p176 = scmp.eq.s32.totalorder %s20, 0
    %p177 = por %p175, %p176
    %p178 = scmp.ne.s32.totalorder %s164, %s165
    %p179 = scmp.eq.s32.totalorder %s21, 1
    %p180 = por %p178, %p179
    %p182 = scmp.ne.s32.totalorder %s165, %s181
    %p183 = scmp.eq.s32.totalorder %s21, 0
    %p184 = por %p182, %p183
    %s185 = ssub.s32 %s15, %s22
    %p186 = scmp.eq.s32.totalorder %s185, 0
    %s188 = sadd.s32 %s187, 1
    %s189 = scalar_select %p186, %s187, %s188
    %p192 = pneg %p186
    %p193 = scmp.eq.s32.totalorder %s15, 1
    %p194 = por %p192, %p193
    %p195 = scmp.ne.s32.totalorder %s187, %s190
    %p196 = scmp.eq.s32.totalorder %s15, 0
    %p197 = por %p195, %p196
    %p198 = scmp.ne.s32.totalorder %s187, %s190
    %p199 = scmp.eq.s32.totalorder %s20, 1
    %p200 = por %p198, %p199
    %p201 = scmp.ne.s32.totalorder %s190, %s191
    %p202 = scmp.eq.s32.totalorder %s20, 0
    %p203 = por %p201, %p202
    %p204 = scmp.ne.s32.totalorder %s190, %s191
    %p205 = scmp.eq.s32.totalorder %s21, 1
    %p206 = por %p204, %p205
    %p208 = scmp.ne.s32.totalorder %s191, %s207
    %p209 = scmp.eq.s32.totalorder %s21, 0
    %p210 = por %p208, %p209
    %s211 = ssub.s32 %s15, %s22
    %p212 = scmp.eq.s32.totalorder %s211, 0
    %s214 = sadd.s32 %s213, 1
    %s215 = scalar_select %p212, %s213, %s214
    %p218 = pneg %p212
    %p219 = scmp.eq.s32.totalorder %s15, 1
    %p220 = por %p218, %p219
    %p221 = scmp.ne.s32.totalorder %s213, %s216
    %p222 = scmp.eq.s32.totalorder %s15, 0
    %p223 = por %p221, %p222
    %p224 = scmp.ne.s32.totalorder %s213, %s216
    %p225 = scmp.eq.s32.totalorder %s20, 1
    %p226 = por %p224, %p225
    %p227 = scmp.ne.s32.totalorder %s216, %s217
    %p228 = scmp.eq.s32.totalorder %s20, 0
    %p229 = por %p227, %p228
    %p230 = scmp.ne.s32.totalorder %s216, %s217
    %p231 = scmp.eq.s32.totalorder %s21, 1
    %p232 = por %p230, %p231
    %p234 = scmp.ne.s32.totalorder %s217, %s233
    %p235 = scmp.eq.s32.totalorder %s21, 0
    %p236 = por %p234, %p235
    %p237 = scmp.le.s32.totalorder 1, %s15
    %p238 = scmp.lt.s32.totalorder %s15, 3
    %p239 = pnand %p237, %p238
    %p240 = pneg %p239
    // Predicated region
    $region9: #{preact_block_forward.2} parent=5 // pred_check
      _
    $region10: #{preact_block_forward.2} parent=5 // pred_check_branch
      %242 = sbr.rel (%p239) target = $region12
    $region11: #{preact_block_forward.2} parent=5 // pred_region
      %s243 = ssub.s32 %s15, 1
      // Predicated region
      $region13: #{preact_block_forward.2} parent=11 // pred_check
        %p244 = pneg %p62
      $region14: #{preact_block_forward.2} parent=11 // pred_check_branch
        %246 = sbr.rel (%p244) target = $region16
      $region15: #{preact_block_forward.2} parent=11 // pred_region
        _
      $region16: #{preact_block_forward.2} parent=11 // pred_fallthru
        _
      // Predicated region
      $region17: #{preact_block_forward.2} parent=11 // pred_check
        %p247 = pneg %p83
      $region18: #{preact_block_forward.2} parent=11 // pred_check_branch
        %249 = sbr.rel (%p247) target = $region20
      $region19: #{preact_block_forward.2} parent=11 // pred_region
        _
      $region20: #{preact_block_forward.2} parent=11 // pred_fallthru
        _
      // Predicated region
      $region21: #{preact_block_forward.2} parent=11 // pred_check
        %p250 = pneg %p104
      $region22: #{preact_block_forward.2} parent=11 // pred_check_branch
        %252 = sbr.rel (%p250) target = $region24
      $region23: #{preact_block_forward.2} parent=11 // pred_region
        _
      $region24: #{preact_block_forward.2} parent=11 // pred_fallthru
        _
      // Predicated region
      $region25: #{preact_block_forward.2} parent=11 // pred_check
        %p253 = pneg %p125
      $region26: #{preact_block_forward.2} parent=11 // pred_check_branch
        %255 = sbr.rel (%p253) target = $region28
      $region27: #{preact_block_forward.2} parent=11 // pred_region
        _
      $region28: #{preact_block_forward.2} parent=11 // pred_fallthru
        _
    $region12: #{preact_block_forward.2} parent=5 // pred_fallthru
      _
    %p256 = scmp.lt.s32.totalorder %s15, 2
    // Predicated region
    $region29: #{preact_block_forward.2} parent=5 // pred_check
      %p257 = pneg %p256
    $region30: #{preact_block_forward.2} parent=5 // pred_check_branch
      %259 = sbr.rel (%p257) target = $region32
    $region31: #{preact_block_forward.2} parent=5 // pred_region
      // Predicated region
      $region33: #{preact_block_forward.2} parent=31 // pred_check
        %p260 = pneg %p35
      $region34: #{preact_block_forward.2} parent=31 // pred_check_branch
        %262 = sbr.rel (%p260) target = $region36
      $region35: #{preact_block_forward.2} parent=31 // pred_region
        %p263 = scmp.lt.s32.totalorder %s15, 1
        %s264 = scalar_select %p263, %s15, 1
        %s265 = smul.addr %s264, 54
        %s266 = smul.addr %s265, 8
        %s267 = scalar_lea.vmem %s0, %s266
      $region36: #{preact_block_forward.2} parent=31 // pred_fallthru
        _
    $region32: #{preact_block_forward.2} parent=5 // pred_fallthru
      _
    %p268 = scmp.le.s32.totalorder 1, %s15
    %p269 = scmp.lt.s32.totalorder %s15, 3
    %p270 = pnand %p268, %p269
    %p271 = pneg %p270
    // Predicated region
    $region37: #{preact_block_forward.2} parent=5 // pred_check
      _
    $region38: #{preact_block_forward.2} parent=5 // pred_check_branch
      %273 = sbr.rel (%p270) target = $region40
    $region39: #{preact_block_forward.2} parent=5 // pred_region
      %s274 = ssub.s32 %s15, 1
      %p275 = scmp.lt.s32.totalorder %s20, 1
      %s276 = scalar_select %p275, %s20, 1
      %s277 = smul.addr %s276, 54
      %s278 = smul.addr %s277, 8
      %s279 = scalar_lea.vmem %s0, %s278
      %p280 = pneg %p41
      %p281 = pneg %p38
      %p282 = pneg %p62
      %p283 = pneg %p59
      %p284 = pneg %p83
      %p285 = pneg %p80
      %p286 = pneg %p104
      %p287 = pneg %p101
      %p288 = pneg %p125
      %p289 = pneg %p122
      %p290 = pneg %p151
      %p291 = pneg %p148
      %p292 = scmp.lt.s32.totalorder %s20, 1
      %s293 = scalar_select %p292, %s20, 1
      %s294 = smul.addr %s293, 20
      %s295 = smul.addr %s294, 8
      %s296 = scalar_lea.vmem %s5, %s295
      %p297 = pneg %p177
      %p298 = pneg %p174
      %p299 = scmp.lt.s32.totalorder %s20, 1
      %s300 = scalar_select %p299, %s20, 1
      %s301 = smul.addr %s300, 8
      %s302 = smul.addr %s301, 8
      %s303 = scalar_lea.vmem %s6, %s302
      %p304 = pneg %p203
      %p305 = pneg %p200
      %p306 = scmp.lt.s32.totalorder %s20, 1
      %s307 = scalar_select %p306, %s20, 1
      %s308 = scalar_lea.vmem %s7, %s307
      %p309 = pneg %p229
      %p310 = pneg %p226
      %p311 = scmp.lt.s32.totalorder %s20, 1
      %s312 = scalar_select %p311, %s20, 1
      %s313 = scalar_lea.vmem %s8, %s312
      %p314 = scmp.lt.s32.totalorder %s20, 1
      %s315 = scalar_select %p314, %s20, 1
      %s316 = smul.addr %s315, 54
      %s317 = smul.addr %s316, 8
      %s318 = scalar_lea.vmem %s0, %s317
      %p319 = scmp.lt.s32.totalorder %s20, 1
      %s320 = scalar_select %p319, %s20, 1
      %s321 = smul.addr %s320, 20
      %s322 = smul.addr %s321, 8
      %s323 = scalar_lea.vmem %s5, %s322
      %p324 = scmp.lt.s32.totalorder %s20, 1
      %s325 = scalar_select %p324, %s20, 1
      %s326 = smul.addr %s325, 8
      %s327 = smul.addr %s326, 8
      %s328 = scalar_lea.vmem %s6, %s327
      %p329 = scmp.lt.s32.totalorder %s20, 1
      %s330 = scalar_select %p329, %s20, 1
      %s331 = scalar_lea.vmem %s7, %s330
      %p332 = scmp.lt.s32.totalorder %s20, 1
      %s333 = scalar_select %p332, %s20, 1
      %s334 = scalar_lea.vmem %s8, %s333
      %v336 = vld [vmem:[%s318] sm:$0xff]
      %v337 = vld [vmem:[%s318 + $0x8] sm:$0xff]
      %v338 = vld [vmem:[%s318 + $0x10] sm:$0x3]
      %v339 = vld [vmem:[%s318 + $0x18] sm:$0xff]
      %v340 = vld [vmem:[%s318 + $0x20] sm:$0xff]
      %v341 = vld [vmem:[%s318 + $0x28] sm:$0x3]
      %v342 = vld [vmem:[%s318 + $0x30] sm:$0xff]
      %v343 = vld [vmem:[%s318 + $0x38] sm:$0xff]
      %v344 = vld [vmem:[%s318 + $0x40] sm:$0x3]
      %v345 = vld [vmem:[%s318 + $0x48] sm:$0xff]
      %v346 = vld [vmem:[%s318 + $0x50] sm:$0xff]
      %v347 = vld [vmem:[%s318 + $0x58] sm:$0x3]
      %v348 = vld [vmem:[%s318 + $0x60] sm:$0xff]
      %v349 = vld [vmem:[%s318 + $0x68] sm:$0xff]
      %v350 = vld [vmem:[%s318 + $0x70] sm:$0x3]
      %v351 = vld [vmem:[%s318 + $0x78] sm:$0xff]
      %v352 = vld [vmem:[%s318 + $0x80] sm:$0xff]
      %v353 = vld [vmem:[%s318 + $0x88] sm:$0x3]
      %v354 = vld [vmem:[%s318 + $0x90] sm:$0xff]
      %v355 = vld [vmem:[%s318 + $0x98] sm:$0xff]
      %v356 = vld [vmem:[%s318 + $0xa0] sm:$0x3]
      %v357 = vld [vmem:[%s318 + $0xa8] sm:$0xff]
      %v358 = vld [vmem:[%s318 + $0xb0] sm:$0xff]
      %v359 = vld [vmem:[%s318 + $0xb8] sm:$0x3]
      %v360 = vld [vmem:[%s318 + $0xc0] sm:$0xff]
      %v361 = vld [vmem:[%s318 + $0xc8] sm:$0xff]
      %v362 = vld [vmem:[%s318 + $0xd0] sm:$0x3]
      %v363 = vld [vmem:[%s318 + $0xd8] sm:$0xff]
      %v364 = vld [vmem:[%s318 + $0xe0] sm:$0xff]
      %v365 = vld [vmem:[%s318 + $0xe8] sm:$0x3]
      %v366 = vld [vmem:[%s318 + $0xf0] sm:$0xff]
      %v367 = vld [vmem:[%s318 + $0xf8] sm:$0xff]
      %v368 = vld [vmem:[%s318 + $0x100] sm:$0x3]
      %v369 = vld [vmem:[%s318 + $0x108] sm:$0xff]
      %v370 = vld [vmem:[%s318 + $0x110] sm:$0xff]
      %v371 = vld [vmem:[%s318 + $0x118] sm:$0x3]
      %v372 = vld [vmem:[%s318 + $0x120] sm:$0xff]
      %v373 = vld [vmem:[%s318 + $0x128] sm:$0xff]
      %v374 = vld [vmem:[%s318 + $0x130] sm:$0x3]
      %v375 = vld [vmem:[%s318 + $0x138] sm:$0xff]
      %v376 = vld [vmem:[%s318 + $0x140] sm:$0xff]
      %v377 = vld [vmem:[%s318 + $0x148] sm:$0x3]
      %v378 = vld [vmem:[%s318 + $0x150] sm:$0xff]
      %v379 = vld [vmem:[%s318 + $0x158] sm:$0xff]
      %v380 = vld [vmem:[%s318 + $0x160] sm:$0x3]
      %v381 = vld [vmem:[%s318 + $0x168] sm:$0xff]
      %v382 = vld [vmem:[%s318 + $0x170] sm:$0xff]
      %v383 = vld [vmem:[%s318 + $0x178] sm:$0x3]
      %v384 = vld [vmem:[%s318 + $0x180] sm:$0xff]
      %v385 = vld [vmem:[%s318 + $0x188] sm:$0xff]
      %v386 = vld [vmem:[%s318 + $0x190] sm:$0x3]
      %v387 = vld [vmem:[%s318 + $0x198] sm:$0xff]
      %v388 = vld [vmem:[%s318 + $0x1a0] sm:$0xff]
      %v389 = vld [vmem:[%s318 + $0x1a8] sm:$0x3]
      %v390 = vld [vmem:[%s3] sm:$0x1]
      %v391 = vld [vmem:[%s4] sm:$0x1]
      %v393 = vperm.slane %v390, 0
      %v395 = vmul.f32 %v336, %v393
      %v396 = vmul.f32 %v337, %v393
      %v397 = vmul.f32 %v338, %v393
      %v398 = vmul.f32 %v339, %v393
      %v399 = vmul.f32 %v340, %v393
      %v400 = vmul.f32 %v341, %v393
      %v401 = vmul.f32 %v342, %v393
      %v402 = vmul.f32 %v343, %v393
      %v403 = vmul.f32 %v344, %v393
      %v404 = vmul.f32 %v345, %v393
      %v405 = vmul.f32 %v346, %v393
      %v406 = vmul.f32 %v347, %v393
      %v407 = vmul.f32 %v348, %v393
      %v408 = vmul.f32 %v349, %v393
      %v409 = vmul.f32 %v350, %v393
      %v410 = vmul.f32 %v351, %v393
      %v411 = vmul.f32 %v352, %v393
      %v412 = vmul.f32 %v353, %v393
      %v413 = vmul.f32 %v354, %v393
      %v414 = vmul.f32 %v355, %v393
      %v415 = vmul.f32 %v356, %v393
      %v416 = vmul.f32 %v357, %v393
      %v417 = vmul.f32 %v358, %v393
      %v418 = vmul.f32 %v359, %v393
      %v419 = vmul.f32 %v360, %v393
      %v420 = vmul.f32 %v361, %v393
      %v421 = vmul.f32 %v362, %v393
      %v422 = vmul.f32 %v363, %v393
      %v423 = vmul.f32 %v364, %v393
      %v424 = vmul.f32 %v365, %v393
      %v425 = vmul.f32 %v366, %v393
      %v426 = vmul.f32 %v367, %v393
      %v427 = vmul.f32 %v368, %v393
      %v428 = vmul.f32 %v369, %v393
      %v429 = vmul.f32 %v370, %v393
      %v430 = vmul.f32 %v371, %v393
      %v431 = vmul.f32 %v372, %v393
      %v432 = vmul.f32 %v373, %v393
      %v433 = vmul.f32 %v374, %v393
      %v434 = vmul.f32 %v375, %v393
      %v435 = vmul.f32 %v376, %v393
      %v436 = vmul.f32 %v377, %v393
      %v437 = vmul.f32 %v378, %v393
      %v438 = vmul.f32 %v379, %v393
      %v439 = vmul.f32 %v380, %v393
      %v440 = vmul.f32 %v381, %v393
      %v441 = vmul.f32 %v382, %v393
      %v442 = vmul.f32 %v383, %v393
      %v443 = vmul.f32 %v384, %v393
      %v444 = vmul.f32 %v385, %v393
      %v445 = vmul.f32 %v386, %v393
      %v446 = vmul.f32 %v387, %v393
      %v447 = vmul.f32 %v388, %v393
      %v448 = vmul.f32 %v389, %v393
      %v450 = vperm.slane %v391, 0
      %v452 = vadd.f32 %v395, %v450
      %v453 = vadd.f32 %v396, %v450
      %v454 = vadd.f32 %v397, %v450
      %v455 = vadd.f32 %v398, %v450
      %v456 = vadd.f32 %v399, %v450
      %v457 = vadd.f32 %v400, %v450
      %v458 = vadd.f32 %v401, %v450
      %v459 = vadd.f32 %v402, %v450
      %v460 = vadd.f32 %v403, %v450
      %v461 = vadd.f32 %v404, %v450
      %v462 = vadd.f32 %v405, %v450
      %v463 = vadd.f32 %v406, %v450
      %v464 = vadd.f32 %v407, %v450
      %v465 = vadd.f32 %v408, %v450
      %v466 = vadd.f32 %v409, %v450
      %v467 = vadd.f32 %v410, %v450
      %v468 = vadd.f32 %v411, %v450
      %v469 = vadd.f32 %v412, %v450
      %v470 = vadd.f32 %v413, %v450
      %v471 = vadd.f32 %v414, %v450
      %v472 = vadd.f32 %v415, %v450
      %v473 = vadd.f32 %v416, %v450
      %v474 = vadd.f32 %v417, %v450
      %v475 = vadd.f32 %v418, %v450
      %v476 = vadd.f32 %v419, %v450
      %v477 = vadd.f32 %v420, %v450
      %v478 = vadd.f32 %v421, %v450
      %v479 = vadd.f32 %v422, %v450
      %v480 = vadd.f32 %v423, %v450
      %v481 = vadd.f32 %v424, %v450
      %v482 = vadd.f32 %v425, %v450
      %v483 = vadd.f32 %v426, %v450
      %v484 = vadd.f32 %v427, %v450
      %v485 = vadd.f32 %v428, %v450
      %v486 = vadd.f32 %v429, %v450
      %v487 = vadd.f32 %v430, %v450
      %v488 = vadd.f32 %v431, %v450
      %v489 = vadd.f32 %v432, %v450
      %v490 = vadd.f32 %v433, %v450
      %v491 = vadd.f32 %v434, %v450
      %v492 = vadd.f32 %v435, %v450
      %v493 = vadd.f32 %v436, %v450
      %v494 = vadd.f32 %v437, %v450
      %v495 = vadd.f32 %v438, %v450
      %v496 = vadd.f32 %v439, %v450
      %v497 = vadd.f32 %v440, %v450
      %v498 = vadd.f32 %v441, %v450
      %v499 = vadd.f32 %v442, %v450
      %v500 = vadd.f32 %v443, %v450
      %v501 = vadd.f32 %v444, %v450
      %v502 = vadd.f32 %v445, %v450
      %v503 = vadd.f32 %v446, %v450
      %v504 = vadd.f32 %v447, %v450
      %v505 = vadd.f32 %v448, %v450
      %v506 = vmax.f32 %v452, 0.0
      %v507 = vmax.f32 %v453, 0.0
      %v508 = vmax.f32 %v454, 0.0
      %v509 = vmax.f32 %v455, 0.0
      %v510 = vmax.f32 %v456, 0.0
      %v511 = vmax.f32 %v457, 0.0
      %v512 = vmax.f32 %v458, 0.0
      %v513 = vmax.f32 %v459, 0.0
      %v514 = vmax.f32 %v460, 0.0
      %v515 = vmax.f32 %v461, 0.0
      %v516 = vmax.f32 %v462, 0.0
      %v517 = vmax.f32 %v463, 0.0
      %v518 = vmax.f32 %v464, 0.0
      %v519 = vmax.f32 %v465, 0.0
      %v520 = vmax.f32 %v466, 0.0
      %v521 = vmax.f32 %v467, 0.0
      %v522 = vmax.f32 %v468, 0.0
      %v523 = vmax.f32 %v469, 0.0
      %v524 = vmax.f32 %v470, 0.0
      %v525 = vmax.f32 %v471, 0.0
      %v526 = vmax.f32 %v472, 0.0
      %v527 = vmax.f32 %v473, 0.0
      %v528 = vmax.f32 %v474, 0.0
      %v529 = vmax.f32 %v475, 0.0
      %v530 = vmax.f32 %v476, 0.0
      %v531 = vmax.f32 %v477, 0.0
      %v532 = vmax.f32 %v478, 0.0
      %v533 = vmax.f32 %v479, 0.0
      %v534 = vmax.f32 %v480, 0.0
      %v535 = vmax.f32 %v481, 0.0
      %v536 = vmax.f32 %v482, 0.0
      %v537 = vmax.f32 %v483, 0.0
      %v538 = vmax.f32 %v484, 0.0
      %v539 = vmax.f32 %v485, 0.0
      %v540 = vmax.f32 %v486, 0.0
      %v541 = vmax.f32 %v487, 0.0
      %v542 = vmax.f32 %v488, 0.0
      %v543 = vmax.f32 %v489, 0.0
      %v544 = vmax.f32 %v490, 0.0
      %v545 = vmax.f32 %v491, 0.0
      %v546 = vmax.f32 %v492, 0.0
      %v547 = vmax.f32 %v493, 0.0
      %v548 = vmax.f32 %v494, 0.0
      %v549 = vmax.f32 %v495, 0.0
      %v550 = vmax.f32 %v496, 0.0
      %v551 = vmax.f32 %v497, 0.0
      %v552 = vmax.f32 %v498, 0.0
      %v553 = vmax.f32 %v499, 0.0
      %v554 = vmax.f32 %v500, 0.0
      %v555 = vmax.f32 %v501, 0.0
      %v556 = vmax.f32 %v502, 0.0
      %v557 = vmax.f32 %v503, 0.0
      %v558 = vmax.f32 %v504, 0.0
      %v559 = vmax.f32 %v505, 0.0
      %v560 = vlaneseq
      %v561 = vshrl.u32 %v560, 7
      %v562 = vadd.s32 %v561, 8
      %v563 = vadd.s32 %v561, 16
      %vm564 = vcmp.ge.s32.totalorder %v561, 1
      %vm565 = vcmp.ge.s32.totalorder %v562, 1
      %vm566 = vcmp.ge.s32.totalorder %v563, 1
      %vm567 = vmand 0, %vm564
      %vm568 = vmand 0, %vm565
      %vm569 = vmand 0, %vm566
      %vm570 = vmand 1, %vm564
      %vm571 = vmand 1, %vm565
      %vm572 = vmand 1, %vm566
      %vm573 = vcmp.le.s32.totalorder %v561, 16
      %vm574 = vcmp.le.s32.totalorder %v562, 16
      %vm575 = vcmp.le.s32.totalorder %v563, 16
      %vm576 = vmand %vm567, %vm573
      %vm577 = vmand %vm568, %vm574
      %vm578 = vmand %vm569, %vm575
      %vm579 = vmand %vm570, %vm573
      %vm580 = vmand %vm571, %vm574
      %vm581 = vmand %vm572, %vm575
      %v582 = vsel %vm576, 1, 0
      %v583 = vsel %vm577, 1, 0
      %v584 = vsel %vm578, 1, 0
      %v585 = vsel %vm579, 1, 0
      %v586 = vsel %vm580, 1, 0
      %v587 = vsel %vm581, 1, 0
      %v588 = vcvt.s32.f32 %v582
      %v589 = vcvt.s32.f32 %v583
      %v590 = vcvt.s32.f32 %v584
      %v591 = vcvt.s32.f32 %v585
      %v592 = vcvt.s32.f32 %v586
      %v593 = vcvt.s32.f32 %v587
      %v594 = vmul.f32 %v506, %v588
      %v595 = vmul.f32 %v507, %v589
      %v596 = vmul.f32 %v508, %v590
      %v597 = vmul.f32 %v509, %v591
      %v598 = vmul.f32 %v510, %v592
      %v599 = vmul.f32 %v511, %v593
      %v600 = vmul.f32 %v512, %v591
      %v601 = vmul.f32 %v513, %v592
      %v602 = vmul.f32 %v514, %v593
      %v603 = vmul.f32 %v515, %v591
      %v604 = vmul.f32 %v516, %v592
      %v605 = vmul.f32 %v517, %v593
      %v606 = vmul.f32 %v518, %v591
      %v607 = vmul.f32 %v519, %v592
      %v608 = vmul.f32 %v520, %v593
      %v609 = vmul.f32 %v521, %v591
      %v610 = vmul.f32 %v522, %v592
      %v611 = vmul.f32 %v523, %v593
      %v612 = vmul.f32 %v524, %v591
      %v613 = vmul.f32 %v525, %v592
      %v614 = vmul.f32 %v526, %v593
      %v615 = vmul.f32 %v527, %v591
      %v616 = vmul.f32 %v528, %v592
      %v617 = vmul.f32 %v529, %v593
      %v618 = vmul.f32 %v530, %v591
      %v619 = vmul.f32 %v531, %v592
      %v620 = vmul.f32 %v532, %v593
      %v621 = vmul.f32 %v533, %v591
      %v622 = vmul.f32 %v534, %v592
      %v623 = vmul.f32 %v535, %v593
      %v624 = vmul.f32 %v536, %v591
      %v625 = vmul.f32 %v537, %v592
      %v626 = vmul.f32 %v538, %v593
      %v627 = vmul.f32 %v539, %v591
      %v628 = vmul.f32 %v540, %v592
      %v629 = vmul.f32 %v541, %v593
      %v630 = vmul.f32 %v542, %v591
      %v631 = vmul.f32 %v543, %v592
      %v632 = vmul.f32 %v544, %v593
      %v633 = vmul.f32 %v545, %v591
      %v634 = vmul.f32 %v546, %v592
      %v635 = vmul.f32 %v547, %v593
      %v636 = vmul.f32 %v548, %v591
      %v637 = vmul.f32 %v549, %v592
      %v638 = vmul.f32 %v550, %v593
      %v639 = vmul.f32 %v551, %v591
      %v640 = vmul.f32 %v552, %v592
      %v641 = vmul.f32 %v553, %v593
      %v642 = vmul.f32 %v554, %v591
      %v643 = vmul.f32 %v555, %v592
      %v644 = vmul.f32 %v556, %v593
      %v645 = vmul.f32 %v557, %v588
      %v646 = vmul.f32 %v558, %v589
      %v647 = vmul.f32 %v559, %v590
      %vm648 = vcmask 31744
      %649 = vst.msk [vmem:[#allocation2] sm:$0xff] %vm648, %v594
      %650 = vst.msk [vmem:[#allocation2 + $0x8] sm:$0xff] %vm648, %v595
      %vm651 = vcmask 25600
      %652 = vst.msk [vmem:[#allocation2 + $0x10] sm:$0x3] %vm651, %v596
      %653 = vst.msk [vmem:[#allocation2 + $0x18] sm:$0xff] %vm648, %v597
      %654 = vst.msk [vmem:[#allocation2 + $0x20] sm:$0xff] %vm648, %v598
      %655 = vst.msk [vmem:[#allocation2 + $0x28] sm:$0x3] %vm651, %v599
      %656 = vst.msk [vmem:[#allocation2 + $0x30] sm:$0xff] %vm648, %v600
      %657 = vst.msk [vmem:[#allocation2 + $0x38] sm:$0xff] %vm648, %v601
      %658 = vst.msk [vmem:[#allocation2 + $0x40] sm:$0x3] %vm651, %v602
      %659 = vst.msk [vmem:[#allocation2 + $0x48] sm:$0xff] %vm648, %v603
      %660 = vst.msk [vmem:[#allocation2 + $0x50] sm:$0xff] %vm648, %v604
      %661 = vst.msk [vmem:[#allocation2 + $0x58] sm:$0x3] %vm651, %v605
      %662 = vst.msk [vmem:[#allocation2 + $0x60] sm:$0xff] %vm648, %v606
      %663 = vst.msk [vmem:[#allocation2 + $0x68] sm:$0xff] %vm648, %v607
      %664 = vst.msk [vmem:[#allocation2 + $0x70] sm:$0x3] %vm651, %v608
      %665 = vst.msk [vmem:[#allocation2 + $0x78] sm:$0xff] %vm648, %v609
      %666 = vst.msk [vmem:[#allocation2 + $0x80] sm:$0xff] %vm648, %v610
      %667 = vst.msk [vmem:[#allocation2 + $0x88] sm:$0x3] %vm651, %v611
      %668 = vst.msk [vmem:[#allocation2 + $0x90] sm:$0xff] %vm648, %v612
      %669 = vst.msk [vmem:[#allocation2 + $0x98] sm:$0xff] %vm648, %v613
      %670 = vst.msk [vmem:[#allocation2 + $0xa0] sm:$0x3] %vm651, %v614
      %671 = vst.msk [vmem:[#allocation2 + $0xa8] sm:$0xff] %vm648, %v615
      %672 = vst.msk [vmem:[#allocation2 + $0xb0] sm:$0xff] %vm648, %v616
      %673 = vst.msk [vmem:[#allocation2 + $0xb8] sm:$0x3] %vm651, %v617
      %674 = vst.msk [vmem:[#allocation2 + $0xc0] sm:$0xff] %vm648, %v618
      %675 = vst.msk [vmem:[#allocation2 + $0xc8] sm:$0xff] %vm648, %v619
      %676 = vst.msk [vmem:[#allocation2 + $0xd0] sm:$0x3] %vm651, %v620
      %677 = vst.msk [vmem:[#allocation2 + $0xd8] sm:$0xff] %vm648, %v621
      %678 = vst.msk [vmem:[#allocation2 + $0xe0] sm:$0xff] %vm648, %v622
      %679 = vst.msk [vmem:[#allocation2 + $0xe8] sm:$0x3] %vm651, %v623
      %680 = vst.msk [vmem:[#allocation2 + $0xf0] sm:$0xff] %vm648, %v624
      %681 = vst.msk [vmem:[#allocation2 + $0xf8] sm:$0xff] %vm648, %v625
      %682 = vst.msk [vmem:[#allocation2 + $0x100] sm:$0x3] %vm651, %v626
      %683 = vst.msk [vmem:[#allocation2 + $0x108] sm:$0xff] %vm648, %v627
      %684 = vst.msk [vmem:[#allocation2 + $0x110] sm:$0xff] %vm648, %v628
      %685 = vst.msk [vmem:[#allocation2 + $0x118] sm:$0x3] %vm651, %v629
      %686 = vst.msk [vmem:[#allocation2 + $0x120] sm:$0xff] %vm648, %v630
      %687 = vst.msk [vmem:[#allocation2 + $0x128] sm:$0xff] %vm648, %v631
      %688 = vst.msk [vmem:[#allocation2 + $0x130] sm:$0x3] %vm651, %v632
      %689 = vst.msk [vmem:[#allocation2 + $0x138] sm:$0xff] %vm648, %v633
      %690 = vst.msk [vmem:[#allocation2 + $0x140] sm:$0xff] %vm648, %v634
      %691 = vst.msk [vmem:[#allocation2 + $0x148] sm:$0x3] %vm651, %v635
      %692 = vst.msk [vmem:[#allocation2 + $0x150] sm:$0xff] %vm648, %v636
      %693 = vst.msk [vmem:[#allocation2 + $0x158] sm:$0xff] %vm648, %v637
      %694 = vst.msk [vmem:[#allocation2 + $0x160] sm:$0x3] %vm651, %v638
      %695 = vst.msk [vmem:[#allocation2 + $0x168] sm:$0xff] %vm648, %v639
      %696 = vst.msk [vmem:[#allocation2 + $0x170] sm:$0xff] %vm648, %v640
      %697 = vst.msk [vmem:[#allocation2 + $0x178] sm:$0x3] %vm651, %v641
      %698 = vst.msk [vmem:[#allocation2 + $0x180] sm:$0xff] %vm648, %v642
      %699 = vst.msk [vmem:[#allocation2 + $0x188] sm:$0xff] %vm648, %v643
      %700 = vst.msk [vmem:[#allocation2 + $0x190] sm:$0x3] %vm651, %v644
      %701 = vst.msk [vmem:[#allocation2 + $0x198] sm:$0xff] %vm648, %v645
      %702 = vst.msk [vmem:[#allocation2 + $0x1a0] sm:$0xff] %vm648, %v646
      %703 = vst.msk [vmem:[#allocation2 + $0x1a8] sm:$0x3] %vm651, %v647
      %704 = vst [vmem:[#allocation3] sm:$0xff] 0.0
      %705 = vst [vmem:[#allocation3 + $0x8] sm:$0xff] 0.0
      %706 = vst [vmem:[#allocation3 + $0x10] sm:$0xff] 0.0
      %707 = vst [vmem:[#allocation3 + $0x18] sm:$0xff] 0.0
      %708 = vst [vmem:[#allocation3 + $0x20] sm:$0xff] 0.0
      %709 = vst [vmem:[#allocation3 + $0x28] sm:$0xff] 0.0
      %710 = vst [vmem:[#allocation3 + $0x30] sm:$0xff] 0.0
      %711 = vst [vmem:[#allocation3 + $0x38] sm:$0xff] 0.0
      %v712 = vld [vmem:[#allocation2] ss:$2 sm:$0xff]
      %s713 = scalar_lea.vmem [#allocation2], 48
      %v714 = vld [vmem:[%s713] ss:$2 sm:$0xff]
      %s715 = scalar_lea.vmem [#allocation2], 96
      %v716 = vld [vmem:[%s715] ss:$2 sm:$0xff]
      %s717 = scalar_lea.vmem [#allocation2], 144
      %v718 = vld [vmem:[%s717] ss:$2 sm:$0xff]
      %s719 = scalar_lea.vmem [#allocation2], 192
      %v720 = vld [vmem:[%s719] ss:$2 sm:$0xff]
      %s721 = scalar_lea.vmem [#allocation2], 240
      %v722 = vld [vmem:[%s721] ss:$2 sm:$0xff]
      %s723 = scalar_lea.vmem [#allocation2], 288
      %v724 = vld [vmem:[%s723] ss:$2 sm:$0xff]
      %s725 = scalar_lea.vmem [#allocation2], 336
      %v726 = vld [vmem:[%s725] ss:$2 sm:$0xff]
      %v727 = vpack.c.bf16 %v714, %v712
      %v728 = vpack.c.bf16 %v718, %v716
      %v729 = vpack.c.bf16 %v722, %v720
      %v730 = vpack.c.bf16 %v726, %v724
      %v731 = vld [vmem:[#allocation3] sm:$0xff]
      %v732 = vld [vmem:[#allocation3 + $0x8] sm:$0xff]
      %v733 = vld [vmem:[#allocation3 + $0x10] sm:$0xff]
      %v734 = vld [vmem:[#allocation3 + $0x18] sm:$0xff]
      %v735 = vld [vmem:[#allocation3 + $0x20] sm:$0xff]
      %v736 = vld [vmem:[#allocation3 + $0x28] sm:$0xff]
      %v737 = vld [vmem:[#allocation3 + $0x30] sm:$0xff]
      %v738 = vld [vmem:[#allocation3 + $0x38] sm:$0xff]
      %v739 = vld [vmem:[%s1] sm:$0x3]
      %v741 = vsel %vm648, %v727, 0
      %v744 = vsel %vm648, %v728, 0
      %v747 = vsel %vm648, %v729, 0
      %v750 = vsel %vm648, %v730, 0
      %vm752 = vcmask 1041408
      %v754 = vsel %vm752, %v739, 0
      %756 = vmatpush.bf16.msra.mxu0 0
      %757 = vmatpush.bf16.msra.mxu0 0
      %758 = vmatpush.bf16.msra.mxu0 0
      %759 = vmatpush.bf16.msra.mxu0 0
      %760 = vmatpush.bf16.msra.mxu0 0
      %761 = vmatpush.bf16.msra.mxu0 0
      %762 = vmatpush.bf16.msra.mxu0 0
      %763 = vmatpush.bf16.msra.mxu0 %v754
      %764 = vmatmul.bf16.gmra.mxu0 %v741
      %v765 = vpop.f32.mrf.mxu0
      %v766 = vadd.f32 0.0, %v765
      %v767 = vpop.f32.mrf.mxu0
      %v768 = vadd.f32 0.0, %v767
      %769 = vmatmul.bf16.gmra.mxu0 %v744
      %v770 = vpop.f32.mrf.mxu0
      %v771 = vadd.f32 0.0, %v770
      %v772 = vpop.f32.mrf.mxu0
      %v773 = vadd.f32 0.0, %v772
      %774 = vmatmul.bf16.gmra.mxu0 %v747
      %v775 = vpop.f32.mrf.mxu0
      %v776 = vadd.f32 0.0, %v775
      %v777 = vpop.f32.mrf.mxu0
      %v778 = vadd.f32 0.0, %v777
      %779 = vmatmul.bf16.gmra.mxu0 %v750
      %v780 = vpop.f32.mrf.mxu0
      %v781 = vadd.f32 0.0, %v780
      %v782 = vpop.f32.mrf.mxu0
      %v783 = vadd.f32 0.0, %v782
      %784 = vdwg.mxu0
      %v785 = vadd.f32 %v731, %v766
      %v786 = vadd.f32 %v732, %v768
      %v787 = vadd.f32 %v733, %v771
      %v788 = vadd.f32 %v734, %v773
      %v789 = vadd.f32 %v735, %v776
      %v790 = vadd.f32 %v736, %v778
      %v791 = vadd.f32 %v737, %v781
      %v792 = vadd.f32 %v738, %v783
      %793 = vst [vmem:[#allocation3] sm:$0xff] %v785
      %794 = vst [vmem:[#allocation3 + $0x8] sm:$0xff] %v786
      %795 = vst [vmem:[#allocation3 + $0x10] sm:$0xff] %v787
      %796 = vst [vmem:[#allocation3 + $0x18] sm:$0xff] %v788
      %797 = vst [vmem:[#allocation3 + $0x20] sm:$0xff] %v789
      %798 = vst [vmem:[#allocation3 + $0x28] sm:$0xff] %v790
      %799 = vst [vmem:[#allocation3 + $0x30] sm:$0xff] %v791
      %800 = vst [vmem:[#allocation3 + $0x38] sm:$0xff] %v792
      %s801 = scalar_lea.vmem [#allocation2], 1
      %v802 = vld [vmem:[%s801] ss:$2 sm:$0xff]
      %s803 = scalar_lea.vmem [#allocation2], 49
      %v804 = vld [vmem:[%s803] ss:$2 sm:$0xff]
      %s805 = scalar_lea.vmem [#allocation2], 97
      %v806 = vld [vmem:[%s805] ss:$2 sm:$0xff]
      %s807 = scalar_lea.vmem [#allocation2], 145
      %v808 = vld [vmem:[%s807] ss:$2 sm:$0xff]
      %s809 = scalar_lea.vmem [#allocation2], 193
      %v810 = vld [vmem:[%s809] ss:$2 sm:$0xff]
      %s811 = scalar_lea.vmem [#allocation2], 241
      %v812 = vld [vmem:[%s811] ss:$2 sm:$0xff]
      %s813 = scalar_lea.vmem [#allocation2], 289
      %v814 = vld [vmem:[%s813] ss:$2 sm:$0xff]
      %s815 = scalar_lea.vmem [#allocation2], 337
      %v816 = vld [vmem:[%s815] ss:$2 sm:$0xff]
      %v817 = vpack.c.bf16 %v804, %v802
      %v818 = vpack.c.bf16 %v808, %v806
      %v819 = vpack.c.bf16 %v812, %v810
      %v820 = vpack.c.bf16 %v816, %v814
      %v821 = vld [vmem:[#allocation3] sm:$0xff]
      %v822 = vld [vmem:[#allocation3 + $0x8] sm:$0xff]
      %v823 = vld [vmem:[#allocation3 + $0x10] sm:$0xff]
      %v824 = vld [vmem:[#allocation3 + $0x18] sm:$0xff]
      %v825 = vld [vmem:[#allocation3 + $0x20] sm:$0xff]
      %v826 = vld [vmem:[#allocation3 + $0x28] sm:$0xff]
      %v827 = vld [vmem:[#allocation3 + $0x30] sm:$0xff]
      %v828 = vld [vmem:[#allocation3 + $0x38] sm:$0xff]
      %s829 = scalar_lea.vmem %s1, 2
      %v830 = vld [vmem:[%s829] sm:$0x3]
      %v832 = vsel %vm648, %v817, 0
      %v835 = vsel %vm648, %v818, 0
      %v838 = vsel %vm648, %v819, 0
      %v841 = vsel %vm648, %v820, 0
      %v844 = vsel %vm752, %v830, 0
      %846 = vmatpush.bf16.msra.mxu0 0
      %847 = vmatpush.bf16.msra.mxu0 0
      %848 = vmatpush.bf16.msra.mxu0 0
      %849 = vmatpush.bf16.msra.mxu0 0
      %850 = vmatpush.bf16.msra.mxu0 0
      %851 = vmatpush.bf16.msra.mxu0 0
      %852 = vmatpush.bf16.msra.mxu0 0
      %853 = vmatpush.bf16.msra.mxu0 %v844
      %854 = vmatmul.bf16.gmra.mxu0 %v832
      %v855 = vpop.f32.mrf.mxu0
      %v856 = vadd.f32 0.0, %v855
      %v857 = vpop.f32.mrf.mxu0
      %v858 = vadd.f32 0.0, %v857
      %859 = vmatmul.bf16.gmra.mxu0 %v835
      %v860 = vpop.f32.mrf.mxu0
      %v861 = vadd.f32 0.0, %v860
      %v862 = vpop.f32.mrf.mxu0
      %v863 = vadd.f32 0.0, %v862
      %864 = vmatmul.bf16.gmra.mxu0 %v838
      %v865 = vpop.f32.mrf.mxu0
      %v866 = vadd.f32 0.0, %v865
      %v867 = vpop.f32.mrf.mxu0
      %v868 = vadd.f32 0.0, %v867
      %869 = vmatmul.bf16.gmra.mxu0 %v841
      %v870 = vpop.f32.mrf.mxu0
      %v871 = vadd.f32 0.0, %v870
      %v872 = vpop.f32.mrf.mxu0
      %v873 = vadd.f32 0.0, %v872
      %874 = vdwg.mxu0
      %v875 = vadd.f32 %v821, %v856
      %v876 = vadd.f32 %v822, %v858
      %v877 = vadd.f32 %v823, %v861
      %v878 = vadd.f32 %v824, %v863
      %v879 = vadd.f32 %v825, %v866
      %v880 = vadd.f32 %v826, %v868
      %v881 = vadd.f32 %v827, %v871
      %v882 = vadd.f32 %v828, %v873
      %883 = vst [vmem:[#allocation3] sm:$0xff] %v875
      %884 = vst [vmem:[#allocation3 + $0x8] sm:$0xff] %v876
      %885 = vst [vmem:[#allocation3 + $0x10] sm:$0xff] %v877
      %886 = vst [vmem:[#allocation3 + $0x18] sm:$0xff] %v878
      %887 = vst [vmem:[#allocation3 + $0x20] sm:$0xff] %v879
      %888 = vst [vmem:[#allocation3 + $0x28] sm:$0xff] %v880
      %889 = vst [vmem:[#allocation3 + $0x30] sm:$0xff] %v881
      %890 = vst [vmem:[#allocation3 + $0x38] sm:$0xff] %v882
      %s891 = scalar_lea.vmem [#allocation2], 2
      %v892 = vld [vmem:[%s891] ss:$2 sm:$0xff]
      %s893 = scalar_lea.vmem [#allocation2], 50
      %v894 = vld [vmem:[%s893] ss:$2 sm:$0xff]
      %s895 = scalar_lea.vmem [#allocation2], 98
      %v896 = vld [vmem:[%s895] ss:$2 sm:$0xff]
      %s897 = scalar_lea.vmem [#allocation2], 146
      %v898 = vld [vmem:[%s897] ss:$2 sm:$0xff]
      %s899 = scalar_lea.vmem [#allocation2], 194
      %v900 = vld [vmem:[%s899] ss:$2 sm:$0xff]
      %s901 = scalar_lea.vmem [#allocation2], 242
      %v902 = vld [vmem:[%s901] ss:$2 sm:$0xff]
      %s903 = scalar_lea.vmem [#allocation2], 290
      %v904 = vld [vmem:[%s903] ss:$2 sm:$0xff]
      %s905 = scalar_lea.vmem [#allocation2], 338
      %v906 = vld [vmem:[%s905] ss:$2 sm:$0xff]
      %v907 = vpack.c.bf16 %v894, %v892
      %v908 = vpack.c.bf16 %v898, %v896
      %v909 = vpack.c.bf16 %v902, %v900
      %v910 = vpack.c.bf16 %v906, %v904
      %v911 = vld [vmem:[#allocation3] sm:$0xff]
      %v912 = vld [vmem:[#allocation3 + $0x8] sm:$0xff]
      %v913 = vld [vmem:[#allocation3 + $0x10] sm:$0xff]
      %v914 = vld [vmem:[#allocation3 + $0x18] sm:$0xff]
      %v915 = vld [vmem:[#allocation3 + $0x20] sm:$0xff]
      %v916 = vld [vmem:[#allocation3 + $0x28] sm:$0xff]
      %v917 = vld [vmem:[#allocation3 + $0x30] sm:$0xff]
      %v918 = vld [vmem:[#allocation3 + $0x38] sm:$0xff]
      %s919 = scalar_lea.vmem %s1, 4
      %v920 = vld [vmem:[%s919] sm:$0x3]
      %v922 = vsel %vm648, %v907, 0
      %v925 = vsel %vm648, %v908, 0
      %v928 = vsel %vm648, %v909, 0
      %v931 = vsel %vm648, %v910, 0
      %v934 = vsel %vm752, %v920, 0
      %936 = vmatpush.bf16.msra.mxu0 0
      %937 = vmatpush.bf16.msra.mxu0 0
      %938 = vmatpush.bf16.msra.mxu0 0
      %939 = vmatpush.bf16.msra.mxu0 0
      %940 = vmatpush.bf16.msra.mxu0 0
      %941 = vmatpush.bf16.msra.mxu0 0
      %942 = vmatpush.bf16.msra.mxu0 0
      %943 = vmatpush.bf16.msra.mxu0 %v934
      %944 = vmatmul.bf16.gmra.mxu0 %v922
      %v945 = vpop.f32.mrf.mxu0
      %v946 = vadd.f32 0.0, %v945
      %v947 = vpop.f32.mrf.mxu0
      %v948 = vadd.f32 0.0, %v947
      %949 = vmatmul.bf16.gmra.mxu0 %v925
      %v950 = vpop.f32.mrf.mxu0
      %v951 = vadd.f32 0.0, %v950
      %v952 = vpop.f32.mrf.mxu0
      %v953 = vadd.f32 0.0, %v952
      %954 = vmatmul.bf16.gmra.mxu0 %v928
      %v955 = vpop.f32.mrf.mxu0
      %v956 = vadd.f32 0.0, %v955
      %v957 = vpop.f32.mrf.mxu0
      %v958 = vadd.f32 0.0, %v957
      %959 = vmatmul.bf16.gmra.mxu0 %v931
      %v960 = vpop.f32.mrf.mxu0
      %v961 = vadd.f32 0.0, %v960
      %v962 = vpop.f32.mrf.mxu0
      %v963 = vadd.f32 0.0, %v962
      %964 = vdwg.mxu0
      %v965 = vadd.f32 %v911, %v946
      %v966 = vadd.f32 %v912, %v948
      %v967 = vadd.f32 %v913, %v951
      %v968 = vadd.f32 %v914, %v953
      %v969 = vadd.f32 %v915, %v956
      %v970 = vadd.f32 %v916, %v958
      %v971 = vadd.f32 %v917, %v961
      %v972 = vadd.f32 %v918, %v963
      %973 = vst [vmem:[#allocation3] sm:$0xff] %v965
      %974 = vst [vmem:[#allocation3 + $0x8] sm:$0xff] %v966
      %975 = vst [vmem:[#allocation3 + $0x10] sm:$0xff] %v967
      %976 = vst [vmem:[#allocation3 + $0x18] sm:$0xff] %v968
      %977 = vst [vmem:[#allocation3 + $0x20] sm:$0xff] %v969
      %978 = vst [vmem:[#allocation3 + $0x28] sm:$0xff] %v970
      %979 = vst [vmem:[#allocation3 + $0x30] sm:$0xff] %v971
      %980 = vst [vmem:[#allocation3 + $0x38] sm:$0xff] %v972
      %s981 = scalar_lea.vmem [#allocation2], 24
      %v982 = vld [vmem:[%s981] ss:$2 sm:$0xff]
      %s983 = scalar_lea.vmem %s981, 48 [#allocation2]
      %v984 = vld [vmem:[%s983] ss:$2 sm:$0xff]
      %s985 = scalar_lea.vmem %s981, 96 [#allocation2]
      %v986 = vld [vmem:[%s985] ss:$2 sm:$0xff]
      %s987 = scalar_lea.vmem %s981, 144 [#allocation2]
      %v988 = vld [vmem:[%s987] ss:$2 sm:$0xff]
      %s989 = scalar_lea.vmem %s981, 192 [#allocation2]
      %v990 = vld [vmem:[%s989] ss:$2 sm:$0xff]
      %s991 = scalar_lea.vmem %s981, 240 [#allocation2]
      %v992 = vld [vmem:[%s991] ss:$2 sm:$0xff]
      %s993 = scalar_lea.vmem %s981, 288 [#allocation2]
      %v994 = vld [vmem:[%s993] ss:$2 sm:$0xff]
      %s995 = scalar_lea.vmem %s981, 336 [#allocation2]
      %v996 = vld [vmem:[%s995] ss:$2 sm:$0xff]
      %v997 = vpack.c.bf16 %v984, %v982
      %v998 = vpack.c.bf16 %v988, %v986
      %v999 = vpack.c.bf16 %v992, %v990
      %v1000 = vpack.c.bf16 %v996, %v994
      %v1001 = vld [vmem:[#allocation3] sm:$0xff]
      %v1002 = vld [vmem:[#allocation3 + $0x8] sm:$0xff]
      %v1003 = vld [vmem:[#allocation3 + $0x10] sm:$0xff]
      %v1004 = vld [vmem:[#allocation3 + $0x18] sm:$0xff]
      %v1005 = vld [vmem:[#allocation3 + $0x20] sm:$0xff]
      %v1006 = vld [vmem:[#allocation3 + $0x28] sm:$0xff]
      %v1007 = vld [vmem:[#allocation3 + $0x30] sm:$0xff]
      %v1008 = vld [vmem:[#allocation3 + $0x38] sm:$0xff]
      %s1009 = scalar_lea.vmem %s1, 6
      %v1010 = vld [vmem:[%s1009] sm:$0x3]
      %v1012 = vsel %vm648, %v997, 0
      %v1015 = vsel %vm648, %v998, 0
      %v1018 = vsel %vm648, %v999, 0
      %v1021 = vsel %vm648, %v1000, 0
      %v1024 = vsel %vm752, %v1010, 0
      %1026 = vmatpush.bf16.msra.mxu0 0
      %1027 = vmatpush.bf16.msra.mxu0 0
      %1028 = vmatpush.bf16.msra.mxu0 0
      %1029 = vmatpush.bf16.msra.mxu0 0
      %1030 = vmatpush.bf16.msra.mxu0 0
      %1031 = vmatpush.bf16.msra.mxu0 0
      %1032 = vmatpush.bf16.msra.mxu0 0
      %1033 = vmatpush.bf16.msra.mxu0 %v1024
      %1034 = vmatmul.bf16.gmra.mxu0 %v1012
      %v1035 = vpop.f32.mrf.mxu0
      %v1036 = vadd.f32 0.0, %v1035
      %v1037 = vpop.f32.mrf.mxu0
      %v1038 = vadd.f32 0.0, %v1037
      %1039 = vmatmul.bf16.gmra.mxu0 %v1015
      %v1040 = vpop.f32.mrf.mxu0
      %v1041 = vadd.f32 0.0, %v1040
      %v1042 = vpop.f32.mrf.mxu0
      %v1043 = vadd.f32 0.0, %v1042
      %1044 = vmatmul.bf16.gmra.mxu0 %v1018
      %v1045 = vpop.f32.mrf.mxu0
      %v1046 = vadd.f32 0.0, %v1045
      %v1047 = vpop.f32.mrf.mxu0
      %v1048 = vadd.f32 0.0, %v1047
      %1049 = vmatmul.bf16.gmra.mxu0 %v1021
      %v1050 = vpop.f32.mrf.mxu0
      %v1051 = vadd.f32 0.0, %v1050
      %v1052 = vpop.f32.mrf.mxu0
      %v1053 = vadd.f32 0.0, %v1052
      %1054 = vdwg.mxu0
      %v1055 = vadd.f32 %v1001, %v1036
      %v1056 = vadd.f32 %v1002, %v1038
      %v1057 = vadd.f32 %v1003, %v1041
      %v1058 = vadd.f32 %v1004, %v1043
      %v1059 = vadd.f32 %v1005, %v1046
      %v1060 = vadd.f32 %v1006, %v1048
      %v1061 = vadd.f32 %v1007, %v1051
      %v1062 = vadd.f32 %v1008, %v1053
      %1063 = vst [vmem:[#allocation3] sm:$0xff] %v1055
      %1064 = vst [vmem:[#allocation3 + $0x8] sm:$0xff] %v1056
      %1065 = vst [vmem:[#allocation3 + $0x10] sm:$0xff] %v1057
      %1066 = vst [vmem:[#allocation3 + $0x18] sm:$0xff] %v1058
      %1067 = vst [vmem:[#allocation3 + $0x20] sm:$0xff] %v1059
      %1068 = vst [vmem:[#allocation3 + $0x28] sm:$0xff] %v1060
      %1069 = vst [vmem:[#allocation3 + $0x30] sm:$0xff] %v1061
      %1070 = vst [vmem:[#allocation3 + $0x38] sm:$0xff] %v1062
      %s1071 = scalar_lea.vmem %s981, 1 [#allocation2]
      %v1072 = vld [vmem:[%s1071] ss:$2 sm:$0xff]
      %s1073 = scalar_lea.vmem %s981, 49 [#allocation2]
      %v1074 = vld [vmem:[%s1073] ss:$2 sm:$0xff]
      %s1075 = scalar_lea.vmem %s981, 97 [#allocation2]
      %v1076 = vld [vmem:[%s1075] ss:$2 sm:$0xff]
      %s1077 = scalar_lea.vmem %s981, 145 [#allocation2]
      %v1078 = vld [vmem:[%s1077] ss:$2 sm:$0xff]
      %s1079 = scalar_lea.vmem %s981, 193 [#allocation2]
      %v1080 = vld [vmem:[%s1079] ss:$2 sm:$0xff]
      %s1081 = scalar_lea.vmem %s981, 241 [#allocation2]
      %v1082 = vld [vmem:[%s1081] ss:$2 sm:$0xff]
      %s1083 = scalar_lea.vmem %s981, 289 [#allocation2]
      %v1084 = vld [vmem:[%s1083] ss:$2 sm:$0xff]
      %s1085 = scalar_lea.vmem %s981, 337 [#allocation2]
      %v1086 = vld [vmem:[%s1085] ss:$2 sm:$0xff]
      %v1087 = vpack.c.bf16 %v1074, %v1072
      %v1088 = vpack.c.bf16 %v1078, %v1076
      %v1089 = vpack.c.bf16 %v1082, %v1080
      %v1090 = vpack.c.bf16 %v1086, %v1084
      %v1091 = vld [vmem:[#allocation3] sm:$0xff]
      %v1092 = vld [vmem:[#allocation3 + $0x8] sm:$0xff]
      %v1093 = vld [vmem:[#allocation3 + $0x10] sm:$0xff]
      %v1094 = vld [vmem:[#allocation3 + $0x18] sm:$0xff]
      %v1095 = vld [vmem:[#allocation3 + $0x20] sm:$0xff]
      %v1096 = vld [vmem:[#allocation3 + $0x28] sm:$0xff]
      %v1097 = vld [vmem:[#allocation3 + $0x30] sm:$0xff]
      %v1098 = vld [vmem:[#allocation3 + $0x38] sm:$0xff]
      %s1099 = scalar_lea.vmem %s1, 8
      %v1100 = vld [vmem:[%s1099] sm:$0x3]
      %v1102 = vsel %vm648, %v1087, 0
      %v1105 = vsel %vm648, %v1088, 0
      %v1108 = vsel %vm648, %v1089, 0
      %v1111 = vsel %vm648, %v1090, 0
      %v1114 = vsel %vm752, %v1100, 0
      %1116 = vmatpush.bf16.msra.mxu0 0
      %1117 = vmatpush.bf16.msra.mxu0 0
      %1118 = vmatpush.bf16.msra.mxu0 0
      %1119 = vmatpush.bf16.msra.mxu0 0
      %1120 = vmatpush.bf16.msra.mxu0 0
      %1121 = vmatpush.bf16.msra.mxu0 0
      %1122 = vmatpush.bf16.msra.mxu0 0
      %1123 = vmatpush.bf16.msra.mxu0 %v1114
      %1124 = vmatmul.bf16.gmra.mxu0 %v1102
      %v1125 = vpop.f32.mrf.mxu0
      %v1126 = vadd.f32 0.0, %v1125
      %v1127 = vpop.f32.mrf.mxu0
      %v1128 = vadd.f32 0.0, %v1127
      %1129 = vmatmul.bf16.gmra.mxu0 %v1105
      %v1130 = vpop.f32.mrf.mxu0
      %v1131 = vadd.f32 0.0, %v1130
      %v1132 = vpop.f32.mrf.mxu0
      %v1133 = vadd.f32 0.0, %v1132
      %1134 = vmatmul.bf16.gmra.mxu0 %v1108
      %v1135 = vpop.f32.mrf.mxu0
      %v1136 = vadd.f32 0.0, %v1135
      %v1137 = vpop.f32.mrf.mxu0
      %v1138 = vadd.f32 0.0, %v1137
      %1139 = vmatmul.bf16.gmra.mxu0 %v1111
      %v1140 = vpop.f32.mrf.mxu0
      %v1141 = vadd.f32 0.0, %v1140
      %v1142 = vpop.f32.mrf.mxu0
      %v1143 = vadd.f32 0.0, %v1142
      %1144 = vdwg.mxu0
      %v1145 = vadd.f32 %v1091, %v1126
      %v1146 = vadd.f32 %v1092, %v1128
      %v1147 = vadd.f32 %v1093, %v1131
      %v1148 = vadd.f32 %v1094, %v1133
      %v1149 = vadd.f32 %v1095, %v1136
      %v1150 = vadd.f32 %v1096, %v1138
      %v1151 = vadd.f32 %v1097, %v1141
      %v1152 = vadd.f32 %v1098, %v1143
      %1153 = vst [vmem:[#allocation3] sm:$0xff] %v1145
      %1154 = vst [vmem:[#allocation3 + $0x8] sm:$0xff] %v1146
      %1155 = vst [vmem:[#allocation3 + $0x10] sm:$0xff] %v1147
      %1156 = vst [vmem:[#allocation3 + $0x18] sm:$0xff] %v1148
      %1157 = vst [vmem:[#allocation3 + $0x20] sm:$0xff] %v1149
      %1158 = vst [vmem:[#allocation3 + $0x28] sm:$0xff] %v1150
      %1159 = vst [vmem:[#allocation3 + $0x30] sm:$0xff] %v1151
      %1160 = vst [vmem:[#allocation3 + $0x38] sm:$0xff] %v1152
      %s1161 = scalar_lea.vmem %s981, 2 [#allocation2]
      %v1162 = vld [vmem:[%s1161] ss:$2 sm:$0xff]
      %s1163 = scalar_lea.vmem %s981, 50 [#allocation2]
      %v1164 = vld [vmem:[%s1163] ss:$2 sm:$0xff]
      %s1165 = scalar_lea.vmem %s981, 98 [#allocation2]
      %v1166 = vld [vmem:[%s1165] ss:$2 sm:$0xff]
      %s1167 = scalar_lea.vmem %s981, 146 [#allocation2]
      %v1168 = vld [vmem:[%s1167] ss:$2 sm:$0xff]
      %s1169 = scalar_lea.vmem %s981, 194 [#allocation2]
      %v1170 = vld [vmem:[%s1169] ss:$2 sm:$0xff]
      %s1171 = scalar_lea.vmem %s981, 242 [#allocation2]
      %v1172 = vld [vmem:[%s1171] ss:$2 sm:$0xff]
      %s1173 = scalar_lea.vmem %s981, 290 [#allocation2]
      %v1174 = vld [vmem:[%s1173] ss:$2 sm:$0xff]
      %s1175 = scalar_lea.vmem %s981, 338 [#allocation2]
      %v1176 = vld [vmem:[%s1175] ss:$2 sm:$0xff]
      %v1177 = vpack.c.bf16 %v1164, %v1162
      %v1178 = vpack.c.bf16 %v1168, %v1166
      %v1179 = vpack.c.bf16 %v1172, %v1170
      %v1180 = vpack.c.bf16 %v1176, %v1174
      %v1181 = vld [vmem:[#allocation3] sm:$0xff]
      %v1182 = vld [vmem:[#allocation3 + $0x8] sm:$0xff]
      %v1183 = vld [vmem:[#allocation3 + $0x10] sm:$0xff]
      %v1184 = vld [vmem:[#allocation3 + $0x18] sm:$0xff]
      %v1185 = vld [vmem:[#allocation3 + $0x20] sm:$0xff]
      %v1186 = vld [vmem:[#allocation3 + $0x28] sm:$0xff]
      %v1187 = vld [vmem:[#allocation3 + $0x30] sm:$0xff]
      %v1188 = vld [vmem:[#allocation3 + $0x38] sm:$0xff]
      %s1189 = scalar_lea.vmem %s1, 10
      %v1190 = vld [vmem:[%s1189] sm:$0x3]
      %v1192 = vsel %vm648, %v1177, 0
      %v1195 = vsel %vm648, %v1178, 0
      %v1198 = vsel %vm648, %v1179, 0
      %v1201 = vsel %vm648, %v1180, 0
      %v1204 = vsel %vm752, %v1190, 0
      %1206 = vmatpush.bf16.msra.mxu0 0
      %1207 = vmatpush.bf16.msra.mxu0 0
      %1208 = vmatpush.bf16.msra.mxu0 0
      %1209 = vmatpush.bf16.msra.mxu0 0
      %1210 = vmatpush.bf16.msra.mxu0 0
      %1211 = vmatpush.bf16.msra.mxu0 0
      %1212 = vmatpush.bf16.msra.mxu0 0
      %1213 = vmatpush.bf16.msra.mxu0 %v1204
      %1214 = vmatmul.bf16.gmra.mxu0 %v1192
      %v1215 = vpop.f32.mrf.mxu0
      %v1216 = vadd.f32 0.0, %v1215
      %v1217 = vpop.f32.mrf.mxu0
      %v1218 = vadd.f32 0.0, %v1217
      %1219 = vmatmul.bf16.gmra.mxu0 %v1195
      %v1220 = vpop.f32.mrf.mxu0
      %v1221 = vadd.f32 0.0, %v1220
      %v1222 = vpop.f32.mrf.mxu0
      %v1223 = vadd.f32 0.0, %v1222
      %1224 = vmatmul.bf16.gmra.mxu0 %v1198
      %v1225 = vpop.f32.mrf.mxu0
      %v1226 = vadd.f32 0.0, %v1225
      %v1227 = vpop.f32.mrf.mxu0
      %v1228 = vadd.f32 0.0, %v1227
      %1229 = vmatmul.bf16.gmra.mxu0 %v1201
      %v1230 = vpop.f32.mrf.mxu0
      %v1231 = vadd.f32 0.0, %v1230
      %v1232 = vpop.f32.mrf.mxu0
      %v1233 = vadd.f32 0.0, %v1232
      %1234 = vdwg.mxu0
      %v1235 = vadd.f32 %v1181, %v1216
      %v1236 = vadd.f32 %v1182, %v1218
      %v1237 = vadd.f32 %v1183, %v1221
      %v1238 = vadd.f32 %v1184, %v1223
      %v1239 = vadd.f32 %v1185, %v1226
      %v1240 = vadd.f32 %v1186, %v1228
      %v1241 = vadd.f32 %v1187, %v1231
      %v1242 = vadd.f32 %v1188, %v1233
      %1243 = vst [vmem:[#allocation3] sm:$0xff] %v1235
      %1244 = vst [vmem:[#allocation3 + $0x8] sm:$0xff] %v1236
      %1245 = vst [vmem:[#allocation3 + $0x10] sm:$0xff] %v1237
      %1246 = vst [vmem:[#allocation3 + $0x18] sm:$0xff] %v1238
      %1247 = vst [vmem:[#allocation3 + $0x20] sm:$0xff] %v1239
      %1248 = vst [vmem:[#allocation3 + $0x28] sm:$0xff] %v1240
      %1249 = vst [vmem:[#allocation3 + $0x30] sm:$0xff] %v1241
      %1250 = vst [vmem:[#allocation3 + $0x38] sm:$0xff] %v1242
      %s1251 = scalar_lea.vmem [#allocation2], 48
      %v1252 = vld [vmem:[%s1251] ss:$2 sm:$0xff]
      %s1253 = scalar_lea.vmem %s1251, 48 [#allocation2]
      %v1254 = vld [vmem:[%s1253] ss:$2 sm:$0xff]
      %s1255 = scalar_lea.vmem %s1251, 96 [#allocation2]
      %v1256 = vld [vmem:[%s1255] ss:$2 sm:$0xff]
      %s1257 = scalar_lea.vmem %s1251, 144 [#allocation2]
      %v1258 = vld [vmem:[%s1257] ss:$2 sm:$0xff]
      %s1259 = scalar_lea.vmem %s1251, 192 [#allocation2]
      %v1260 = vld [vmem:[%s1259] ss:$2 sm:$0xff]
      %s1261 = scalar_lea.vmem %s1251, 240 [#allocation2]
      %v1262 = vld [vmem:[%s1261] ss:$2 sm:$0xff]
      %s1263 = scalar_lea.vmem %s1251, 288 [#allocation2]
      %v1264 = vld [vmem:[%s1263] ss:$2 sm:$0xff]
      %s1265 = scalar_lea.vmem %s1251, 336 [#allocation2]
      %v1266 = vld [vmem:[%s1265] ss:$2 sm:$0xff]
      %v1267 = vpack.c.bf16 %v1254, %v1252
      %v1268 = vpack.c.bf16 %v1258, %v1256
      %v1269 = vpack.c.bf16 %v1262, %v1260
      %v1270 = vpack.c.bf16 %v1266, %v1264
      %v1271 = vld [vmem:[#allocation3] sm:$0xff]
      %v1272 = vld [vmem:[#allocation3 + $0x8] sm:$0xff]
      %v1273 = vld [vmem:[#allocation3 + $0x10] sm:$0xff]
      %v1274 = vld [vmem:[#allocation3 + $0x18] sm:$0xff]
      %v1275 = vld [vmem:[#allocation3 + $0x20] sm:$0xff]
      %v1276 = vld [vmem:[#allocation3 + $0x28] sm:$0xff]
      %v1277 = vld [vmem:[#allocation3 + $0x30] sm:$0xff]
      %v1278 = vld [vmem:[#allocation3 + $0x38] sm:$0xff]
      %s1279 = scalar_lea.vmem %s1, 12
      %v1280 = vld [vmem:[%s1279] sm:$0x3]
      %v1282 = vsel %vm648, %v1267, 0
      %v1285 = vsel %vm648, %v1268, 0
      %v1288 = vsel %vm648, %v1269, 0
      %v1291 = vsel %vm648, %v1270, 0
      %v1294 = vsel %vm752, %v1280, 0
      %1296 = vmatpush.bf16.msra.mxu0 0
      %1297 = vmatpush.bf16.msra.mxu0 0
      %1298 = vmatpush.bf16.msra.mxu0 0
      %1299 = vmatpush.bf16.msra.mxu0 0
      %1300 = vmatpush.bf16.msra.mxu0 0
      %1301 = vmatpush.bf16.msra.mxu0 0
      %1302 = vmatpush.bf16.msra.mxu0 0
      %1303 = vmatpush.bf16.msra.mxu0 %v1294
      %1304 = vmatmul.bf16.gmra.mxu0 %v1282
      %v1305 = vpop.f32.mrf.mxu0
      %v1306 = vadd.f32 0.0, %v1305
      %v1307 = vpop.f32.mrf.mxu0
      %v1308 = vadd.f32 0.0, %v1307
      %1309 = vmatmul.bf16.gmra.mxu0 %v1285
      %v1310 = vpop.f32.mrf.mxu0
      %v1311 = vadd.f32 0.0, %v1310
      %v1312 = vpop.f32.mrf.mxu0
      %v1313 = vadd.f32 0.0, %v1312
      %1314 = vmatmul.bf16.gmra.mxu0 %v1288
      %v1315 = vpop.f32.mrf.mxu0
      %v1316 = vadd.f32 0.0, %v1315
      %v1317 = vpop.f32.mrf.mxu0
      %v1318 = vadd.f32 0.0, %v1317
      %1319 = vmatmul.bf16.gmra.mxu0 %v1291
      %v1320 = vpop.f32.mrf.mxu0
      %v1321 = vadd.f32 0.0, %v1320
      %v1322 = vpop.f32.mrf.mxu0
      %v1323 = vadd.f32 0.0, %v1322
      %1324 = vdwg.mxu0
      %v1325 = vadd.f32 %v1271, %v1306
      %v1326 = vadd.f32 %v1272, %v1308
      %v1327 = vadd.f32 %v1273, %v1311
      %v1328 = vadd.f32 %v1274, %v1313
      %v1329 = vadd.f32 %v1275, %v1316
      %v1330 = vadd.f32 %v1276, %v1318
      %v1331 = vadd.f32 %v1277, %v1321
      %v1332 = vadd.f32 %v1278, %v1323
      %1333 = vst [vmem:[#allocation3] sm:$0xff] %v1325
      %1334 = vst [vmem:[#allocation3 + $0x8] sm:$0xff] %v1326
      %1335 = vst [vmem:[#allocation3 + $0x10] sm:$0xff] %v1327
      %1336 = vst [vmem:[#allocation3 + $0x18] sm:$0xff] %v1328
      %1337 = vst [vmem:[#allocation3 + $0x20] sm:$0xff] %v1329
      %1338 = vst [vmem:[#allocation3 + $0x28] sm:$0xff] %v1330
      %1339 = vst [vmem:[#allocation3 + $0x30] sm:$0xff] %v1331
      %1340 = vst [vmem:[#allocation3 + $0x38] sm:$0xff] %v1332
      %s1341 = scalar_lea.vmem %s1251, 1 [#allocation2]
      %v1342 = vld [vmem:[%s1341] ss:$2 sm:$0xff]
      %s1343 = scalar_lea.vmem %s1251, 49 [#allocation2]
      %v1344 = vld [vmem:[%s1343] ss:$2 sm:$0xff]
      %s1345 = scalar_lea.vmem %s1251, 97 [#allocation2]
      %v1346 = vld [vmem:[%s1345] ss:$2 sm:$0xff]
      %s1347 = scalar_lea.vmem %s1251, 145 [#allocation2]
      %v1348 = vld [vmem:[%s1347] ss:$2 sm:$0xff]
      %s1349 = scalar_lea.vmem %s1251, 193 [#allocation2]
      %v1350 = vld [vmem:[%s1349] ss:$2 sm:$0xff]
      %s1351 = scalar_lea.vmem %s1251, 241 [#allocation2]
      %v1352 = vld [vmem:[%s1351] ss:$2 sm:$0xff]
      %s1353 = scalar_lea.vmem %s1251, 289 [#allocation2]
      %v1354 = vld [vmem:[%s1353] ss:$2 sm:$0xff]
      %s1355 = scalar_lea.vmem %s1251, 337 [#allocation2]
      %v1356 = vld [vmem:[%s1355] ss:$2 sm:$0xff]
      %v1357 = vpack.c.bf16 %v1344, %v1342
      %v1358 = vpack.c.bf16 %v1348, %v1346
      %v1359 = vpack.c.bf16 %v1352, %v1350
      %v1360 = vpack.c.bf16 %v1356, %v1354
      %v1361 = vld [vmem:[#allocation3] sm:$0xff]
      %v1362 = vld [vmem:[#allocation3 + $0x8] sm:$0xff]
      %v1363 = vld [vmem:[#allocation3 + $0x10] sm:$0xff]
      %v1364 = vld [vmem:[#allocation3 + $0x18] sm:$0xff]
      %v1365 = vld [vmem:[#allocation3 + $0x20] sm:$0xff]
      %v1366 = vld [vmem:[#allocation3 + $0x28] sm:$0xff]
      %v1367 = vld [vmem:[#allocation3 + $0x30] sm:$0xff]
      %v1368 = vld [vmem:[#allocation3 + $0x38] sm:$0xff]
      %s1369 = scalar_lea.vmem %s1, 14
      %v1370 = vld [vmem:[%s1369] sm:$0x3]
      %v1372 = vsel %vm648, %v1357, 0
      %v1375 = vsel %vm648, %v1358, 0
      %v1378 = vsel %vm648, %v1359, 0
      %v1381 = vsel %vm648, %v1360, 0
      %v1384 = vsel %vm752, %v1370, 0
      %1386 = vmatpush.bf16.msra.mxu0 0
      %1387 = vmatpush.bf16.msra.mxu0 0
      %1388 = vmatpush.bf16.msra.mxu0 0
      %1389 = vmatpush.bf16.msra.mxu0 0
      %1390 = vmatpush.bf16.msra.mxu0 0
      %1391 = vmatpush.bf16.msra.mxu0 0
      %1392 = vmatpush.bf16.msra.mxu0 0
      %1393 = vmatpush.bf16.msra.mxu0 %v1384
      %1394 = vmatmul.bf16.gmra.mxu0 %v1372
      %v1395 = vpop.f32.mrf.mxu0
      %v1396 = vadd.f32 0.0, %v1395
      %v1397 = vpop.f32.mrf.mxu0
      %v1398 = vadd.f32 0.0, %v1397
      %1399 = vmatmul.bf16.gmra.mxu0 %v1375
      %v1400 = vpop.f32.mrf.mxu0
      %v1401 = vadd.f32 0.0, %v1400
      %v1402 = vpop.f32.mrf.mxu0
      %v1403 = vadd.f32 0.0, %v1402
      %1404 = vmatmul.bf16.gmra.mxu0 %v1378
      %v1405 = vpop.f32.mrf.mxu0
      %v1406 = vadd.f32 0.0, %v1405
      %v1407 = vpop.f32.mrf.mxu0
      %v1408 = vadd.f32 0.0, %v1407
      %1409 = vmatmul.bf16.gmra.mxu0 %v1381
      %v1410 = vpop.f32.mrf.mxu0
      %v1411 = vadd.f32 0.0, %v1410
      %v1412 = vpop.f32.mrf.mxu0
      %v1413 = vadd.f32 0.0, %v1412
      %1414 = vdwg.mxu0
      %v1415 = vadd.f32 %v1361, %v1396
      %v1416 = vadd.f32 %v1362, %v1398
      %v1417 = vadd.f32 %v1363, %v1401
      %v1418 = vadd.f32 %v1364, %v1403
      %v1419 = vadd.f32 %v1365, %v1406
      %v1420 = vadd.f32 %v1366, %v1408
      %v1421 = vadd.f32 %v1367, %v1411
      %v1422 = vadd.f32 %v1368, %v1413
      %1423 = vst [vmem:[#allocation3] sm:$0xff] %v1415
      %1424 = vst [vmem:[#allocation3 + $0x8] sm:$0xff] %v1416
      %1425 = vst [vmem:[#allocation3 + $0x10] sm:$0xff] %v1417
      %1426 = vst [vmem:[#allocation3 + $0x18] sm:$0xff] %v1418
      %1427 = vst [vmem:[#allocation3 + $0x20] sm:$0xff] %v1419
      %1428 = vst [vmem:[#allocation3 + $0x28] sm:$0xff] %v1420
      %1429 = vst [vmem:[#allocation3 + $0x30] sm:$0xff] %v1421
      %1430 = vst [vmem:[#allocation3 + $0x38] sm:$0xff] %v1422
      %s1431 = scalar_lea.vmem %s1251, 2 [#allocation2]
      %v1432 = vld [vmem:[%s1431] ss:$2 sm:$0xff]
      %s1433 = scalar_lea.vmem %s1251, 50 [#allocation2]
      %v1434 = vld [vmem:[%s1433] ss:$2 sm:$0xff]
      %s1435 = scalar_lea.vmem %s1251, 98 [#allocation2]
      %v1436 = vld [vmem:[%s1435] ss:$2 sm:$0xff]
      %s1437 = scalar_lea.vmem %s1251, 146 [#allocation2]
      %v1438 = vld [vmem:[%s1437] ss:$2 sm:$0xff]
      %s1439 = scalar_lea.vmem %s1251, 194 [#allocation2]
      %v1440 = vld [vmem:[%s1439] ss:$2 sm:$0xff]
      %s1441 = scalar_lea.vmem %s1251, 242 [#allocation2]
      %v1442 = vld [vmem:[%s1441] ss:$2 sm:$0xff]
      %s1443 = scalar_lea.vmem %s1251, 290 [#allocation2]
      %v1444 = vld [vmem:[%s1443] ss:$2 sm:$0xff]
      %s1445 = scalar_lea.vmem %s1251, 338 [#allocation2]
      %v1446 = vld [vmem:[%s1445] ss:$2 sm:$0xff]
      %v1447 = vpack.c.bf16 %v1434, %v1432
      %v1448 = vpack.c.bf16 %v1438, %v1436
      %v1449 = vpack.c.bf16 %v1442, %v1440
      %v1450 = vpack.c.bf16 %v1446, %v1444
      %v1451 = vld [vmem:[#allocation3] sm:$0xff]
      %v1452 = vld [vmem:[#allocation3 + $0x8] sm:$0xff]
      %v1453 = vld [vmem:[#allocation3 + $0x10] sm:$0xff]
      %v1454 = vld [vmem:[#allocation3 + $0x18] sm:$0xff]
      %v1455 = vld [vmem:[#allocation3 + $0x20] sm:$0xff]
      %v1456 = vld [vmem:[#allocation3 + $0x28] sm:$0xff]
      %v1457 = vld [vmem:[#allocation3 + $0x30] sm:$0xff]
      %v1458 = vld [vmem:[#allocation3 + $0x38] sm:$0xff]
      %s1459 = scalar_lea.vmem %s1, 16
      %v1460 = vld [vmem:[%s1459] sm:$0x3]
      %v1462 = vsel %vm648, %v1447, 0
      %v1465 = vsel %vm648, %v1448, 0
      %v1468 = vsel %vm648, %v1449, 0
      %v1471 = vsel %vm648, %v1450, 0
      %v1474 = vsel %vm752, %v1460, 0
      %1476 = vmatpush.bf16.msra.mxu0 0
      %1477 = vmatpush.bf16.msra.mxu0 0
      %1478 = vmatpush.bf16.msra.mxu0 0
      %1479 = vmatpush.bf16.msra.mxu0 0
      %1480 = vmatpush.bf16.msra.mxu0 0
      %1481 = vmatpush.bf16.msra.mxu0 0
      %1482 = vmatpush.bf16.msra.mxu0 0
      %1483 = vmatpush.bf16.msra.mxu0 %v1474
      %1484 = vmatmul.bf16.gmra.mxu0 %v1462
      %v1485 = vpop.f32.mrf.mxu0
      %v1486 = vadd.f32 0.0, %v1485
      %v1487 = vpop.f32.mrf.mxu0
      %v1488 = vadd.f32 0.0, %v1487
      %1489 = vmatmul.bf16.gmra.mxu0 %v1465
      %v1490 = vpop.f32.mrf.mxu0
      %v1491 = vadd.f32 0.0, %v1490
      %v1492 = vpop.f32.mrf.mxu0
      %v1493 = vadd.f32 0.0, %v1492
      %1494 = vmatmul.bf16.gmra.mxu0 %v1468
      %v1495 = vpop.f32.mrf.mxu0
      %v1496 = vadd.f32 0.0, %v1495
      %v1497 = vpop.f32.mrf.mxu0
      %v1498 = vadd.f32 0.0, %v1497
      %1499 = vmatmul.bf16.gmra.mxu0 %v1471
      %v1500 = vpop.f32.mrf.mxu0
      %v1501 = vadd.f32 0.0, %v1500
      %v1502 = vpop.f32.mrf.mxu0
      %v1503 = vadd.f32 0.0, %v1502
      %1504 = vdwg.mxu0
      %v1505 = vadd.f32 %v1451, %v1486
      %v1506 = vadd.f32 %v1452, %v1488
      %v1507 = vadd.f32 %v1453, %v1491
      %v1508 = vadd.f32 %v1454, %v1493
      %v1509 = vadd.f32 %v1455, %v1496
      %v1510 = vadd.f32 %v1456, %v1498
      %v1511 = vadd.f32 %v1457, %v1501
      %v1512 = vadd.f32 %v1458, %v1503
      %1513 = vst [vmem:[#allocation3] sm:$0xff] %v1505
      %1514 = vst [vmem:[#allocation3 + $0x8] sm:$0xff] %v1506
      %1515 = vst [vmem:[#allocation3 + $0x10] sm:$0xff] %v1507
      %1516 = vst [vmem:[#allocation3 + $0x18] sm:$0xff] %v1508
      %1517 = vst [vmem:[#allocation3 + $0x20] sm:$0xff] %v1509
      %1518 = vst [vmem:[#allocation3 + $0x28] sm:$0xff] %v1510
      %1519 = vst [vmem:[#allocation3 + $0x30] sm:$0xff] %v1511
      %1520 = vst [vmem:[#allocation3 + $0x38] sm:$0xff] %v1512
      %v1521 = vld [vmem:[#allocation3] sm:$0xff]
      %v1522 = vld [vmem:[#allocation3 + $0x8] sm:$0xff]
      %v1523 = vld [vmem:[#allocation3 + $0x10] sm:$0xff]
      %v1524 = vld [vmem:[#allocation3 + $0x18] sm:$0xff]
      %v1525 = vld [vmem:[#allocation3 + $0x20] sm:$0xff]
      %v1526 = vld [vmem:[#allocation3 + $0x28] sm:$0xff]
      %v1527 = vld [vmem:[#allocation3 + $0x30] sm:$0xff]
      %v1528 = vld [vmem:[#allocation3 + $0x38] sm:$0xff]
      %v1529 = vadd.f32 %v1521, %v1522
      %v1530 = vadd.f32 %v1529, %v1523
      %v1531 = vadd.f32 %v1530, %v1524
      %v1532 = vadd.f32 %v1531, %v1525
      %v1533 = vadd.f32 %v1532, %v1526
      %v1534 = vadd.f32 %v1533, %v1527
      %v1535 = vadd.f32 %v1534, %v1528
      %v1536 = vrot.slane %v1535, 4
      %v1537 = vadd.f32 %v1535, %v1536
      %v1538 = vrot.slane %v1537, 2
      %v1539 = vadd.f32 %v1537, %v1538
      %v1540 = vrot.slane %v1539, 1
      %v1541 = vadd.f32 %v1539, %v1540
      %1542 = vst [vmem:[%s331] sm:$0x1] %v1541
      %v1543 = vmul.f32 %v1521, %v1521
      %v1544 = vmul.f32 %v1522, %v1522
      %v1545 = vmul.f32 %v1523, %v1523
      %v1546 = vmul.f32 %v1524, %v1524
      %v1547 = vmul.f32 %v1525, %v1525
      %v1548 = vmul.f32 %v1526, %v1526
      %v1549 = vmul.f32 %v1527, %v1527
      %v1550 = vmul.f32 %v1528, %v1528
      %v1551 = vadd.f32 %v1543, %v1544
      %v1552 = vadd.f32 %v1551, %v1545
      %v1553 = vadd.f32 %v1552, %v1546
      %v1554 = vadd.f32 %v1553, %v1547
      %v1555 = vadd.f32 %v1554, %v1548
      %v1556 = vadd.f32 %v1555, %v1549
      %v1557 = vadd.f32 %v1556, %v1550
      %v1558 = vrot.slane %v1557, 4
      %v1559 = vadd.f32 %v1557, %v1558
      %v1560 = vrot.slane %v1559, 2
      %v1561 = vadd.f32 %v1559, %v1560
      %v1562 = vrot.slane %v1561, 1
      %v1563 = vadd.f32 %v1561, %v1562
      %1564 = vst [vmem:[%s334] sm:$0x1] %v1563
      %1565 = vst [vmem:[%s323] sm:$0xff] 0.0
      %1566 = vst [vmem:[%s323 + $0x8] sm:$0x3] 0.0
      %1567 = vst [vmem:[%s323 + $0x10] sm:$0xff] 0.0
      %1568 = vst [vmem:[%s323 + $0x18] sm:$0x3] 0.0
      %1569 = vst [vmem:[%s323 + $0x20] sm:$0xff] 0.0
      %1570 = vst [vmem:[%s323 + $0x28] sm:$0x3] 0.0
      %1571 = vst [vmem:[%s323 + $0x30] sm:$0xff] 0.0
      %1572 = vst [vmem:[%s323 + $0x38] sm:$0x3] 0.0
      %1573 = vst [vmem:[%s323 + $0x40] sm:$0xff] 0.0
      %1574 = vst [vmem:[%s323 + $0x48] sm:$0x3] 0.0
      %1575 = vst [vmem:[%s323 + $0x50] sm:$0xff] 0.0
      %1576 = vst [vmem:[%s323 + $0x58] sm:$0x3] 0.0
      %1577 = vst [vmem:[%s323 + $0x60] sm:$0xff] 0.0
      %1578 = vst [vmem:[%s323 + $0x68] sm:$0x3] 0.0
      %1579 = vst [vmem:[%s323 + $0x70] sm:$0xff] 0.0
      %1580 = vst [vmem:[%s323 + $0x78] sm:$0x3] 0.0
      %1581 = vst [vmem:[%s323 + $0x80] sm:$0xff] 0.0
      %1582 = vst [vmem:[%s323 + $0x88] sm:$0x3] 0.0
      %1583 = vst [vmem:[%s323 + $0x90] sm:$0xff] 0.0
      %1584 = vst [vmem:[%s323 + $0x98] sm:$0x3] 0.0
      %s1585 = scalar_lea.vmem %s323, 16
      %1586 = vst [vmem:[%s1585 + $0x1] sm:$0xff] %v1521
      %1587 = vst [vmem:[%s1585 + $0x11] sm:$0xff] %v1522
      %1588 = vst [vmem:[%s1585 + $0x21] sm:$0xff] %v1523
      %1589 = vst [vmem:[%s1585 + $0x31] sm:$0xff] %v1524
      %1590 = vst [vmem:[%s1585 + $0x41] sm:$0xff] %v1525
      %1591 = vst [vmem:[%s1585 + $0x51] sm:$0xff] %v1526
      %1592 = vst [vmem:[%s1585 + $0x61] sm:$0xff] %v1527
      %1593 = vst [vmem:[%s1585 + $0x71] sm:$0xff] %v1528
      %v1594 = vld [vmem:[%s2] sm:$0x3]
      %v1596 = vsel %vm752, %v1594, 0
      %1598 = vmatpush.bf16.msra.mxu0 0
      %1599 = vmatpush.bf16.msra.mxu0 0
      %1600 = vmatpush.bf16.msra.mxu0 0
      %1601 = vmatpush.bf16.msra.mxu0 0
      %1602 = vmatpush.bf16.msra.mxu0 0
      %1603 = vmatpush.bf16.msra.mxu0 0
      %1604 = vmatpush.bf16.msra.mxu0 0
      %1605 = vmatpush.bf16.msra.mxu0 %v1596
      %1606 = vmatmul.bf16.gmra.mxu0 %v1102
      %v1607 = vpop.f32.mrf.mxu0
      %v1608 = vadd.f32 0.0, %v1607
      %v1609 = vpop.f32.mrf.mxu0
      %v1610 = vadd.f32 0.0, %v1609
      %1611 = vmatmul.bf16.gmra.mxu0 %v1105
      %v1612 = vpop.f32.mrf.mxu0
      %v1613 = vadd.f32 0.0, %v1612
      %v1614 = vpop.f32.mrf.mxu0
      %v1615 = vadd.f32 0.0, %v1614
      %1616 = vmatmul.bf16.gmra.mxu0 %v1108
      %v1617 = vpop.f32.mrf.mxu0
      %v1618 = vadd.f32 0.0, %v1617
      %v1619 = vpop.f32.mrf.mxu0
      %v1620 = vadd.f32 0.0, %v1619
      %1621 = vmatmul.bf16.gmra.mxu0 %v1111
      %v1622 = vpop.f32.mrf.mxu0
      %v1623 = vadd.f32 0.0, %v1622
      %v1624 = vpop.f32.mrf.mxu0
      %v1625 = vadd.f32 0.0, %v1624
      %1626 = vdwg.mxu0
      %1627 = vst [vmem:[%s328] sm:$0xff] %v1608
      %1628 = vst [vmem:[%s328 + $0x8] sm:$0xff] %v1610
      %1629 = vst [vmem:[%s328 + $0x10] sm:$0xff] %v1613
      %1630 = vst [vmem:[%s328 + $0x18] sm:$0xff] %v1615
      %1631 = vst [vmem:[%s328 + $0x20] sm:$0xff] %v1618
      %1632 = vst [vmem:[%s328 + $0x28] sm:$0xff] %v1620
      %1633 = vst [vmem:[%s328 + $0x30] sm:$0xff] %v1623
      %1634 = vst [vmem:[%s328 + $0x38] sm:$0xff] %v1625
      %p1635 = scmp.lt.s32.totalorder %s20, 1
      %s1636 = scalar_select %p1635, %s20, 1
      %s1637 = smul.addr %s1636, 20
      %s1638 = smul.addr %s1637, 8
      %s1639 = scalar_lea.vmem %s5, %s1638
      %p1640 = scmp.lt.s32.totalorder %s20, 1
      %s1641 = scalar_select %p1640, %s20, 1
      %s1642 = smul.addr %s1641, 8
      %s1643 = smul.addr %s1642, 8
      %s1644 = scalar_lea.vmem %s6, %s1643
      %p1645 = scmp.lt.s32.totalorder %s20, 1
      %s1646 = scalar_select %p1645, %s20, 1
      %s1647 = scalar_lea.vmem %s7, %s1646
      %p1648 = scmp.lt.s32.totalorder %s20, 1
      %s1649 = scalar_select %p1648, %s20, 1
      %s1650 = scalar_lea.vmem %s8, %s1649
      // Predicated region
      $region41: #{preact_block_forward.2} parent=39 // pred_check
        %p1651 = pneg %p148
      $region42: #{preact_block_forward.2} parent=39 // pred_check_branch
        %1653 = sbr.rel (%p1651) target = $region44
      $region43: #{preact_block_forward.2} parent=39 // pred_region
        _
      $region44: #{preact_block_forward.2} parent=39 // pred_fallthru
        _
      // Predicated region
      $region45: #{preact_block_forward.2} parent=39 // pred_check
        %p1654 = pneg %p174
      $region46: #{preact_block_forward.2} parent=39 // pred_check_branch
        %1656 = sbr.rel (%p1654) target = $region48
      $region47: #{preact_block_forward.2} parent=39 // pred_region
        _
      $region48: #{preact_block_forward.2} parent=39 // pred_fallthru
        _
      // Predicated region
      $region49: #{preact_block_forward.2} parent=39 // pred_check
        %p1657 = pneg %p200
      $region50: #{preact_block_forward.2} parent=39 // pred_check_branch
        %1659 = sbr.rel (%p1657) target = $region52
      $region51: #{preact_block_forward.2} parent=39 // pred_region
        _
      $region52: #{preact_block_forward.2} parent=39 // pred_fallthru
        _
      // Predicated region
      $region53: #{preact_block_forward.2} parent=39 // pred_check
        %p1660 = pneg %p226
      $region54: #{preact_block_forward.2} parent=39 // pred_check_branch
        %1662 = sbr.rel (%p1660) target = $region56
      $region55: #{preact_block_forward.2} parent=39 // pred_region
        _
      $region56: #{preact_block_forward.2} parent=39 // pred_fallthru
        _
    $region40: #{preact_block_forward.2} parent=5 // pred_fallthru
      _
    %p1663 = scmp.le.s32.totalorder 2, %s15
    // Predicated region
    $region57: #{preact_block_forward.2} parent=5 // pred_check
      %p1664 = pneg %p1663
    $region58: #{preact_block_forward.2} parent=5 // pred_check_branch
      %1666 = sbr.rel (%p1664) target = $region60
    $region59: #{preact_block_forward.2} parent=5 // pred_region
      %s1667 = ssub.s32 %s15, 2
      // Predicated region
      $region61: #{preact_block_forward.2} parent=59 // pred_check
        %p1668 = pneg %p154
      $region62: #{preact_block_forward.2} parent=59 // pred_check_branch
        %1670 = sbr.rel (%p1668) target = $region64
      $region63: #{preact_block_forward.2} parent=59 // pred_region
        %p1671 = scmp.lt.s32.totalorder %s21, 1
        %s1672 = scalar_select %p1671, %s21, 1
        %s1673 = smul.addr %s1672, 20
        %s1674 = smul.addr %s1673, 8
        %s1675 = scalar_lea.vmem %s5, %s1674
      $region64: #{preact_block_forward.2} parent=59 // pred_fallthru
        _
      // Predicated region
      $region65: #{preact_block_forward.2} parent=59 // pred_check
        %p1676 = pneg %p180
      $region66: #{preact_block_forward.2} parent=59 // pred_check_branch
        %1678 = sbr.rel (%p1676) target = $region68
      $region67: #{preact_block_forward.2} parent=59 // pred_region
        %p1679 = scmp.lt.s32.totalorder %s21, 1
        %s1680 = scalar_select %p1679, %s21, 1
        %s1681 = smul.addr %s1680, 8
        %s1682 = smul.addr %s1681, 8
        %s1683 = scalar_lea.vmem %s6, %s1682
      $region68: #{preact_block_forward.2} parent=59 // pred_fallthru
        _
      // Predicated region
      $region69: #{preact_block_forward.2} parent=59 // pred_check
        %p1684 = pneg %p206
      $region70: #{preact_block_forward.2} parent=59 // pred_check_branch
        %1686 = sbr.rel (%p1684) target = $region72
      $region71: #{preact_block_forward.2} parent=59 // pred_region
        %p1687 = scmp.lt.s32.totalorder %s21, 1
        %s1688 = scalar_select %p1687, %s21, 1
        %s1689 = scalar_lea.vmem %s7, %s1688
      $region72: #{preact_block_forward.2} parent=59 // pred_fallthru
        _
      // Predicated region
      $region73: #{preact_block_forward.2} parent=59 // pred_check
        %p1690 = pneg %p232
      $region74: #{preact_block_forward.2} parent=59 // pred_check_branch
        %1692 = sbr.rel (%p1690) target = $region76
      $region75: #{preact_block_forward.2} parent=59 // pred_region
        %p1693 = scmp.lt.s32.totalorder %s21, 1
        %s1694 = scalar_select %p1693, %s21, 1
        %s1695 = scalar_lea.vmem %s8, %s1694
      $region76: #{preact_block_forward.2} parent=59 // pred_fallthru
        _
    $region60: #{preact_block_forward.2} parent=5 // pred_fallthru
      _
  $region6: #{preact_block_forward.2} parent=0 // loop_footer
    %s19 = sadd.s32 1, %s15
  $region7: #{preact_block_forward.2} parent=0 // loop_footer_branch
    %14 = sbr.rel target = $region3
  $region8: #{preact_block_forward.2} parent=0 // loop_exit
    _

// kernel: preact_block_forward.3
$region0: #{preact_block_forward.3}
  #allocation0 [shape = 'u32[]', space=smem, size = 0x4, offset = 0x4, fixed_abs, tag = 'smem constant byte address 0x4 - core index']
  #allocation1 [shape = 'u32[72,128]{1,0:T(1,128)}', space=vmem, size = 0x9000, scoped, tag = 'internal scratch']
  #allocation2 [shape = 'f32[1,10,10,128]{3,2,1,0:T(8,128)}', space=vmem, size = 0x14000, scoped, tag = 'scratch operand']
  #allocation3 [shape = 'f32[64,128]{1,0:T(8,128)}', space=vmem, size = 0x8000, scoped, tag = 'scratch operand']
  %s0 = inlined_call_operand.vmem [shape: f32[2,10,10,128], index: 0, kind: input, shape index: {}]
  %s1 = inlined_call_operand.vmem [shape: bf16[3,3,128,128], index: 1, kind: input, shape index: {}]
  %s2 = inlined_call_operand.vmem [shape: f32[2,8,8,128], index: 2, kind: input, shape index: {}]
  %s3 = inlined_call_operand.vmem [shape: f32[1,128], index: 3, kind: input, shape index: {}]
  %s4 = inlined_call_operand.vmem [shape: f32[1,128], index: 4, kind: input, shape index: {}]
  %s5 = inlined_call_operand.vmem [shape: f32[2,8,8,128], index: 5, kind: output, shape index: {}]
  %s6 = sld [smem:[#allocation0]]
  $region53: #{preact_block_forward.3} parent=0
    _
  %s8 = ssub.s32 1, %s6
  %s9 = scalar_select 0, %s8, %s6
  loop: start=0, step=1, limit=4
  $region2: #{preact_block_forward.3} parent=0 // loop_pre_header
    _
  $region3: #{preact_block_forward.3} parent=0 // loop_header
    %s11 = sphi 0, %s15
    %p12 = scmp.ge.s32.totalorder %s11, 4
    %s21 = sphi 0, %s23
    %s24 = sphi 0, %s21
    %s25 = sphi 0, %s24
    %s41 = sphi 0, %s25
    %s45 = sphi 0, %s45
    %s47 = sphi 0, %s45
    %s48 = sphi 0, %s47
    %s62 = sphi 0, %s48
    %s68 = sphi 0, %s70
    %s71 = sphi 0, %s68
    %s72 = sphi 0, %s71
    %s88 = sphi 0, %s72
    %s92 = sphi 0, %s92
    %s94 = sphi 0, %s92
    %s95 = sphi 0, %s94
    %s109 = sphi 0, %s95
    %s113 = sphi 0, %s113
    %s115 = sphi 0, %s113
    %s116 = sphi 0, %s115
    %s130 = sphi 0, %s116
    %s136 = sphi 0, %s138
    %s139 = sphi 0, %s136
    %s140 = sphi 0, %s139
    %s156 = sphi 0, %s140
  $region4: #{preact_block_forward.3} parent=0 // loop_header_branch
    %14 = sbr.rel (%p12) target = $region8
  $region5: #{preact_block_forward.3} parent=0 // loop_body
    %s16 = ssub.s32 %s11, 1
    %s17 = ssub.s32 %s11, 2
    %s18 = sadd.s32 %s11, 1
    %s19 = ssub.s32 %s11, %s18
    %p20 = scmp.eq.s32.totalorder %s19, 0
    %s22 = sadd.s32 %s21, 1
    %s23 = scalar_select %p20, %s21, %s22
    %p26 = pneg %p20
    %p27 = scmp.eq.s32.totalorder %s11, 1
    %p28 = por %p26, %p27
    %p29 = scmp.ne.s32.totalorder %s21, %s24
    %p30 = scmp.eq.s32.totalorder %s11, 0
    %p31 = por %p29, %p30
    %p32 = scmp.ne.s32.totalorder %s21, %s24
    %p33 = scmp.eq.s32.totalorder %s16, 1
    %p34 = por %p32, %p33
    %p35 = scmp.ne.s32.totalorder %s24, %s25
    %p36 = scmp.eq.s32.totalorder %s16, 0
    %p37 = por %p35, %p36
    %p38 = scmp.ne.s32.totalorder %s24, %s25
    %p39 = scmp.eq.s32.totalorder %s17, 1
    %p40 = por %p38, %p39
    %p42 = scmp.ne.s32.totalorder %s25, %s41
    %p43 = scmp.eq.s32.totalorder %s17, 0
    %p44 = por %p42, %p43
    %s46 = sadd.s32 %s45, 1
    %p49 = scmp.eq.s32.totalorder %s11, 1
    %p50 = scmp.ne.s32.totalorder %s45, %s47
    %p51 = scmp.eq.s32.totalorder %s11, 0
    %p52 = por %p50, %p51
    %p53 = scmp.ne.s32.totalorder %s45, %s47
    %p54 = scmp.eq.s32.totalorder %s16, 1
    %p55 = por %p53, %p54
    %p56 = scmp.ne.s32.totalorder %s47, %s48
    %p57 = scmp.eq.s32.totalorder %s16, 0
    %p58 = por %p56, %p57
    %p59 = scmp.ne.s32.totalorder %s47, %s48
    %p60 = scmp.eq.s32.totalorder %s17, 1
    %p61 = por %p59, %p60
    %p63 = scmp.ne.s32.totalorder %s48, %s62
    %p64 = scmp.eq.s32.totalorder %s17, 0
    %p65 = por %p63, %p64
    %s66 = ssub.s32 %s11, %s18
    %p67 = scmp.eq.s32.totalorder %s66, 0
    %s69 = sadd.s32 %s68, 1
    %s70 = scalar_select %p67, %s68, %s69
    %p73 = pneg %p67
    %p74 = scmp.eq.s32.totalorder %s11, 1
    %p75 = por %p73, %p74
    %p76 = scmp.ne.s32.totalorder %s68, %s71
    %p77 = scmp.eq.s32.totalorder %s11, 0
    %p78 = por %p76, %p77
    %p79 = scmp.ne.s32.totalorder %s68, %s71
    %p80 = scmp.eq.s32.totalorder %s16, 1
    %p81 = por %p79, %p80
    %p82 = scmp.ne.s32.totalorder %s71, %s72
    %p83 = scmp.eq.s32.totalorder %s16, 0
    %p84 = por %p82, %p83
    %p85 = scmp.ne.s32.totalorder %s71, %s72
    %p86 = scmp.eq.s32.totalorder %s17, 1
    %p87 = por %p85, %p86
    %p89 = scmp.ne.s32.totalorder %s72, %s88
    %p90 = scmp.eq.s32.totalorder %s17, 0
    %p91 = por %p89, %p90
    %s93 = sadd.s32 %s92, 1
    %p96 = scmp.eq.s32.totalorder %s11, 1
    %p97 = scmp.ne.s32.totalorder %s92, %s94
    %p98 = scmp.eq.s32.totalorder %s11, 0
    %p99 = por %p97, %p98
    %p100 = scmp.ne.s32.totalorder %s92, %s94
    %p101 = scmp.eq.s32.totalorder %s16, 1
    %p102 = por %p100, %p101
    %p103 = scmp.ne.s32.totalorder %s94, %s95
    %p104 = scmp.eq.s32.totalorder %s16, 0
    %p105 = por %p103, %p104
    %p106 = scmp.ne.s32.totalorder %s94, %s95
    %p107 = scmp.eq.s32.totalorder %s17, 1
    %p108 = por %p106, %p107
    %p110 = scmp.ne.s32.totalorder %s95, %s109
    %p111 = scmp.eq.s32.totalorder %s17, 0
    %p112 = por %p110, %p111
    %s114 = sadd.s32 %s113, 1
    %p117 = scmp.eq.s32.totalorder %s11, 1
    %p118 = scmp.ne.s32.totalorder %s113, %s115
    %p119 = scmp.eq.s32.totalorder %s11, 0
    %p120 = por %p118, %p119
    %p121 = scmp.ne.s32.totalorder %s113, %s115
    %p122 = scmp.eq.s32.totalorder %s16, 1
    %p123 = por %p121, %p122
    %p124 = scmp.ne.s32.totalorder %s115, %s116
    %p125 = scmp.eq.s32.totalorder %s16, 0
    %p126 = por %p124, %p125
    %p127 = scmp.ne.s32.totalorder %s115, %s116
    %p128 = scmp.eq.s32.totalorder %s17, 1
    %p129 = por %p127, %p128
    %p131 = scmp.ne.s32.totalorder %s116, %s130
    %p132 = scmp.eq.s32.totalorder %s17, 0
    %p133 = por %p131, %p132
    %s134 = ssub.s32 %s11, %s18
    %p135 = scmp.eq.s32.totalorder %s134, 0
    %s137 = sadd.s32 %s136, 1
    %s138 = scalar_select %p135, %s136, %s137
    %p141 = pneg %p135
    %p142 = scmp.eq.s32.totalorder %s11, 1
    %p143 = por %p141, %p142
    %p144 = scmp.ne.s32.totalorder %s136, %s139
    %p145 = scmp.eq.s32.totalorder %s11, 0
    %p146 = por %p144, %p145
    %p147 = scmp.ne.s32.totalorder %s136, %s139
    %p148 = scmp.eq.s32.totalorder %s16, 1
    %p149 = por %p147, %p148
    %p150 = scmp.ne.s32.totalorder %s139, %s140
    %p151 = scmp.eq.s32.totalorder %s16, 0
    %p152 = por %p150, %p151
    %p153 = scmp.ne.s32.totalorder %s139, %s140
    %p154 = scmp.eq.s32.totalorder %s17, 1
    %p155 = por %p153, %p154
    %p157 = scmp.ne.s32.totalorder %s140, %s156
    %p158 = scmp.eq.s32.totalorder %s17, 0
    %p159 = por %p157, %p158
    %p160 = scmp.le.s32.totalorder 1, %s11
    %p161 = scmp.lt.s32.totalorder %s11, 3
    %p162 = pnand %p160, %p161
    %p163 = pneg %p162
    // Predicated region
    $region9: #{preact_block_forward.3} parent=5 // pred_check
      _
    $region10: #{preact_block_forward.3} parent=5 // pred_check_branch
      %165 = sbr.rel (%p162) target = $region12
    $region11: #{preact_block_forward.3} parent=5 // pred_region
      %s166 = ssub.s32 %s11, 1
      // Predicated region
      $region13: #{preact_block_forward.3} parent=11 // pred_check
        %p167 = pneg %p58
      $region14: #{preact_block_forward.3} parent=11 // pred_check_branch
        %169 = sbr.rel (%p167) target = $region16
      $region15: #{preact_block_forward.3} parent=11 // pred_region
        _
      $region16: #{preact_block_forward.3} parent=11 // pred_fallthru
        _
      // Predicated region
      $region17: #{preact_block_forward.3} parent=11 // pred_check
        %p170 = pneg %p105
      $region18: #{preact_block_forward.3} parent=11 // pred_check_branch
        %172 = sbr.rel (%p170) target = $region20
      $region19: #{preact_block_forward.3} parent=11 // pred_region
        _
      $region20: #{preact_block_forward.3} parent=11 // pred_fallthru
        _
      // Predicated region
      $region21: #{preact_block_forward.3} parent=11 // pred_check
        %p173 = pneg %p126
      $region22: #{preact_block_forward.3} parent=11 // pred_check_branch
        %175 = sbr.rel (%p173) target = $region24
      $region23: #{preact_block_forward.3} parent=11 // pred_region
        _
      $region24: #{preact_block_forward.3} parent=11 // pred_fallthru
        _
    $region12: #{preact_block_forward.3} parent=5 // pred_fallthru
      _
    %p176 = scmp.lt.s32.totalorder %s11, 2
    // Predicated region
    $region25: #{preact_block_forward.3} parent=5 // pred_check
      %p177 = pneg %p176
    $region26: #{preact_block_forward.3} parent=5 // pred_check_branch
      %179 = sbr.rel (%p177) target = $region28
    $region27: #{preact_block_forward.3} parent=5 // pred_region
      // Predicated region
      $region29: #{preact_block_forward.3} parent=27 // pred_check
        %p180 = pneg %p31
      $region30: #{preact_block_forward.3} parent=27 // pred_check_branch
        %182 = sbr.rel (%p180) target = $region32
      $region31: #{preact_block_forward.3} parent=27 // pred_region
        %p183 = scmp.lt.s32.totalorder %s11, 1
        %s184 = scalar_select %p183, %s11, 1
        %s185 = smul.addr %s184, 20
        %s186 = smul.addr %s185, 8
        %s187 = scalar_lea.vmem %s0, %s186
      $region32: #{preact_block_forward.3} parent=27 // pred_fallthru
        _
      // Predicated region
      $region33: #{preact_block_forward.3} parent=27 // pred_check
        %p188 = pneg %p78
      $region34: #{preact_block_forward.3} parent=27 // pred_check_branch
        %190 = sbr.rel (%p188) target = $region36
      $region35: #{preact_block_forward.3} parent=27 // pred_region
        %p191 = scmp.lt.s32.totalorder %s11, 1
        %s192 = scalar_select %p191, %s11, 1
        %s193 = smul.addr %s192, 8
        %s194 = smul.addr %s193, 8
        %s195 = scalar_lea.vmem %s2, %s194
      $region36: #{preact_block_forward.3} parent=27 // pred_fallthru
        _
    $region28: #{preact_block_forward.3} parent=5 // pred_fallthru
      _
    %p196 = scmp.le.s32.totalorder 1, %s11
    %p197 = scmp.lt.s32.totalorder %s11, 3
    %p198 = pnand %p196, %p197
    %p199 = pneg %p198
    // Predicated region
    $region37: #{preact_block_forward.3} parent=5 // pred_check
      _
    $region38: #{preact_block_forward.3} parent=5 // pred_check_branch
      %201 = sbr.rel (%p198) target = $region40
    $region39: #{preact_block_forward.3} parent=5 // pred_region
      %s202 = ssub.s32 %s11, 1
      %p203 = scmp.lt.s32.totalorder %s16, 1
      %s204 = scalar_select %p203, %s16, 1
      %s205 = smul.addr %s204, 20
      %s206 = smul.addr %s205, 8
      %s207 = scalar_lea.vmem %s0, %s206
      %p208 = pneg %p37
      %p209 = pneg %p34
      %p210 = pneg %p58
      %p211 = pneg %p55
      %p212 = scmp.lt.s32.totalorder %s16, 1
      %s213 = scalar_select %p212, %s16, 1
      %s214 = smul.addr %s213, 8
      %s215 = smul.addr %s214, 8
      %s216 = scalar_lea.vmem %s2, %s215
      %p217 = pneg %p84
      %p218 = pneg %p81
      %p219 = pneg %p105
      %p220 = pneg %p102
      %p221 = pneg %p126
      %p222 = pneg %p123
      %p223 = pneg %p152
      %p224 = pneg %p149
      %p225 = scmp.lt.s32.totalorder %s16, 1
      %s226 = scalar_select %p225, %s16, 1
      %s227 = smul.addr %s226, 8
      %s228 = smul.addr %s227, 8
      %s229 = scalar_lea.vmem %s5, %s228
      %p230 = scmp.lt.s32.totalorder %s16, 1
      %s231 = scalar_select %p230, %s16, 1
      %s232 = smul.addr %s231, 20
      %s233 = smul.addr %s232, 8
      %s234 = scalar_lea.vmem %s0, %s233
      %p235 = scmp.lt.s32.totalorder %s16, 1
      %s236 = scalar_select %p235, %s16, 1
      %s237 = smul.addr %s236, 8
      %s238 = smul.addr %s237, 8
      %s239 = scalar_lea.vmem %s2, %s238
      %p240 = scmp.lt.s32.totalorder %s16, 1
      %s241 = scalar_select %p240, %s16, 1
      %s242 = smul.addr %s241, 8
      %s243 = smul.addr %s242, 8
      %s244 = scalar_lea.vmem %s5, %s243
      %v245 = vld [vmem:[%s234] sm:$0xff]
      %v246 = vld [vmem:[%s234 + $0x8] sm:$0x3]
      %v247 = vld [vmem:[%s234 + $0x10] sm:$0xff]
      %v248 = vld [vmem:[%s234 + $0x18] sm:$0x3]
      %v249 = vld [vmem:[%s234 + $0x20] sm:$0xff]
      %v250 = vld [vmem:[%s234 + $0x28] sm:$0x3]
      %v251 = vld [vmem:[%s234 + $0x30] sm:$0xff]
      %v252 = vld [vmem:[%s234 + $0x38] sm:$0x3]
      %v253 = vld [vmem:[%s234 + $0x40] sm:$0xff]
      %v254 = vld [vmem:[%s234 + $0x48] sm:$0x3]
      %v255 = vld [vmem:[%s234 + $0x50] sm:$0xff]
      %v256 = vld [vmem:[%s234 + $0x58] sm:$0x3]
      %v257 = vld [vmem:[%s234 + $0x60] sm:$0xff]
      %v258 = vld [vmem:[%s234 + $0x68] sm:$0x3]
      %v259 = vld [vmem:[%s234 + $0x70] sm:$0xff]
      %v260 = vld [vmem:[%s234 + $0x78] sm:$0x3]
      %v261 = vld [vmem:[%s234 + $0x80] sm:$0xff]
      %v262 = vld [vmem:[%s234 + $0x88] sm:$0x3]
      %v263 = vld [vmem:[%s234 + $0x90] sm:$0xff]
      %v264 = vld [vmem:[%s234 + $0x98] sm:$0x3]
      %v265 = vld [vmem:[%s3] sm:$0x1]
      %v266 = vld [vmem:[%s4] sm:$0x1]
      %v268 = vperm.slane %v265, 0
      %v270 = vmul.f32 %v245, %v268
      %v271 = vmul.f32 %v246, %v268
      %v272 = vmul.f32 %v247, %v268
      %v273 = vmul.f32 %v248, %v268
      %v274 = vmul.f32 %v249, %v268
      %v275 = vmul.f32 %v250, %v268
      %v276 = vmul.f32 %v251, %v268
      %v277 = vmul.f32 %v252, %v268
      %v278 = vmul.f32 %v253, %v268
      %v279 = vmul.f32 %v254, %v268
      %v280 = vmul.f32 %v255, %v268
      %v281 = vmul.f32 %v256, %v268
      %v282 = vmul.f32 %v257, %v268
      %v283 = vmul.f32 %v258, %v268
      %v284 = vmul.f32 %v259, %v268
      %v285 = vmul.f32 %v260, %v268
      %v286 = vmul.f32 %v261, %v268
      %v287 = vmul.f32 %v262, %v268
      %v288 = vmul.f32 %v263, %v268
      %v289 = vmul.f32 %v264, %v268
      %v291 = vperm.slane %v266, 0
      %v293 = vadd.f32 %v270, %v291
      %v294 = vadd.f32 %v271, %v291
      %v295 = vadd.f32 %v272, %v291
      %v296 = vadd.f32 %v273, %v291
      %v297 = vadd.f32 %v274, %v291
      %v298 = vadd.f32 %v275, %v291
      %v299 = vadd.f32 %v276, %v291
      %v300 = vadd.f32 %v277, %v291
      %v301 = vadd.f32 %v278, %v291
      %v302 = vadd.f32 %v279, %v291
      %v303 = vadd.f32 %v280, %v291
      %v304 = vadd.f32 %v281, %v291
      %v305 = vadd.f32 %v282, %v291
      %v306 = vadd.f32 %v283, %v291
      %v307 = vadd.f32 %v284, %v291
      %v308 = vadd.f32 %v285, %v291
      %v309 = vadd.f32 %v286, %v291
      %v310 = vadd.f32 %v287, %v291
      %v311 = vadd.f32 %v288, %v291
      %v312 = vadd.f32 %v289, %v291
      %v313 = vmax.f32 %v293, 0.0
      %v314 = vmax.f32 %v294, 0.0
      %v315 = vmax.f32 %v295, 0.0
      %v316 = vmax.f32 %v296, 0.0
      %v317 = vmax.f32 %v297, 0.0
      %v318 = vmax.f32 %v298, 0.0
      %v319 = vmax.f32 %v299, 0.0
      %v320 = vmax.f32 %v300, 0.0
      %v321 = vmax.f32 %v301, 0.0
      %v322 = vmax.f32 %v302, 0.0
      %v323 = vmax.f32 %v303, 0.0
      %v324 = vmax.f32 %v304, 0.0
      %v325 = vmax.f32 %v305, 0.0
      %v326 = vmax.f32 %v306, 0.0
      %v327 = vmax.f32 %v307, 0.0
      %v328 = vmax.f32 %v308, 0.0
      %v329 = vmax.f32 %v309, 0.0
      %v330 = vmax.f32 %v310, 0.0
      %v331 = vmax.f32 %v311, 0.0
      %v332 = vmax.f32 %v312, 0.0
      %v333 = vlaneseq
      %v334 = vshrl.u32 %v333, 7
      %v335 = vadd.s32 %v334, 8
      %vm336 = vcmp.ge.s32.totalorder %v334, 1
      %vm337 = vcmp.ge.s32.totalorder %v335, 1
      %vm338 = vmand 0, %vm336
      %vm339 = vmand 0, %vm337
      %vm340 = vmand 1, %vm336
      %vm341 = vmand 1, %vm337
      %vm342 = vcmp.le.s32.totalorder %v334, 8
      %vm343 = vcmp.le.s32.totalorder %v335, 8
      %vm344 = vmand %vm338, %vm342
      %vm345 = vmand %vm339, %vm343
      %vm346 = vmand %vm340, %vm342
      %vm347 = vmand %vm341, %vm343
      %v348 = vsel %vm344, 1, 0
      %v349 = vsel %vm345, 1, 0
      %v350 = vsel %vm346, 1, 0
      %v351 = vsel %vm347, 1, 0
      %v352 = vcvt.s32.f32 %v348
      %v353 = vcvt.s32.f32 %v349
      %v354 = vcvt.s32.f32 %v350
      %v355 = vcvt.s32.f32 %v351
      %v356 = vmul.f32 %v313, %v352
      %v357 = vmul.f32 %v314, %v353
      %v358 = vmul.f32 %v315, %v354
      %v359 = vmul.f32 %v316, %v355
      %v360 = vmul.f32 %v317, %v354
      %v361 = vmul.f32 %v318, %v355
      %v362 = vmul.f32 %v319, %v354
      %v363 = vmul.f32 %v320, %v355
      %v364 = vmul.f32 %v321, %v354
      %v365 = vmul.f32 %v322, %v355
      %v366 = vmul.f32 %v323, %v354
      %v367 = vmul.f32 %v324, %v355
      %v368 = vmul.f32 %v325, %v354
      %v369 = vmul.f32 %v326, %v355
      %v370 = vmul.f32 %v327, %v354
      %v371 = vmul.f32 %v328, %v355
      %v372 = vmul.f32 %v329, %v354
      %v373 = vmul.f32 %v330, %v355
      %v374 = vmul.f32 %v331, %v352
      %v375 = vmul.f32 %v332, %v353
      %376 = vst [vmem:[#allocation2] sm:$0xff] %v356
      %377 = vst [vmem:[#allocation2 + $0x8] sm:$0x3] %v357
      %378 = vst [vmem:[#allocation2 + $0x10] sm:$0xff] %v358
      %379 = vst [vmem:[#allocation2 + $0x18] sm:$0x3] %v359
      %380 = vst [vmem:[#allocation2 + $0x20] sm:$0xff] %v360
      %381 = vst [vmem:[#allocation2 + $0x28] sm:$0x3] %v361
      %382 = vst [vmem:[#allocation2 + $0x30] sm:$0xff] %v362
      %383 = vst [vmem:[#allocation2 + $0x38] sm:$0x3] %v363
      %384 = vst [vmem:[#allocation2 + $0x40] sm:$0xff] %v364
      %385 = vst [vmem:[#allocation2 + $0x48] sm:$0x3] %v365
      %386 = vst [vmem:[#allocation2 + $0x50] sm:$0xff] %v366
      %387 = vst [vmem:[#allocation2 + $0x58] sm:$0x3] %v367
      %388 = vst [vmem:[#allocation2 + $0x60] sm:$0xff] %v368
      %389 = vst [vmem:[#allocation2 + $0x68] sm:$0x3] %v369
      %390 = vst [vmem:[#allocation2 + $0x70] sm:$0xff] %v370
      %391 = vst [vmem:[#allocation2 + $0x78] sm:$0x3] %v371
      %392 = vst [vmem:[#allocation2 + $0x80] sm:$0xff] %v372
      %393 = vst [vmem:[#allocation2 + $0x88] sm:$0x3] %v373
      %394 = vst [vmem:[#allocation2 + $0x90] sm:$0xff] %v374
      %395 = vst [vmem:[#allocation2 + $0x98] sm:$0x3] %v375
      %396 = vst [vmem:[#allocation3] sm:$0xff] 0.0
      %397 = vst [vmem:[#allocation3 + $0x8] sm:$0xff] 0.0
      %398 = vst [vmem:[#allocation3 + $0x10] sm:$0xff] 0.0
      %399 = vst [vmem:[#allocation3 + $0x18] sm:$0xff] 0.0
      %400 = vst [vmem:[#allocation3 + $0x20] sm:$0xff] 0.0
      %401 = vst [vmem:[#allocation3 + $0x28] sm:$0xff] 0.0
      %402 = vst [vmem:[#allocation3 + $0x30] sm:$0xff] 0.0
      %403 = vst [vmem:[#allocation3 + $0x38] sm:$0xff] 0.0
      %v404 = vld [vmem:[#allocation2] sm:$0xff]
      %v405 = vld [vmem:[#allocation2 + $0x10] sm:$0xff]
      %v406 = vld [vmem:[#allocation2 + $0x20] sm:$0xff]
      %v407 = vld [vmem:[#allocation2 + $0x30] sm:$0xff]
      %v408 = vld [vmem:[#allocation2 + $0x40] sm:$0xff]
      %v409 = vld [vmem:[#allocation2 + $0x50] sm:$0xff]
      %v410 = vld [vmem:[#allocation2 + $0x60] sm:$0xff]
      %v411 = vld [vmem:[#allocation2 + $0x70] sm:$0xff]
      %v412 = vpack.c.bf16 %v405, %v404
      %v413 = vpack.c.bf16 %v407, %v406
      %v414 = vpack.c.bf16 %v409, %v408
      %v415 = vpack.c.bf16 %v411, %v410
      %v416 = vld [vmem:[#allocation3] sm:$0xff]
      %v417 = vld [vmem:[#allocation3 + $0x8] sm:$0xff]
      %v418 = vld [vmem:[#allocation3 + $0x10] sm:$0xff]
      %v419 = vld [vmem:[#allocation3 + $0x18] sm:$0xff]
      %v420 = vld [vmem:[#allocation3 + $0x20] sm:$0xff]
      %v421 = vld [vmem:[#allocation3 + $0x28] sm:$0xff]
      %v422 = vld [vmem:[#allocation3 + $0x30] sm:$0xff]
      %v423 = vld [vmem:[#allocation3 + $0x38] sm:$0xff]
      %v424 = vld [vmem:[%s1] sm:$0xf]
      %v425 = vld [vmem:[%s1 + $0x4] sm:$0xf]
      %v426 = vld [vmem:[%s1 + $0x8] sm:$0xf]
      %v427 = vld [vmem:[%s1 + $0xc] sm:$0xf]
      %v428 = vld [vmem:[%s1 + $0x10] sm:$0xf]
      %v429 = vld [vmem:[%s1 + $0x14] sm:$0xf]
      %v430 = vld [vmem:[%s1 + $0x18] sm:$0xf]
      %v431 = vld [vmem:[%s1 + $0x1c] sm:$0xf]
      %v432 = vld [vmem:[%s1 + $0x20] sm:$0xf]
      %v433 = vld [vmem:[%s1 + $0x24] sm:$0xf]
      %v434 = vld [vmem:[%s1 + $0x28] sm:$0xf]
      %v435 = vld [vmem:[%s1 + $0x2c] sm:$0xf]
      %v436 = vld [vmem:[%s1 + $0x30] sm:$0xf]
      %v437 = vld [vmem:[%s1 + $0x34] sm:$0xf]
      %v438 = vld [vmem:[%s1 + $0x38] sm:$0xf]
      %v439 = vld [vmem:[%s1 + $0x3c] sm:$0xf]
      %v456 = vunpack.c.l.b16 %v424
      %v457 = vunpack.c.l.b16 %v425
      %v458 = vunpack.c.l.b16 %v426
      %v459 = vunpack.c.l.b16 %v427
      %v460 = vunpack.c.l.b16 %v428
      %v461 = vunpack.c.l.b16 %v429
      %v462 = vunpack.c.l.b16 %v430
      %v463 = vunpack.c.l.b16 %v431
      %v464 = vunpack.c.l.b16 %v432
      %v465 = vunpack.c.l.b16 %v433
      %v466 = vunpack.c.l.b16 %v434
      %v467 = vunpack.c.l.b16 %v435
      %v468 = vunpack.c.l.b16 %v436
      %v469 = vunpack.c.l.b16 %v437
      %v470 = vunpack.c.l.b16 %v438
      %v471 = vunpack.c.l.b16 %v439
      %v472 = vpack.c.b16 %v457, %v456
      %v473 = vpack.c.b16 %v459, %v458
      %v474 = vpack.c.b16 %v461, %v460
      %v475 = vpack.c.b16 %v463, %v462
      %v476 = vpack.c.b16 %v465, %v464
      %v477 = vpack.c.b16 %v467, %v466
      %v478 = vpack.c.b16 %v469, %v468
      %v479 = vpack.c.b16 %v471, %v470
      %488 = vmatpush.bf16.msra.mxu0 %v479
      %489 = vmatpush.bf16.msra.mxu0 %v478
      %490 = vmatpush.bf16.msra.mxu0 %v477
      %491 = vmatpush.bf16.msra.mxu0 %v476
      %492 = vmatpush.bf16.msra.mxu0 %v475
      %493 = vmatpush.bf16.msra.mxu0 %v474
      %494 = vmatpush.bf16.msra.mxu0 %v473
      %495 = vmatpush.bf16.msra.mxu0 %v472
      %496 = vmatmul.bf16.gmra.mxu0 %v412
      %v497 = vpop.f32.mrf.mxu0
      %v498 = vadd.f32 0.0, %v497
      %v499 = vpop.f32.mrf.mxu0
      %v500 = vadd.f32 0.0, %v499
      %501 = vmatmul.bf16.gmra.mxu0 %v413
      %v502 = vpop.f32.mrf.mxu0
      %v503 = vadd.f32 0.0, %v502
      %v504 = vpop.f32.mrf.mxu0
      %v505 = vadd.f32 0.0, %v504
      %506 = vmatmul.bf16.gmra.mxu0 %v414
      %v507 = vpop.f32.mrf.mxu0
      %v508 = vadd.f32 0.0, %v507
      %v509 = vpop.f32.mrf.mxu0
      %v510 = vadd.f32 0.0, %v509
      %511 = vmatmul.bf16.gmra.mxu0 %v415
      %v512 = vpop.f32.mrf.mxu0
      %v513 = vadd.f32 0.0, %v512
      %v514 = vpop.f32.mrf.mxu0
      %v515 = vadd.f32 0.0, %v514
      %516 = vdwg.mxu0
      %v517 = vadd.f32 %v416, %v498
      %v518 = vadd.f32 %v417, %v500
      %v519 = vadd.f32 %v418, %v503
      %v520 = vadd.f32 %v419, %v505
      %v521 = vadd.f32 %v420, %v508
      %v522 = vadd.f32 %v421, %v510
      %v523 = vadd.f32 %v422, %v513
      %v524 = vadd.f32 %v423, %v515
      %525 = vst [vmem:[#allocation3] sm:$0xff] %v517
      %526 = vst [vmem:[#allocation3 + $0x8] sm:$0xff] %v518
      %527 = vst [vmem:[#allocation3 + $0x10] sm:$0xff] %v519
      %528 = vst [vmem:[#allocation3 + $0x18] sm:$0xff] %v520
      %529 = vst [vmem:[#allocation3 + $0x20] sm:$0xff] %v521
      %530 = vst [vmem:[#allocation3 + $0x28] sm:$0xff] %v522
      %531 = vst [vmem:[#allocation3 + $0x30] sm:$0xff] %v523
      %532 = vst [vmem:[#allocation3 + $0x38] sm:$0xff] %v524
      %v533 = vld [vmem:[#allocation2 + $0x1] sm:$0xff]
      %v534 = vld [vmem:[#allocation2 + $0x11] sm:$0xff]
      %v535 = vld [vmem:[#allocation2 + $0x21] sm:$0xff]
      %v536 = vld [vmem:[#allocation2 + $0x31] sm:$0xff]
      %v537 = vld [vmem:[#allocation2 + $0x41] sm:$0xff]
      %v538 = vld [vmem:[#allocation2 + $0x51] sm:$0xff]
      %v539 = vld [vmem:[#allocation2 + $0x61] sm:$0xff]
      %v540 = vld [vmem:[#allocation2 + $0x71] sm:$0xff]
      %v541 = vpack.c.bf16 %v534, %v533
      %v542 = vpack.c.bf16 %v536, %v535
      %v543 = vpack.c.bf16 %v538, %v537
      %v544 = vpack.c.bf16 %v540, %v539
      %v545 = vld [vmem:[#allocation3] sm:$0xff]
      %v546 = vld [vmem:[#allocation3 + $0x8] sm:$0xff]
      %v547 = vld [vmem:[#allocation3 + $0x10] sm:$0xff]
      %v548 = vld [vmem:[#allocation3 + $0x18] sm:$0xff]
      %v549 = vld [vmem:[#allocation3 + $0x20] sm:$0xff]
      %v550 = vld [vmem:[#allocation3 + $0x28] sm:$0xff]
      %v551 = vld [vmem:[#allocation3 + $0x30] sm:$0xff]
      %v552 = vld [vmem:[#allocation3 + $0x38] sm:$0xff]
      %s553 = scalar_lea.vmem %s1, 64
      %v554 = vld [vmem:[%s553] sm:$0xf]
      %v555 = vld [vmem:[%s553 + $0x4] sm:$0xf]
      %v556 = vld [vmem:[%s553 + $0x8] sm:$0xf]
      %v557 = vld [vmem:[%s553 + $0xc] sm:$0xf]
      %v558 = vld [vmem:[%s553 + $0x10] sm:$0xf]
      %v559 = vld [vmem:[%s553 + $0x14] sm:$0xf]
      %v560 = vld [vmem:[%s553 + $0x18] sm:$0xf]
      %v561 = vld [vmem:[%s553 + $0x1c] sm:$0xf]
      %v562 = vld [vmem:[%s553 + $0x20] sm:$0xf]
      %v563 = vld [vmem:[%s553 + $0x24] sm:$0xf]
      %v564 = vld [vmem:[%s553 + $0x28] sm:$0xf]
      %v565 = vld [vmem:[%s553 + $0x2c] sm:$0xf]
      %v566 = vld [vmem:[%s553 + $0x30] sm:$0xf]
      %v567 = vld [vmem:[%s553 + $0x34] sm:$0xf]
      %v568 = vld [vmem:[%s553 + $0x38] sm:$0xf]
      %v569 = vld [vmem:[%s553 + $0x3c] sm:$0xf]
      %v586 = vunpack.c.l.b16 %v554
      %v587 = vunpack.c.l.b16 %v555
      %v588 = vunpack.c.l.b16 %v556
      %v589 = vunpack.c.l.b16 %v557
      %v590 = vunpack.c.l.b16 %v558
      %v591 = vunpack.c.l.b16 %v559
      %v592 = vunpack.c.l.b16 %v560
      %v593 = vunpack.c.l.b16 %v561
      %v594 = vunpack.c.l.b16 %v562
      %v595 = vunpack.c.l.b16 %v563
      %v596 = vunpack.c.l.b16 %v564
      %v597 = vunpack.c.l.b16 %v565
      %v598 = vunpack.c.l.b16 %v566
      %v599 = vunpack.c.l.b16 %v567
      %v600 = vunpack.c.l.b16 %v568
      %v601 = vunpack.c.l.b16 %v569
      %v602 = vpack.c.b16 %v587, %v586
      %v603 = vpack.c.b16 %v589, %v588
      %v604 = vpack.c.b16 %v591, %v590
      %v605 = vpack.c.b16 %v593, %v592
      %v606 = vpack.c.b16 %v595, %v594
      %v607 = vpack.c.b16 %v597, %v596
      %v608 = vpack.c.b16 %v599, %v598
      %v609 = vpack.c.b16 %v601, %v600
      %618 = vmatpush.bf16.msra.mxu0 %v609
      %619 = vmatpush.bf16.msra.mxu0 %v608
      %620 = vmatpush.bf16.msra.mxu0 %v607
      %621 = vmatpush.bf16.msra.mxu0 %v606
      %622 = vmatpush.bf16.msra.mxu0 %v605
      %623 = vmatpush.bf16.msra.mxu0 %v604
      %624 = vmatpush.bf16.msra.mxu0 %v603
      %625 = vmatpush.bf16.msra.mxu0 %v602
      %626 = vmatmul.bf16.gmra.mxu0 %v541
      %v627 = vpop.f32.mrf.mxu0
      %v628 = vadd.f32 0.0, %v627
      %v629 = vpop.f32.mrf.mxu0
      %v630 = vadd.f32 0.0, %v629
      %631 = vmatmul.bf16.gmra.mxu0 %v542
      %v632 = vpop.f32.mrf.mxu0
      %v633 = vadd.f32 0.0, %v632
      %v634 = vpop.f32.mrf.mxu0
      %v635 = vadd.f32 0.0, %v634
      %636 = vmatmul.bf16.gmra.mxu0 %v543
      %v637 = vpop.f32.mrf.mxu0
      %v638 = vadd.f32 0.0, %v637
      %v639 = vpop.f32.mrf.mxu0
      %v640 = vadd.f32 0.0, %v639
      %641 = vmatmul.bf16.gmra.mxu0 %v544
      %v642 = vpop.f32.mrf.mxu0
      %v643 = vadd.f32 0.0, %v642
      %v644 = vpop.f32.mrf.mxu0
      %v645 = vadd.f32 0.0, %v644
      %646 = vdwg.mxu0
      %v647 = vadd.f32 %v545, %v628
      %v648 = vadd.f32 %v546, %v630
      %v649 = vadd.f32 %v547, %v633
      %v650 = vadd.f32 %v548, %v635
      %v651 = vadd.f32 %v549, %v638
      %v652 = vadd.f32 %v550, %v640
      %v653 = vadd.f32 %v551, %v643
      %v654 = vadd.f32 %v552, %v645
      %655 = vst [vmem:[#allocation3] sm:$0xff] %v647
      %656 = vst [vmem:[#allocation3 + $0x8] sm:$0xff] %v648
      %657 = vst [vmem:[#allocation3 + $0x10] sm:$0xff] %v649
      %658 = vst [vmem:[#allocation3 + $0x18] sm:$0xff] %v650
      %659 = vst [vmem:[#allocation3 + $0x20] sm:$0xff] %v651
      %660 = vst [vmem:[#allocation3 + $0x28] sm:$0xff] %v652
      %661 = vst [vmem:[#allocation3 + $0x30] sm:$0xff] %v653
      %662 = vst [vmem:[#allocation3 + $0x38] sm:$0xff] %v654
      %v663 = vld [vmem:[#allocation2 + $0x2] sm:$0xff]
      %v664 = vld [vmem:[#allocation2 + $0x12] sm:$0xff]
      %v665 = vld [vmem:[#allocation2 + $0x22] sm:$0xff]
      %v666 = vld [vmem:[#allocation2 + $0x32] sm:$0xff]
      %v667 = vld [vmem:[#allocation2 + $0x42] sm:$0xff]
      %v668 = vld [vmem:[#allocation2 + $0x52] sm:$0xff]
      %v669 = vld [vmem:[#allocation2 + $0x62] sm:$0xff]
      %v670 = vld [vmem:[#allocation2 + $0x72] sm:$0xff]
      %v671 = vpack.c.bf16 %v664, %v663
      %v672 = vpack.c.bf16 %v666, %v665
      %v673 = vpack.c.bf16 %v668, %v667
      %v674 = vpack.c.bf16 %v670, %v669
      %v675 = vld [vmem:[#allocation3] sm:$0xff]
      %v676 = vld [vmem:[#allocation3 + $0x8] sm:$0xff]
      %v677 = vld [vmem:[#allocation3 + $0x10] sm:$0xff]
      %v678 = vld [vmem:[#allocation3 + $0x18] sm:$0xff]
      %v679 = vld [vmem:[#allocation3 + $0x20] sm:$0xff]
      %v680 = vld [vmem:[#allocation3 + $0x28] sm:$0xff]
      %v681 = vld [vmem:[#allocation3 + $0x30] sm:$0xff]
      %v682 = vld [vmem:[#allocation3 + $0x38] sm:$0xff]
      %s683 = scalar_lea.vmem %s1, 128
      %v684 = vld [vmem:[%s683] sm:$0xf]
      %v685 = vld [vmem:[%s683 + $0x4] sm:$0xf]
      %v686 = vld [vmem:[%s683 + $0x8] sm:$0xf]
      %v687 = vld [vmem:[%s683 + $0xc] sm:$0xf]
      %v688 = vld [vmem:[%s683 + $0x10] sm:$0xf]
      %v689 = vld [vmem:[%s683 + $0x14] sm:$0xf]
      %v690 = vld [vmem:[%s683 + $0x18] sm:$0xf]
      %v691 = vld [vmem:[%s683 + $0x1c] sm:$0xf]
      %v692 = vld [vmem:[%s683 + $0x20] sm:$0xf]
      %v693 = vld [vmem:[%s683 + $0x24] sm:$0xf]
      %v694 = vld [vmem:[%s683 + $0x28] sm:$0xf]
      %v695 = vld [vmem:[%s683 + $0x2c] sm:$0xf]
      %v696 = vld [vmem:[%s683 + $0x30] sm:$0xf]
      %v697 = vld [vmem:[%s683 + $0x34] sm:$0xf]
      %v698 = vld [vmem:[%s683 + $0x38] sm:$0xf]
      %v699 = vld [vmem:[%s683 + $0x3c] sm:$0xf]
      %v716 = vunpack.c.l.b16 %v684
      %v717 = vunpack.c.l.b16 %v685
      %v718 = vunpack.c.l.b16 %v686
      %v719 = vunpack.c.l.b16 %v687
      %v720 = vunpack.c.l.b16 %v688
      %v721 = vunpack.c.l.b16 %v689
      %v722 = vunpack.c.l.b16 %v690
      %v723 = vunpack.c.l.b16 %v691
      %v724 = vunpack.c.l.b16 %v692
      %v725 = vunpack.c.l.b16 %v693
      %v726 = vunpack.c.l.b16 %v694
      %v727 = vunpack.c.l.b16 %v695
      %v728 = vunpack.c.l.b16 %v696
      %v729 = vunpack.c.l.b16 %v697
      %v730 = vunpack.c.l.b16 %v698
      %v731 = vunpack.c.l.b16 %v699
      %v732 = vpack.c.b16 %v717, %v716
      %v733 = vpack.c.b16 %v719, %v718
      %v734 = vpack.c.b16 %v721, %v720
      %v735 = vpack.c.b16 %v723, %v722
      %v736 = vpack.c.b16 %v725, %v724
      %v737 = vpack.c.b16 %v727, %v726
      %v738 = vpack.c.b16 %v729, %v728
      %v739 = vpack.c.b16 %v731, %v730
      %748 = vmatpush.bf16.msra.mxu0 %v739
      %749 = vmatpush.bf16.msra.mxu0 %v738
      %750 = vmatpush.bf16.msra.mxu0 %v737
      %751 = vmatpush.bf16.msra.mxu0 %v736
      %752 = vmatpush.bf16.msra.mxu0 %v735
      %753 = vmatpush.bf16.msra.mxu0 %v734
      %754 = vmatpush.bf16.msra.mxu0 %v733
      %755 = vmatpush.bf16.msra.mxu0 %v732
      %756 = vmatmul.bf16.gmra.mxu0 %v671
      %v757 = vpop.f32.mrf.mxu0
      %v758 = vadd.f32 0.0, %v757
      %v759 = vpop.f32.mrf.mxu0
      %v760 = vadd.f32 0.0, %v759
      %761 = vmatmul.bf16.gmra.mxu0 %v672
      %v762 = vpop.f32.mrf.mxu0
      %v763 = vadd.f32 0.0, %v762
      %v764 = vpop.f32.mrf.mxu0
      %v765 = vadd.f32 0.0, %v764
      %766 = vmatmul.bf16.gmra.mxu0 %v673
      %v767 = vpop.f32.mrf.mxu0
      %v768 = vadd.f32 0.0, %v767
      %v769 = vpop.f32.mrf.mxu0
      %v770 = vadd.f32 0.0, %v769
      %771 = vmatmul.bf16.gmra.mxu0 %v674
      %v772 = vpop.f32.mrf.mxu0
      %v773 = vadd.f32 0.0, %v772
      %v774 = vpop.f32.mrf.mxu0
      %v775 = vadd.f32 0.0, %v774
      %776 = vdwg.mxu0
      %v777 = vadd.f32 %v675, %v758
      %v778 = vadd.f32 %v676, %v760
      %v779 = vadd.f32 %v677, %v763
      %v780 = vadd.f32 %v678, %v765
      %v781 = vadd.f32 %v679, %v768
      %v782 = vadd.f32 %v680, %v770
      %v783 = vadd.f32 %v681, %v773
      %v784 = vadd.f32 %v682, %v775
      %785 = vst [vmem:[#allocation3] sm:$0xff] %v777
      %786 = vst [vmem:[#allocation3 + $0x8] sm:$0xff] %v778
      %787 = vst [vmem:[#allocation3 + $0x10] sm:$0xff] %v779
      %788 = vst [vmem:[#allocation3 + $0x18] sm:$0xff] %v780
      %789 = vst [vmem:[#allocation3 + $0x20] sm:$0xff] %v781
      %790 = vst [vmem:[#allocation3 + $0x28] sm:$0xff] %v782
      %791 = vst [vmem:[#allocation3 + $0x30] sm:$0xff] %v783
      %792 = vst [vmem:[#allocation3 + $0x38] sm:$0xff] %v784
      %s793 = scalar_lea.vmem [#allocation2], 16
      %v794 = vld [vmem:[%s793] sm:$0xff]
      %v795 = vld [vmem:[%s793 + $0x10] sm:$0xff]
      %v796 = vld [vmem:[%s793 + $0x20] sm:$0xff]
      %v797 = vld [vmem:[%s793 + $0x30] sm:$0xff]
      %v798 = vld [vmem:[%s793 + $0x40] sm:$0xff]
      %v799 = vld [vmem:[%s793 + $0x50] sm:$0xff]
      %v800 = vld [vmem:[%s793 + $0x60] sm:$0xff]
      %v801 = vld [vmem:[%s793 + $0x70] sm:$0xff]
      %v802 = vpack.c.bf16 %v795, %v794
      %v803 = vpack.c.bf16 %v797, %v796
      %v804 = vpack.c.bf16 %v799, %v798
      %v805 = vpack.c.bf16 %v801, %v800
      %v806 = vld [vmem:[#allocation3] sm:$0xff]
      %v807 = vld [vmem:[#allocation3 + $0x8] sm:$0xff]
      %v808 = vld [vmem:[#allocation3 + $0x10] sm:$0xff]
      %v809 = vld [vmem:[#allocation3 + $0x18] sm:$0xff]
      %v810 = vld [vmem:[#allocation3 + $0x20] sm:$0xff]
      %v811 = vld [vmem:[#allocation3 + $0x28] sm:$0xff]
      %v812 = vld [vmem:[#allocation3 + $0x30] sm:$0xff]
      %v813 = vld [vmem:[#allocation3 + $0x38] sm:$0xff]
      %s814 = scalar_lea.vmem %s1, 192
      %v815 = vld [vmem:[%s814] sm:$0xf]
      %v816 = vld [vmem:[%s814 + $0x4] sm:$0xf]
      %v817 = vld [vmem:[%s814 + $0x8] sm:$0xf]
      %v818 = vld [vmem:[%s814 + $0xc] sm:$0xf]
      %v819 = vld [vmem:[%s814 + $0x10] sm:$0xf]
      %v820 = vld [vmem:[%s814 + $0x14] sm:$0xf]
      %v821 = vld [vmem:[%s814 + $0x18] sm:$0xf]
      %v822 = vld [vmem:[%s814 + $0x1c] sm:$0xf]
      %v823 = vld [vmem:[%s814 + $0x20] sm:$0xf]
      %v824 = vld [vmem:[%s814 + $0x24] sm:$0xf]
      %v825 = vld [vmem:[%s814 + $0x28] sm:$0xf]
      %v826 = vld [vmem:[%s814 + $0x2c] sm:$0xf]
      %v827 = vld [vmem:[%s814 + $0x30] sm:$0xf]
      %v828 = vld [vmem:[%s814 + $0x34] sm:$0xf]
      %v829 = vld [vmem:[%s814 + $0x38] sm:$0xf]
      %v830 = vld [vmem:[%s814 + $0x3c] sm:$0xf]
      %v847 = vunpack.c.l.b16 %v815
      %v848 = vunpack.c.l.b16 %v816
      %v849 = vunpack.c.l.b16 %v817
      %v850 = vunpack.c.l.b16 %v818
      %v851 = vunpack.c.l.b16 %v819
      %v852 = vunpack.c.l.b16 %v820
      %v853 = vunpack.c.l.b16 %v821
      %v854 = vunpack.c.l.b16 %v822
      %v855 = vunpack.c.l.b16 %v823
      %v856 = vunpack.c.l.b16 %v824
      %v857 = vunpack.c.l.b16 %v825
      %v858 = vunpack.c.l.b16 %v826
      %v859 = vunpack.c.l.b16 %v827
      %v860 = vunpack.c.l.b16 %v828
      %v861 = vunpack.c.l.b16 %v829
      %v862 = vunpack.c.l.b16 %v830
      %v863 = vpack.c.b16 %v848, %v847
      %v864 = vpack.c.b16 %v850, %v849
      %v865 = vpack.c.b16 %v852, %v851
      %v866 = vpack.c.b16 %v854, %v853
      %v867 = vpack.c.b16 %v856, %v855
      %v868 = vpack.c.b16 %v858, %v857
      %v869 = vpack.c.b16 %v860, %v859
      %v870 = vpack.c.b16 %v862, %v861
      %879 = vmatpush.bf16.msra.mxu0 %v870
      %880 = vmatpush.bf16.msra.mxu0 %v869
      %881 = vmatpush.bf16.msra.mxu0 %v868
      %882 = vmatpush.bf16.msra.mxu0 %v867
      %883 = vmatpush.bf16.msra.mxu0 %v866
      %884 = vmatpush.bf16.msra.mxu0 %v865
      %885 = vmatpush.bf16.msra.mxu0 %v864
      %886 = vmatpush.bf16.msra.mxu0 %v863
      %887 = vmatmul.bf16.gmra.mxu0 %v802
      %v888 = vpop.f32.mrf.mxu0
      %v889 = vadd.f32 0.0, %v888
      %v890 = vpop.f32.mrf.mxu0
      %v891 = vadd.f32 0.0, %v890
      %892 = vmatmul.bf16.gmra.mxu0 %v803
      %v893 = vpop.f32.mrf.mxu0
      %v894 = vadd.f32 0.0, %v893
      %v895 = vpop.f32.mrf.mxu0
      %v896 = vadd.f32 0.0, %v895
      %897 = vmatmul.bf16.gmra.mxu0 %v804
      %v898 = vpop.f32.mrf.mxu0
      %v899 = vadd.f32 0.0, %v898
      %v900 = vpop.f32.mrf.mxu0
      %v901 = vadd.f32 0.0, %v900
      %902 = vmatmul.bf16.gmra.mxu0 %v805
      %v903 = vpop.f32.mrf.mxu0
      %v904 = vadd.f32 0.0, %v903
      %v905 = vpop.f32.mrf.mxu0
      %v906 = vadd.f32 0.0, %v905
      %907 = vdwg.mxu0
      %v908 = vadd.f32 %v806, %v889
      %v909 = vadd.f32 %v807, %v891
      %v910 = vadd.f32 %v808, %v894
      %v911 = vadd.f32 %v809, %v896
      %v912 = vadd.f32 %v810, %v899
      %v913 = vadd.f32 %v811, %v901
      %v914 = vadd.f32 %v812, %v904
      %v915 = vadd.f32 %v813, %v906
      %916 = vst [vmem:[#allocation3] sm:$0xff] %v908
      %917 = vst [vmem:[#allocation3 + $0x8] sm:$0xff] %v909
      %918 = vst [vmem:[#allocation3 + $0x10] sm:$0xff] %v910
      %919 = vst [vmem:[#allocation3 + $0x18] sm:$0xff] %v911
      %920 = vst [vmem:[#allocation3 + $0x20] sm:$0xff] %v912
      %921 = vst [vmem:[#allocation3 + $0x28] sm:$0xff] %v913
      %922 = vst [vmem:[#allocation3 + $0x30] sm:$0xff] %v914
      %923 = vst [vmem:[#allocation3 + $0x38] sm:$0xff] %v915
      %v924 = vld [vmem:[%s793 + $0x1] sm:$0xff]
      %v925 = vld [vmem:[%s793 + $0x11] sm:$0xff]
      %v926 = vld [vmem:[%s793 + $0x21] sm:$0xff]
      %v927 = vld [vmem:[%s793 + $0x31] sm:$0xff]
      %v928 = vld [vmem:[%s793 + $0x41] sm:$0xff]
      %v929 = vld [vmem:[%s793 + $0x51] sm:$0xff]
      %v930 = vld [vmem:[%s793 + $0x61] sm:$0xff]
      %v931 = vld [vmem:[%s793 + $0x71] sm:$0xff]
      %v932 = vpack.c.bf16 %v925, %v924
      %v933 = vpack.c.bf16 %v927, %v926
      %v934 = vpack.c.bf16 %v929, %v928
      %v935 = vpack.c.bf16 %v931, %v930
      %v936 = vld [vmem:[#allocation3] sm:$0xff]
      %v937 = vld [vmem:[#allocation3 + $0x8] sm:$0xff]
      %v938 = vld [vmem:[#allocation3 + $0x10] sm:$0xff]
      %v939 = vld [vmem:[#allocation3 + $0x18] sm:$0xff]
      %v940 = vld [vmem:[#allocation3 + $0x20] sm:$0xff]
      %v941 = vld [vmem:[#allocation3 + $0x28] sm:$0xff]
      %v942 = vld [vmem:[#allocation3 + $0x30] sm:$0xff]
      %v943 = vld [vmem:[#allocation3 + $0x38] sm:$0xff]
      %s944 = scalar_lea.vmem %s1, 256
      %v945 = vld [vmem:[%s944] sm:$0xf]
      %v946 = vld [vmem:[%s944 + $0x4] sm:$0xf]
      %v947 = vld [vmem:[%s944 + $0x8] sm:$0xf]
      %v948 = vld [vmem:[%s944 + $0xc] sm:$0xf]
      %v949 = vld [vmem:[%s944 + $0x10] sm:$0xf]
      %v950 = vld [vmem:[%s944 + $0x14] sm:$0xf]
      %v951 = vld [vmem:[%s944 + $0x18] sm:$0xf]
      %v952 = vld [vmem:[%s944 + $0x1c] sm:$0xf]
      %v953 = vld [vmem:[%s944 + $0x20] sm:$0xf]
      %v954 = vld [vmem:[%s944 + $0x24] sm:$0xf]
      %v955 = vld [vmem:[%s944 + $0x28] sm:$0xf]
      %v956 = vld [vmem:[%s944 + $0x2c] sm:$0xf]
      %v957 = vld [vmem:[%s944 + $0x30] sm:$0xf]
      %v958 = vld [vmem:[%s944 + $0x34] sm:$0xf]
      %v959 = vld [vmem:[%s944 + $0x38] sm:$0xf]
      %v960 = vld [vmem:[%s944 + $0x3c] sm:$0xf]
      %v977 = vunpack.c.l.b16 %v945
      %v978 = vunpack.c.l.b16 %v946
      %v979 = vunpack.c.l.b16 %v947
      %v980 = vunpack.c.l.b16 %v948
      %v981 = vunpack.c.l.b16 %v949
      %v982 = vunpack.c.l.b16 %v950
      %v983 = vunpack.c.l.b16 %v951
      %v984 = vunpack.c.l.b16 %v952
      %v985 = vunpack.c.l.b16 %v953
      %v986 = vunpack.c.l.b16 %v954
      %v987 = vunpack.c.l.b16 %v955
      %v988 = vunpack.c.l.b16 %v956
      %v989 = vunpack.c.l.b16 %v957
      %v990 = vunpack.c.l.b16 %v958
      %v991 = vunpack.c.l.b16 %v959
      %v992 = vunpack.c.l.b16 %v960
      %v993 = vpack.c.b16 %v978, %v977
      %v994 = vpack.c.b16 %v980, %v979
      %v995 = vpack.c.b16 %v982, %v981
      %v996 = vpack.c.b16 %v984, %v983
      %v997 = vpack.c.b16 %v986, %v985
      %v998 = vpack.c.b16 %v988, %v987
      %v999 = vpack.c.b16 %v990, %v989
      %v1000 = vpack.c.b16 %v992, %v991
      %1009 = vmatpush.bf16.msra.mxu0 %v1000
      %1010 = vmatpush.bf16.msra.mxu0 %v999
      %1011 = vmatpush.bf16.msra.mxu0 %v998
      %1012 = vmatpush.bf16.msra.mxu0 %v997
      %1013 = vmatpush.bf16.msra.mxu0 %v996
      %1014 = vmatpush.bf16.msra.mxu0 %v995
      %1015 = vmatpush.bf16.msra.mxu0 %v994
      %1016 = vmatpush.bf16.msra.mxu0 %v993
      %1017 = vmatmul.bf16.gmra.mxu0 %v932
      %v1018 = vpop.f32.mrf.mxu0
      %v1019 = vadd.f32 0.0, %v1018
      %v1020 = vpop.f32.mrf.mxu0
      %v1021 = vadd.f32 0.0, %v1020
      %1022 = vmatmul.bf16.gmra.mxu0 %v933
      %v1023 = vpop.f32.mrf.mxu0
      %v1024 = vadd.f32 0.0, %v1023
      %v1025 = vpop.f32.mrf.mxu0
      %v1026 = vadd.f32 0.0, %v1025
      %1027 = vmatmul.bf16.gmra.mxu0 %v934
      %v1028 = vpop.f32.mrf.mxu0
      %v1029 = vadd.f32 0.0, %v1028
      %v1030 = vpop.f32.mrf.mxu0
      %v1031 = vadd.f32 0.0, %v1030
      %1032 = vmatmul.bf16.gmra.mxu0 %v935
      %v1033 = vpop.f32.mrf.mxu0
      %v1034 = vadd.f32 0.0, %v1033
      %v1035 = vpop.f32.mrf.mxu0
      %v1036 = vadd.f32 0.0, %v1035
      %1037 = vdwg.mxu0
      %v1038 = vadd.f32 %v936, %v1019
      %v1039 = vadd.f32 %v937, %v1021
      %v1040 = vadd.f32 %v938, %v1024
      %v1041 = vadd.f32 %v939, %v1026
      %v1042 = vadd.f32 %v940, %v1029
      %v1043 = vadd.f32 %v941, %v1031
      %v1044 = vadd.f32 %v942, %v1034
      %v1045 = vadd.f32 %v943, %v1036
      %1046 = vst [vmem:[#allocation3] sm:$0xff] %v1038
      %1047 = vst [vmem:[#allocation3 + $0x8] sm:$0xff] %v1039
      %1048 = vst [vmem:[#allocation3 + $0x10] sm:$0xff] %v1040
      %1049 = vst [vmem:[#allocation3 + $0x18] sm:$0xff] %v1041
      %1050 = vst [vmem:[#allocation3 + $0x20] sm:$0xff] %v1042
      %1051 = vst [vmem:[#allocation3 + $0x28] sm:$0xff] %v1043
      %1052 = vst [vmem:[#allocation3 + $0x30] sm:$0xff] %v1044
      %1053 = vst [vmem:[#allocation3 + $0x38] sm:$0xff] %v1045
      %v1054 = vld [vmem:[%s793 + $0x2] sm:$0xff]
      %v1055 = vld [vmem:[%s793 + $0x12] sm:$0xff]
      %v1056 = vld [vmem:[%s793 + $0x22] sm:$0xff]
      %v1057 = vld [vmem:[%s793 + $0x32] sm:$0xff]
      %v1058 = vld [vmem:[%s793 + $0x42] sm:$0xff]
      %v1059 = vld [vmem:[%s793 + $0x52] sm:$0xff]
      %v1060 = vld [vmem:[%s793 + $0x62] sm:$0xff]
      %v1061 = vld [vmem:[%s793 + $0x72] sm:$0xff]
      %v1062 = vpack.c.bf16 %v1055, %v1054
      %v1063 = vpack.c.bf16 %v1057, %v1056
      %v1064 = vpack.c.bf16 %v1059, %v1058
      %v1065 = vpack.c.bf16 %v1061, %v1060
      %v1066 = vld [vmem:[#allocation3] sm:$0xff]
      %v1067 = vld [vmem:[#allocation3 + $0x8] sm:$0xff]
      %v1068 = vld [vmem:[#allocation3 + $0x10] sm:$0xff]
      %v1069 = vld [vmem:[#allocation3 + $0x18] sm:$0xff]
      %v1070 = vld [vmem:[#allocation3 + $0x20] sm:$0xff]
      %v1071 = vld [vmem:[#allocation3 + $0x28] sm:$0xff]
      %v1072 = vld [vmem:[#allocation3 + $0x30] sm:$0xff]
      %v1073 = vld [vmem:[#allocation3 + $0x38] sm:$0xff]
      %s1074 = scalar_lea.vmem %s1, 320
      %v1075 = vld [vmem:[%s1074] sm:$0xf]
      %v1076 = vld [vmem:[%s1074 + $0x4] sm:$0xf]
      %v1077 = vld [vmem:[%s1074 + $0x8] sm:$0xf]
      %v1078 = vld [vmem:[%s1074 + $0xc] sm:$0xf]
      %v1079 = vld [vmem:[%s1074 + $0x10] sm:$0xf]
      %v1080 = vld [vmem:[%s1074 + $0x14] sm:$0xf]
      %v1081 = vld [vmem:[%s1074 + $0x18] sm:$0xf]
      %v1082 = vld [vmem:[%s1074 + $0x1c] sm:$0xf]
      %v1083 = vld [vmem:[%s1074 + $0x20] sm:$0xf]
      %v1084 = vld [vmem:[%s1074 + $0x24] sm:$0xf]
      %v1085 = vld [vmem:[%s1074 + $0x28] sm:$0xf]
      %v1086 = vld [vmem:[%s1074 + $0x2c] sm:$0xf]
      %v1087 = vld [vmem:[%s1074 + $0x30] sm:$0xf]
      %v1088 = vld [vmem:[%s1074 + $0x34] sm:$0xf]
      %v1089 = vld [vmem:[%s1074 + $0x38] sm:$0xf]
      %v1090 = vld [vmem:[%s1074 + $0x3c] sm:$0xf]
      %v1107 = vunpack.c.l.b16 %v1075
      %v1108 = vunpack.c.l.b16 %v1076
      %v1109 = vunpack.c.l.b16 %v1077
      %v1110 = vunpack.c.l.b16 %v1078
      %v1111 = vunpack.c.l.b16 %v1079
      %v1112 = vunpack.c.l.b16 %v1080
      %v1113 = vunpack.c.l.b16 %v1081
      %v1114 = vunpack.c.l.b16 %v1082
      %v1115 = vunpack.c.l.b16 %v1083
      %v1116 = vunpack.c.l.b16 %v1084
      %v1117 = vunpack.c.l.b16 %v1085
      %v1118 = vunpack.c.l.b16 %v1086
      %v1119 = vunpack.c.l.b16 %v1087
      %v1120 = vunpack.c.l.b16 %v1088
      %v1121 = vunpack.c.l.b16 %v1089
      %v1122 = vunpack.c.l.b16 %v1090
      %v1123 = vpack.c.b16 %v1108, %v1107
      %v1124 = vpack.c.b16 %v1110, %v1109
      %v1125 = vpack.c.b16 %v1112, %v1111
      %v1126 = vpack.c.b16 %v1114, %v1113
      %v1127 = vpack.c.b16 %v1116, %v1115
      %v1128 = vpack.c.b16 %v1118, %v1117
      %v1129 = vpack.c.b16 %v1120, %v1119
      %v1130 = vpack.c.b16 %v1122, %v1121
      %1139 = vmatpush.bf16.msra.mxu0 %v1130
      %1140 = vmatpush.bf16.msra.mxu0 %v1129
      %1141 = vmatpush.bf16.msra.mxu0 %v1128
      %1142 = vmatpush.bf16.msra.mxu0 %v1127
      %1143 = vmatpush.bf16.msra.mxu0 %v1126
      %1144 = vmatpush.bf16.msra.mxu0 %v1125
      %1145 = vmatpush.bf16.msra.mxu0 %v1124
      %1146 = vmatpush.bf16.msra.mxu0 %v1123
      %1147 = vmatmul.bf16.gmra.mxu0 %v1062
      %v1148 = vpop.f32.mrf.mxu0
      %v1149 = vadd.f32 0.0, %v1148
      %v1150 = vpop.f32.mrf.mxu0
      %v1151 = vadd.f32 0.0, %v1150
      %1152 = vmatmul.bf16.gmra.mxu0 %v1063
      %v1153 = vpop.f32.mrf.mxu0
      %v1154 = vadd.f32 0.0, %v1153
      %v1155 = vpop.f32.mrf.mxu0
      %v1156 = vadd.f32 0.0, %v1155
      %1157 = vmatmul.bf16.gmra.mxu0 %v1064
      %v1158 = vpop.f32.mrf.mxu0
      %v1159 = vadd.f32 0.0, %v1158
      %v1160 = vpop.f32.mrf.mxu0
      %v1161 = vadd.f32 0.0, %v1160
      %1162 = vmatmul.bf16.gmra.mxu0 %v1065
      %v1163 = vpop.f32.mrf.mxu0
      %v1164 = vadd.f32 0.0, %v1163
      %v1165 = vpop.f32.mrf.mxu0
      %v1166 = vadd.f32 0.0, %v1165
      %1167 = vdwg.mxu0
      %v1168 = vadd.f32 %v1066, %v1149
      %v1169 = vadd.f32 %v1067, %v1151
      %v1170 = vadd.f32 %v1068, %v1154
      %v1171 = vadd.f32 %v1069, %v1156
      %v1172 = vadd.f32 %v1070, %v1159
      %v1173 = vadd.f32 %v1071, %v1161
      %v1174 = vadd.f32 %v1072, %v1164
      %v1175 = vadd.f32 %v1073, %v1166
      %1176 = vst [vmem:[#allocation3] sm:$0xff] %v1168
      %1177 = vst [vmem:[#allocation3 + $0x8] sm:$0xff] %v1169
      %1178 = vst [vmem:[#allocation3 + $0x10] sm:$0xff] %v1170
      %1179 = vst [vmem:[#allocation3 + $0x18] sm:$0xff] %v1171
      %1180 = vst [vmem:[#allocation3 + $0x20] sm:$0xff] %v1172
      %1181 = vst [vmem:[#allocation3 + $0x28] sm:$0xff] %v1173
      %1182 = vst [vmem:[#allocation3 + $0x30] sm:$0xff] %v1174
      %1183 = vst [vmem:[#allocation3 + $0x38] sm:$0xff] %v1175
      %s1184 = scalar_lea.vmem [#allocation2], 32
      %v1185 = vld [vmem:[%s1184] sm:$0xff]
      %v1186 = vld [vmem:[%s1184 + $0x10] sm:$0xff]
      %v1187 = vld [vmem:[%s1184 + $0x20] sm:$0xff]
      %v1188 = vld [vmem:[%s1184 + $0x30] sm:$0xff]
      %v1189 = vld [vmem:[%s1184 + $0x40] sm:$0xff]
      %v1190 = vld [vmem:[%s1184 + $0x50] sm:$0xff]
      %v1191 = vld [vmem:[%s1184 + $0x60] sm:$0xff]
      %v1192 = vld [vmem:[%s1184 + $0x70] sm:$0xff]
      %v1193 = vpack.c.bf16 %v1186, %v1185
      %v1194 = vpack.c.bf16 %v1188, %v1187
      %v1195 = vpack.c.bf16 %v1190, %v1189
      %v1196 = vpack.c.bf16 %v1192, %v1191
      %v1197 = vld [vmem:[#allocation3] sm:$0xff]
      %v1198 = vld [vmem:[#allocation3 + $0x8] sm:$0xff]
      %v1199 = vld [vmem:[#allocation3 + $0x10] sm:$0xff]
      %v1200 = vld [vmem:[#allocation3 + $0x18] sm:$0xff]
      %v1201 = vld [vmem:[#allocation3 + $0x20] sm:$0xff]
      %v1202 = vld [vmem:[#allocation3 + $0x28] sm:$0xff]
      %v1203 = vld [vmem:[#allocation3 + $0x30] sm:$0xff]
      %v1204 = vld [vmem:[#allocation3 + $0x38] sm:$0xff]
      %s1205 = scalar_lea.vmem %s1, 384
      %v1206 = vld [vmem:[%s1205] sm:$0xf]
      %v1207 = vld [vmem:[%s1205 + $0x4] sm:$0xf]
      %v1208 = vld [vmem:[%s1205 + $0x8] sm:$0xf]
      %v1209 = vld [vmem:[%s1205 + $0xc] sm:$0xf]
      %v1210 = vld [vmem:[%s1205 + $0x10] sm:$0xf]
      %v1211 = vld [vmem:[%s1205 + $0x14] sm:$0xf]
      %v1212 = vld [vmem:[%s1205 + $0x18] sm:$0xf]
      %v1213 = vld [vmem:[%s1205 + $0x1c] sm:$0xf]
      %v1214 = vld [vmem:[%s1205 + $0x20] sm:$0xf]
      %v1215 = vld [vmem:[%s1205 + $0x24] sm:$0xf]
      %v1216 = vld [vmem:[%s1205 + $0x28] sm:$0xf]
      %v1217 = vld [vmem:[%s1205 + $0x2c] sm:$0xf]
      %v1218 = vld [vmem:[%s1205 + $0x30] sm:$0xf]
      %v1219 = vld [vmem:[%s1205 + $0x34] sm:$0xf]
      %v1220 = vld [vmem:[%s1205 + $0x38] sm:$0xf]
      %v1221 = vld [vmem:[%s1205 + $0x3c] sm:$0xf]
      %v1238 = vunpack.c.l.b16 %v1206
      %v1239 = vunpack.c.l.b16 %v1207
      %v1240 = vunpack.c.l.b16 %v1208
      %v1241 = vunpack.c.l.b16 %v1209
      %v1242 = vunpack.c.l.b16 %v1210
      %v1243 = vunpack.c.l.b16 %v1211
      %v1244 = vunpack.c.l.b16 %v1212
      %v1245 = vunpack.c.l.b16 %v1213
      %v1246 = vunpack.c.l.b16 %v1214
      %v1247 = vunpack.c.l.b16 %v1215
      %v1248 = vunpack.c.l.b16 %v1216
      %v1249 = vunpack.c.l.b16 %v1217
      %v1250 = vunpack.c.l.b16 %v1218
      %v1251 = vunpack.c.l.b16 %v1219
      %v1252 = vunpack.c.l.b16 %v1220
      %v1253 = vunpack.c.l.b16 %v1221
      %v1254 = vpack.c.b16 %v1239, %v1238
      %v1255 = vpack.c.b16 %v1241, %v1240
      %v1256 = vpack.c.b16 %v1243, %v1242
      %v1257 = vpack.c.b16 %v1245, %v1244
      %v1258 = vpack.c.b16 %v1247, %v1246
      %v1259 = vpack.c.b16 %v1249, %v1248
      %v1260 = vpack.c.b16 %v1251, %v1250
      %v1261 = vpack.c.b16 %v1253, %v1252
      %1270 = vmatpush.bf16.msra.mxu0 %v1261
      %1271 = vmatpush.bf16.msra.mxu0 %v1260
      %1272 = vmatpush.bf16.msra.mxu0 %v1259
      %1273 = vmatpush.bf16.msra.mxu0 %v1258
      %1274 = vmatpush.bf16.msra.mxu0 %v1257
      %1275 = vmatpush.bf16.msra.mxu0 %v1256
      %1276 = vmatpush.bf16.msra.mxu0 %v1255
      %1277 = vmatpush.bf16.msra.mxu0 %v1254
      %1278 = vmatmul.bf16.gmra.mxu0 %v1193
      %v1279 = vpop.f32.mrf.mxu0
      %v1280 = vadd.f32 0.0, %v1279
      %v1281 = vpop.f32.mrf.mxu0
      %v1282 = vadd.f32 0.0, %v1281
      %1283 = vmatmul.bf16.gmra.mxu0 %v1194
      %v1284 = vpop.f32.mrf.mxu0
      %v1285 = vadd.f32 0.0, %v1284
      %v1286 = vpop.f32.mrf.mxu0
      %v1287 = vadd.f32 0.0, %v1286
      %1288 = vmatmul.bf16.gmra.mxu0 %v1195
      %v1289 = vpop.f32.mrf.mxu0
      %v1290 = vadd.f32 0.0, %v1289
      %v1291 = vpop.f32.mrf.mxu0
      %v1292 = vadd.f32 0.0, %v1291
      %1293 = vmatmul.bf16.gmra.mxu0 %v1196
      %v1294 = vpop.f32.mrf.mxu0
      %v1295 = vadd.f32 0.0, %v1294
      %v1296 = vpop.f32.mrf.mxu0
      %v1297 = vadd.f32 0.0, %v1296
      %1298 = vdwg.mxu0
      %v1299 = vadd.f32 %v1197, %v1280
      %v1300 = vadd.f32 %v1198, %v1282
      %v1301 = vadd.f32 %v1199, %v1285
      %v1302 = vadd.f32 %v1200, %v1287
      %v1303 = vadd.f32 %v1201, %v1290
      %v1304 = vadd.f32 %v1202, %v1292
      %v1305 = vadd.f32 %v1203, %v1295
      %v1306 = vadd.f32 %v1204, %v1297
      %1307 = vst [vmem:[#allocation3] sm:$0xff] %v1299
      %1308 = vst [vmem:[#allocation3 + $0x8] sm:$0xff] %v1300
      %1309 = vst [vmem:[#allocation3 + $0x10] sm:$0xff] %v1301
      %1310 = vst [vmem:[#allocation3 + $0x18] sm:$0xff] %v1302
      %1311 = vst [vmem:[#allocation3 + $0x20] sm:$0xff] %v1303
      %1312 = vst [vmem:[#allocation3 + $0x28] sm:$0xff] %v1304
      %1313 = vst [vmem:[#allocation3 + $0x30] sm:$0xff] %v1305
      %1314 = vst [vmem:[#allocation3 + $0x38] sm:$0xff] %v1306
      %v1315 = vld [vmem:[%s1184 + $0x1] sm:$0xff]
      %v1316 = vld [vmem:[%s1184 + $0x11] sm:$0xff]
      %v1317 = vld [vmem:[%s1184 + $0x21] sm:$0xff]
      %v1318 = vld [vmem:[%s1184 + $0x31] sm:$0xff]
      %v1319 = vld [vmem:[%s1184 + $0x41] sm:$0xff]
      %v1320 = vld [vmem:[%s1184 + $0x51] sm:$0xff]
      %v1321 = vld [vmem:[%s1184 + $0x61] sm:$0xff]
      %v1322 = vld [vmem:[%s1184 + $0x71] sm:$0xff]
      %v1323 = vpack.c.bf16 %v1316, %v1315
      %v1324 = vpack.c.bf16 %v1318, %v1317
      %v1325 = vpack.c.bf16 %v1320, %v1319
      %v1326 = vpack.c.bf16 %v1322, %v1321
      %v1327 = vld [vmem:[#allocation3] sm:$0xff]
      %v1328 = vld [vmem:[#allocation3 + $0x8] sm:$0xff]
      %v1329 = vld [vmem:[#allocation3 + $0x10] sm:$0xff]
      %v1330 = vld [vmem:[#allocation3 + $0x18] sm:$0xff]
      %v1331 = vld [vmem:[#allocation3 + $0x20] sm:$0xff]
      %v1332 = vld [vmem:[#allocation3 + $0x28] sm:$0xff]
      %v1333 = vld [vmem:[#allocation3 + $0x30] sm:$0xff]
      %v1334 = vld [vmem:[#allocation3 + $0x38] sm:$0xff]
      %s1335 = scalar_lea.vmem %s1, 448
      %v1336 = vld [vmem:[%s1335] sm:$0xf]
      %v1337 = vld [vmem:[%s1335 + $0x4] sm:$0xf]
      %v1338 = vld [vmem:[%s1335 + $0x8] sm:$0xf]
      %v1339 = vld [vmem:[%s1335 + $0xc] sm:$0xf]
      %v1340 = vld [vmem:[%s1335 + $0x10] sm:$0xf]
      %v1341 = vld [vmem:[%s1335 + $0x14] sm:$0xf]
      %v1342 = vld [vmem:[%s1335 + $0x18] sm:$0xf]
      %v1343 = vld [vmem:[%s1335 + $0x1c] sm:$0xf]
      %v1344 = vld [vmem:[%s1335 + $0x20] sm:$0xf]
      %v1345 = vld [vmem:[%s1335 + $0x24] sm:$0xf]
      %v1346 = vld [vmem:[%s1335 + $0x28] sm:$0xf]
      %v1347 = vld [vmem:[%s1335 + $0x2c] sm:$0xf]
      %v1348 = vld [vmem:[%s1335 + $0x30] sm:$0xf]
      %v1349 = vld [vmem:[%s1335 + $0x34] sm:$0xf]
      %v1350 = vld [vmem:[%s1335 + $0x38] sm:$0xf]
      %v1351 = vld [vmem:[%s1335 + $0x3c] sm:$0xf]
      %v1368 = vunpack.c.l.b16 %v1336
      %v1369 = vunpack.c.l.b16 %v1337
      %v1370 = vunpack.c.l.b16 %v1338
      %v1371 = vunpack.c.l.b16 %v1339
      %v1372 = vunpack.c.l.b16 %v1340
      %v1373 = vunpack.c.l.b16 %v1341
      %v1374 = vunpack.c.l.b16 %v1342
      %v1375 = vunpack.c.l.b16 %v1343
      %v1376 = vunpack.c.l.b16 %v1344
      %v1377 = vunpack.c.l.b16 %v1345
      %v1378 = vunpack.c.l.b16 %v1346
      %v1379 = vunpack.c.l.b16 %v1347
      %v1380 = vunpack.c.l.b16 %v1348
      %v1381 = vunpack.c.l.b16 %v1349
      %v1382 = vunpack.c.l.b16 %v1350
      %v1383 = vunpack.c.l.b16 %v1351
      %v1384 = vpack.c.b16 %v1369, %v1368
      %v1385 = vpack.c.b16 %v1371, %v1370
      %v1386 = vpack.c.b16 %v1373, %v1372
      %v1387 = vpack.c.b16 %v1375, %v1374
      %v1388 = vpack.c.b16 %v1377, %v1376
      %v1389 = vpack.c.b16 %v1379, %v1378
      %v1390 = vpack.c.b16 %v1381, %v1380
      %v1391 = vpack.c.b16 %v1383, %v1382
      %1400 = vmatpush.bf16.msra.mxu0 %v1391
      %1401 = vmatpush.bf16.msra.mxu0 %v1390
      %1402 = vmatpush.bf16.msra.mxu0 %v1389
      %1403 = vmatpush.bf16.msra.mxu0 %v1388
      %1404 = vmatpush.bf16.msra.mxu0 %v1387
      %1405 = vmatpush.bf16.msra.mxu0 %v1386
      %1406 = vmatpush.bf16.msra.mxu0 %v1385
      %1407 = vmatpush.bf16.msra.mxu0 %v1384
      %1408 = vmatmul.bf16.gmra.mxu0 %v1323
      %v1409 = vpop.f32.mrf.mxu0
      %v1410 = vadd.f32 0.0, %v1409
      %v1411 = vpop.f32.mrf.mxu0
      %v1412 = vadd.f32 0.0, %v1411
      %1413 = vmatmul.bf16.gmra.mxu0 %v1324
      %v1414 = vpop.f32.mrf.mxu0
      %v1415 = vadd.f32 0.0, %v1414
      %v1416 = vpop.f32.mrf.mxu0
      %v1417 = vadd.f32 0.0, %v1416
      %1418 = vmatmul.bf16.gmra.mxu0 %v1325
      %v1419 = vpop.f32.mrf.mxu0
      %v1420 = vadd.f32 0.0, %v1419
      %v1421 = vpop.f32.mrf.mxu0
      %v1422 = vadd.f32 0.0, %v1421
      %1423 = vmatmul.bf16.gmra.mxu0 %v1326
      %v1424 = vpop.f32.mrf.mxu0
      %v1425 = vadd.f32 0.0, %v1424
      %v1426 = vpop.f32.mrf.mxu0
      %v1427 = vadd.f32 0.0, %v1426
      %1428 = vdwg.mxu0
      %v1429 = vadd.f32 %v1327, %v1410
      %v1430 = vadd.f32 %v1328, %v1412
      %v1431 = vadd.f32 %v1329, %v1415
      %v1432 = vadd.f32 %v1330, %v1417
      %v1433 = vadd.f32 %v1331, %v1420
      %v1434 = vadd.f32 %v1332, %v1422
      %v1435 = vadd.f32 %v1333, %v1425
      %v1436 = vadd.f32 %v1334, %v1427
      %1437 = vst [vmem:[#allocation3] sm:$0xff] %v1429
      %1438 = vst [vmem:[#allocation3 + $0x8] sm:$0xff] %v1430
      %1439 = vst [vmem:[#allocation3 + $0x10] sm:$0xff] %v1431
      %1440 = vst [vmem:[#allocation3 + $0x18] sm:$0xff] %v1432
      %1441 = vst [vmem:[#allocation3 + $0x20] sm:$0xff] %v1433
      %1442 = vst [vmem:[#allocation3 + $0x28] sm:$0xff] %v1434
      %1443 = vst [vmem:[#allocation3 + $0x30] sm:$0xff] %v1435
      %1444 = vst [vmem:[#allocation3 + $0x38] sm:$0xff] %v1436
      %v1445 = vld [vmem:[%s1184 + $0x2] sm:$0xff]
      %v1446 = vld [vmem:[%s1184 + $0x12] sm:$0xff]
      %v1447 = vld [vmem:[%s1184 + $0x22] sm:$0xff]
      %v1448 = vld [vmem:[%s1184 + $0x32] sm:$0xff]
      %v1449 = vld [vmem:[%s1184 + $0x42] sm:$0xff]
      %v1450 = vld [vmem:[%s1184 + $0x52] sm:$0xff]
      %v1451 = vld [vmem:[%s1184 + $0x62] sm:$0xff]
      %v1452 = vld [vmem:[%s1184 + $0x72] sm:$0xff]
      %v1453 = vpack.c.bf16 %v1446, %v1445
      %v1454 = vpack.c.bf16 %v1448, %v1447
      %v1455 = vpack.c.bf16 %v1450, %v1449
      %v1456 = vpack.c.bf16 %v1452, %v1451
      %v1457 = vld [vmem:[#allocation3] sm:$0xff]
      %v1458 = vld [vmem:[#allocation3 + $0x8] sm:$0xff]
      %v1459 = vld [vmem:[#allocation3 + $0x10] sm:$0xff]
      %v1460 = vld [vmem:[#allocation3 + $0x18] sm:$0xff]
      %v1461 = vld [vmem:[#allocation3 + $0x20] sm:$0xff]
      %v1462 = vld [vmem:[#allocation3 + $0x28] sm:$0xff]
      %v1463 = vld [vmem:[#allocation3 + $0x30] sm:$0xff]
      %v1464 = vld [vmem:[#allocation3 + $0x38] sm:$0xff]
      %s1465 = scalar_lea.vmem %s1, 512
      %v1466 = vld [vmem:[%s1465] sm:$0xf]
      %v1467 = vld [vmem:[%s1465 + $0x4] sm:$0xf]
      %v1468 = vld [vmem:[%s1465 + $0x8] sm:$0xf]
      %v1469 = vld [vmem:[%s1465 + $0xc] sm:$0xf]
      %v1470 = vld [vmem:[%s1465 + $0x10] sm:$0xf]
      %v1471 = vld [vmem:[%s1465 + $0x14] sm:$0xf]
      %v1472 = vld [vmem:[%s1465 + $0x18] sm:$0xf]
      %v1473 = vld [vmem:[%s1465 + $0x1c] sm:$0xf]
      %v1474 = vld [vmem:[%s1465 + $0x20] sm:$0xf]
      %v1475 = vld [vmem:[%s1465 + $0x24] sm:$0xf]
      %v1476 = vld [vmem:[%s1465 + $0x28] sm:$0xf]
      %v1477 = vld [vmem:[%s1465 + $0x2c] sm:$0xf]
      %v1478 = vld [vmem:[%s1465 + $0x30] sm:$0xf]
      %v1479 = vld [vmem:[%s1465 + $0x34] sm:$0xf]
      %v1480 = vld [vmem:[%s1465 + $0x38] sm:$0xf]
      %v1481 = vld [vmem:[%s1465 + $0x3c] sm:$0xf]
      %v1498 = vunpack.c.l.b16 %v1466
      %v1499 = vunpack.c.l.b16 %v1467
      %v1500 = vunpack.c.l.b16 %v1468
      %v1501 = vunpack.c.l.b16 %v1469
      %v1502 = vunpack.c.l.b16 %v1470
      %v1503 = vunpack.c.l.b16 %v1471
      %v1504 = vunpack.c.l.b16 %v1472
      %v1505 = vunpack.c.l.b16 %v1473
      %v1506 = vunpack.c.l.b16 %v1474
      %v1507 = vunpack.c.l.b16 %v1475
      %v1508 = vunpack.c.l.b16 %v1476
      %v1509 = vunpack.c.l.b16 %v1477
      %v1510 = vunpack.c.l.b16 %v1478
      %v1511 = vunpack.c.l.b16 %v1479
      %v1512 = vunpack.c.l.b16 %v1480
      %v1513 = vunpack.c.l.b16 %v1481
      %v1514 = vpack.c.b16 %v1499, %v1498
      %v1515 = vpack.c.b16 %v1501, %v1500
      %v1516 = vpack.c.b16 %v1503, %v1502
      %v1517 = vpack.c.b16 %v1505, %v1504
      %v1518 = vpack.c.b16 %v1507, %v1506
      %v1519 = vpack.c.b16 %v1509, %v1508
      %v1520 = vpack.c.b16 %v1511, %v1510
      %v1521 = vpack.c.b16 %v1513, %v1512
      %1530 = vmatpush.bf16.msra.mxu0 %v1521
      %1531 = vmatpush.bf16.msra.mxu0 %v1520
      %1532 = vmatpush.bf16.msra.mxu0 %v1519
      %1533 = vmatpush.bf16.msra.mxu0 %v1518
      %1534 = vmatpush.bf16.msra.mxu0 %v1517
      %1535 = vmatpush.bf16.msra.mxu0 %v1516
      %1536 = vmatpush.bf16.msra.mxu0 %v1515
      %1537 = vmatpush.bf16.msra.mxu0 %v1514
      %1538 = vmatmul.bf16.gmra.mxu0 %v1453
      %v1539 = vpop.f32.mrf.mxu0
      %v1540 = vadd.f32 0.0, %v1539
      %v1541 = vpop.f32.mrf.mxu0
      %v1542 = vadd.f32 0.0, %v1541
      %1543 = vmatmul.bf16.gmra.mxu0 %v1454
      %v1544 = vpop.f32.mrf.mxu0
      %v1545 = vadd.f32 0.0, %v1544
      %v1546 = vpop.f32.mrf.mxu0
      %v1547 = vadd.f32 0.0, %v1546
      %1548 = vmatmul.bf16.gmra.mxu0 %v1455
      %v1549 = vpop.f32.mrf.mxu0
      %v1550 = vadd.f32 0.0, %v1549
      %v1551 = vpop.f32.mrf.mxu0
      %v1552 = vadd.f32 0.0, %v1551
      %1553 = vmatmul.bf16.gmra.mxu0 %v1456
      %v1554 = vpop.f32.mrf.mxu0
      %v1555 = vadd.f32 0.0, %v1554
      %v1556 = vpop.f32.mrf.mxu0
      %v1557 = vadd.f32 0.0, %v1556
      %1558 = vdwg.mxu0
      %v1559 = vadd.f32 %v1457, %v1540
      %v1560 = vadd.f32 %v1458, %v1542
      %v1561 = vadd.f32 %v1459, %v1545
      %v1562 = vadd.f32 %v1460, %v1547
      %v1563 = vadd.f32 %v1461, %v1550
      %v1564 = vadd.f32 %v1462, %v1552
      %v1565 = vadd.f32 %v1463, %v1555
      %v1566 = vadd.f32 %v1464, %v1557
      %1567 = vst [vmem:[#allocation3] sm:$0xff] %v1559
      %1568 = vst [vmem:[#allocation3 + $0x8] sm:$0xff] %v1560
      %1569 = vst [vmem:[#allocation3 + $0x10] sm:$0xff] %v1561
      %1570 = vst [vmem:[#allocation3 + $0x18] sm:$0xff] %v1562
      %1571 = vst [vmem:[#allocation3 + $0x20] sm:$0xff] %v1563
      %1572 = vst [vmem:[#allocation3 + $0x28] sm:$0xff] %v1564
      %1573 = vst [vmem:[#allocation3 + $0x30] sm:$0xff] %v1565
      %1574 = vst [vmem:[#allocation3 + $0x38] sm:$0xff] %v1566
      %v1575 = vld [vmem:[#allocation3] sm:$0xff]
      %v1576 = vld [vmem:[#allocation3 + $0x8] sm:$0xff]
      %v1577 = vld [vmem:[#allocation3 + $0x10] sm:$0xff]
      %v1578 = vld [vmem:[#allocation3 + $0x18] sm:$0xff]
      %v1579 = vld [vmem:[#allocation3 + $0x20] sm:$0xff]
      %v1580 = vld [vmem:[#allocation3 + $0x28] sm:$0xff]
      %v1581 = vld [vmem:[#allocation3 + $0x30] sm:$0xff]
      %v1582 = vld [vmem:[#allocation3 + $0x38] sm:$0xff]
      %v1583 = vld [vmem:[%s239] sm:$0xff]
      %v1584 = vld [vmem:[%s239 + $0x8] sm:$0xff]
      %v1585 = vld [vmem:[%s239 + $0x10] sm:$0xff]
      %v1586 = vld [vmem:[%s239 + $0x18] sm:$0xff]
      %v1587 = vld [vmem:[%s239 + $0x20] sm:$0xff]
      %v1588 = vld [vmem:[%s239 + $0x28] sm:$0xff]
      %v1589 = vld [vmem:[%s239 + $0x30] sm:$0xff]
      %v1590 = vld [vmem:[%s239 + $0x38] sm:$0xff]
      %v1591 = vadd.f32 %v1575, %v1583
      %v1592 = vadd.f32 %v1576, %v1584
      %v1593 = vadd.f32 %v1577, %v1585
      %v1594 = vadd.f32 %v1578, %v1586
      %v1595 = vadd.f32 %v1579, %v1587
      %v1596 = vadd.f32 %v1580, %v1588
      %v1597 = vadd.f32 %v1581, %v1589
      %v1598 = vadd.f32 %v1582, %v1590
      %1599 = vst [vmem:[%s244] sm:$0xff] %v1591
      %1600 = vst [vmem:[%s244 + $0x8] sm:$0xff] %v1592
      %1601 = vst [vmem:[%s244 + $0x10] sm:$0xff] %v1593
      %1602 = vst [vmem:[%s244 + $0x18] sm:$0xff] %v1594
      %1603 = vst [vmem:[%s244 + $0x20] sm:$0xff] %v1595
      %1604 = vst [vmem:[%s244 + $0x28] sm:$0xff] %v1596
      %1605 = vst [vmem:[%s244 + $0x30] sm:$0xff] %v1597
      %1606 = vst [vmem:[%s244 + $0x38] sm:$0xff] %v1598
      %p1607 = scmp.lt.s32.totalorder %s16, 1
      %s1608 = scalar_select %p1607, %s16, 1
      %s1609 = smul.addr %s1608, 8
      %s1610 = smul.addr %s1609, 8
      %s1611 = scalar_lea.vmem %s5, %s1610
      // Predicated region
      $region41: #{preact_block_forward.3} parent=39 // pred_check
        %p1612 = pneg %p149
      $region42: #{preact_block_forward.3} parent=39 // pred_check_branch
        %1614 = sbr.rel (%p1612) target = $region44
      $region43: #{preact_block_forward.3} parent=39 // pred_region
        _
      $region44: #{preact_block_forward.3} parent=39 // pred_fallthru
        _
    $region40: #{preact_block_forward.3} parent=5 // pred_fallthru
      _
    %p1615 = scmp.le.s32.totalorder 2, %s11
    // Predicated region
    $region45: #{preact_block_forward.3} parent=5 // pred_check
      %p1616 = pneg %p1615
    $region46: #{preact_block_forward.3} parent=5 // pred_check_branch
      %1618 = sbr.rel (%p1616) target = $region48
    $region47: #{preact_block_forward.3} parent=5 // pred_region
      %s1619 = ssub.s32 %s11, 2
      // Predicated region
      $region49: #{preact_block_forward.3} parent=47 // pred_check
        %p1620 = pneg %p155
      $region50: #{preact_block_forward.3} parent=47 // pred_check_branch
        %1622 = sbr.rel (%p1620) target = $region52
      $region51: #{preact_block_forward.3} parent=47 // pred_region
        %p1623 = scmp.lt.s32.totalorder %s17, 1
        %s1624 = scalar_select %p1623, %s17, 1
        %s1625 = smul.addr %s1624, 8
        %s1626 = smul.addr %s1625, 8
        %s1627 = scalar_lea.vmem %s5, %s1626
      $region52: #{preact_block_forward.3} parent=47 // pred_fallthru
        _
    $region48: #{preact_block_forward.3} parent=5 // pred_fallthru
      _
  $region6: #{preact_block_forward.3} parent=0 // loop_footer
    %s15 = sadd.s32 1, %s11
  $region7: #{preact_block_forward.3} parent=0 // loop_footer_branch
    %10 = sbr.rel target = $region3
  $region8: #{preact_block_forward.3} parent=0 // loop_exit
    _

</llo_original>
